<compile_context>
chip_gen: v7x
topology: tpu7x:2x2x1
jax: 0.10.0
libtpu: 0.0.40
codegen_flags: <defaults>
</compile_context>

<pallas_src>
import itertools

import jax
import jax.numpy as jnp
import numpy as np
from jax import lax
from jax.experimental import pallas as pl
from jax.experimental.pallas import tpu as pltpu

_EPS = 1e-8            # torch.nn.CosineSimilarity default eps
_TB_MAX = 32           # hard cap on unrolled batches per block (compile-time sanity)
_SLAB_TARGET = 8 << 20  # aim for ~8 MiB per folded input slab


def _ceil_div(a: int, b: int) -> int:
    return -(-a // b)


def _vmem_capacity_bytes() -> int:
    """Per-TensorCore VMEM capacity; conservative fallback if the query fails."""
    try:
        cap = int(getattr(pltpu.get_tpu_info(), "vmem_capacity_bytes", 0) or 0)
        if cap > 0:
            return cap
    except Exception:
        pass
    return 64 * 1024 * 1024  # v7x per-core VMEM (smallest current generation)


def _largest_divisor_leq(n: int, cap: int) -> int:
    """Largest divisor of n that is <= cap (>= 1)."""
    best, f = 1, 1
    while f * f <= n:
        if n % f == 0:
            for cand in (f, n // f):
                if best < cand <= cap:
                    best = cand
        f += 1
    return best


def _largest_128_divisor(d: int, cap: int) -> int:
    """Largest td with td | d, td % 128 == 0, td <= cap (requires d % 128 == 0)."""
    return 128 * _largest_divisor_leq(d // 128, max(1, cap // 128))


def _finalize_gram(g, n):
    """Sum over unordered pairs i<j of |G[i,j]| / max(||x_i|| * ||x_j||, eps). -> (1,1)."""
    row = lax.broadcasted_iota(jnp.int32, (n, n), 0)
    col = lax.broadcasted_iota(jnp.int32, (n, n), 1)
    diag = jnp.where(row == col, g, 0.0)
    nrm_i = jnp.sqrt(jnp.sum(diag, axis=1, keepdims=True))   # (n, 1)  ||x_i||
    nrm_j = jnp.sqrt(jnp.sum(diag, axis=0, keepdims=True))   # (1, n)  ||x_j||
    denom = jnp.maximum(nrm_i * nrm_j, _EPS)
    upper = jnp.where(col > row, jnp.abs(g), 0.0)            # mask before the divide
    contrib = upper / denom
    partial = jnp.sum(contrib, axis=1, keepdims=True)        # (n, 1)
    return jnp.sum(partial, axis=0, keepdims=True)           # (1, 1)


def _make_chunked_kernel(n, precision, cast_f32):
    def kernel(x_ref, out_ref, gram_ref):
        k = pl.program_id(1)

        @pl.when(k == 0)
        def _():
            gram_ref[...] = jnp.zeros_like(gram_ref)

        xb = x_ref[...]                                       # (N, td)
        if cast_f32:
            xb = xb.astype(jnp.float32)
        gram_ref[...] += lax.dot_general(
            xb, xb,
            dimension_numbers=(((1,), (1,)), ((), ())),
            preferred_element_type=jnp.float32,
            precision=precision,
        )

        @pl.when(k == pl.num_programs(1) - 1)
        def _():
            out_ref[0] = _finalize_gram(gram_ref[...], n)

    return kernel


def _make_folded_kernel(n, tb, d_pad, precision, cast_f32):
    def kernel(x_ref, out_ref):
        total = jnp.zeros((1, 1), jnp.float32)
        for t in range(tb):                                   # static slices, unrolled
            xb = x_ref[:, t * d_pad:(t + 1) * d_pad]          # (N, D_pad), 128-aligned
            if cast_f32:
                xb = xb.astype(jnp.float32)
            g = lax.dot_general(
                xb, xb,
                dimension_numbers=(((1,), (1,)), ((), ())),
                preferred_element_type=jnp.float32,
                precision=precision,
            )
            total = total + _finalize_gram(g, n)
        out_ref[0] = total

    return kernel


def compute_similarity_pallas(sal_tensor_list: jax.Array) -> jax.Array:
    """sal_tensor_list: [N, B, C, H, W] -> scalar mean over pairs of mean_b |cos_sim|."""
    N = int(sal_tensor_list.shape[0])
    B = int(sal_tensor_list.shape[1])
    D = int(np.prod(sal_tensor_list.shape[2:]))

    n_pairs = N * (N - 1) // 2
    if n_pairs == 0:
        # torch.mean of an empty tensor is NaN.
        return jnp.float32(jnp.nan)

    x = sal_tensor_list
    if not jnp.issubdtype(x.dtype, jnp.floating):
        x = x.astype(jnp.float32)
    orig_dtype = x.dtype
    itemsize = jnp.dtype(orig_dtype).itemsize
    cast_f32 = orig_dtype != jnp.float32
    # bf16 products are exact in f32 (8-bit significands), so DEFAULT matches the
    # f32-upcast reference; genuine f32 data needs HIGHEST to match f32 math.
    precision = (lax.Precision.DEFAULT if orig_dtype == jnp.bfloat16
                 else lax.Precision.HIGHEST)

    # --- generation-aware VMEM / tile budget ---------------------------------------
    cap = _vmem_capacity_bytes()
    vmem_limit = max(32 * 1024 * 1024, (cap * 3) // 4)        # 96 MiB on 128-MiB parts, 48 MiB on v7x
    gram_bytes = N * N * 4
    headroom = 4 * 1024 * 1024 + 8 * gram_bytes               # epilogue temps, outputs, slack
    input_budget = max(2 * 1024 * 1024, vmem_limit - gram_bytes - headroom)
    max_td = max(128, (input_budget // (2 * N * itemsize)) // 128 * 128)  # double-buffered

    # --- feature-chunk size / layout (no transpose; pad only as fallback) -----------
    if D % 128 == 0:
        td = _largest_128_divisor(D, max_td)                  # td | D, no pad copy
        d_pad = D
        x2 = x.reshape(N, B * D)                              # contiguous reshape: free
    else:
        # TODO(synk): handle the ragged feature tail in-kernel (masked contribution)
        # instead of this one-off pad copy.
        td = min(max_td, _ceil_div(D, 128) * 128)
        d_pad = _ceil_div(D, td) * td
        x3 = jnp.pad(x.reshape(N, B, D), ((0, 0), (0, 0), (0, d_pad - D)))
        x2 = x3.reshape(N, B * d_pad)
    kc = d_pad // td

    if kc == 1:
        # Whole per-batch feature vector fits in one chunk: fold TB batches per block
        # to amortize per-step pipeline overhead.
        slab = N * d_pad * itemsize
        tb_cap = min(max(1, input_budget // (2 * slab)),
                     max(1, _SLAB_TARGET // slab),
                     _TB_MAX)
        tb = _largest_divisor_leq(B, tb_cap)
        num_bblocks = B // tb
        kernel = _make_folded_kernel(N, tb, d_pad, precision, cast_f32)
        per_block = pl.pallas_call(
            kernel,
            out_shape=jax.ShapeDtypeStruct((num_bblocks, 1, 1), jnp.float32),
            grid_spec=pltpu.PrefetchScalarGridSpec(
                num_scalar_prefetch=0,
                grid=(num_bblocks,),
                in_specs=[pl.BlockSpec((N, tb * d_pad), lambda bb: (0, bb))],
                out_specs=pl.BlockSpec((1, 1, 1), lambda bb: (bb, 0, 0)),
            ),
            compiler_params=pltpu.CompilerParams(
                dimension_semantics=("parallel",),
                vmem_limit_bytes=vmem_limit,
            ),
        )(x2)
    else:
        # Chunked reduction over the feature axis with a persistent (N, N) f32 gram.
        # TODO(synk): for very large N the (N,N) gram / finalize would need tiling; and
        # for B==1 on v7x a core-split of the chunk axis would engage the second core.
        kernel = _make_chunked_kernel(N, precision, cast_f32)
        per_block = pl.pallas_call(
            kernel,
            out_shape=jax.ShapeDtypeStruct((B, 1, 1), jnp.float32),
            grid_spec=pltpu.PrefetchScalarGridSpec(
                num_scalar_prefetch=0,
                grid=(B, kc),
                in_specs=[pl.BlockSpec((N, td), lambda b, k: (0, b * kc + k))],
                out_specs=pl.BlockSpec((1, 1, 1), lambda b, k: (b, 0, 0)),
                scratch_shapes=[pltpu.VMEM((N, N), jnp.float32)],
            ),
            compiler_params=pltpu.CompilerParams(
                dimension_semantics=("parallel", "arbitrary"),
                vmem_limit_bytes=vmem_limit,
            ),
        )(x2)

    # mean over pairs of (mean over batch of |cos|)  ==  sum / (P * B)
    return jnp.sum(per_block) * (1.0 / (n_pairs * B))


def compute_similarity_ref(sal_tensor_list: jax.Array) -> jax.Array:
    """Pure-JAX reference replicating the PyTorch forward."""
    N = sal_tensor_list.shape[0]
    xf = sal_tensor_list.reshape(N, sal_tensor_list.shape[1], -1).astype(jnp.float32)
    vals = []
    for i, j in itertools.combinations(range(N), 2):
        a, b = xf[i], xf[j]
        dot = jnp.sum(a * b, axis=-1)
        na = jnp.sqrt(jnp.sum(a * a, axis=-1))
        nb = jnp.sqrt(jnp.sum(b * b, axis=-1))
        cos = dot / jnp.maximum(na * nb, _EPS)
        vals.append(jnp.mean(jnp.abs(cos)))
    return jnp.mean(jnp.stack(vals))


if __name__ == "__main__":
    key = jax.random.PRNGKey(0)
    # N saliency maps, each of shape (B, C, H, W) -> flattened D = 4*16*16 = 1024
    N, B, C, H, W = 4, 2, 4, 16, 16
    sal = jax.random.normal(key, (N, B, C, H, W), dtype=jnp.float32)

    out = jax.block_until_ready(compute_similarity_pallas(sal))
    ref = jax.block_until_ready(compute_similarity_ref(sal))
    assert np.allclose(np.asarray(out), np.asarray(ref), rtol=1e-5, atol=1e-5), (out, ref)

    print("KERNEL_OK")
</pallas_src>

<mosaic_0001>
module attributes {stable_mosaic.version = 11 : i64} {
  func.func @kernel(%arg0: i32, %arg1: memref<4x2048xf32, #tpu.memory_space<vmem>>, %arg2: memref<1x1x1xf32, #tpu.memory_space<vmem>>) attributes {dimension_semantics = [#tpu.dimension_semantics<parallel>], iteration_bounds = array<i64: 1>, scalar_prefetch = 0 : i64, scratch_operands = 0 : i64, tpu.core_type = #tpu.core_type<tc>, window_params = [{transform_indices = @transform_0, window_bounds = array<i64: 4, 2048>}, {transform_indices = @transform_1, window_bounds = array<i64: 1, 1, 1>}]} {
    %cst = arith.constant 0.000000e+00 : f32
    %0 = vector.broadcast %cst : f32 to vector<1x1xf32>
    %c0 = arith.constant 0 : index
    %c0_0 = arith.constant 0 : index
    %1 = vector.load %arg1[%c0, %c0_0] : memref<4x2048xf32, #tpu.memory_space<vmem>>, vector<4x1024xf32>
    %cst_1 = arith.constant dense<0.000000e+00> : vector<4x4xf32>
    %2 = tpu.matmul %1, %1, %cst_1 {dimension_numbers = #tpu.dot_dimension_numbers<[1], [1], [0], [0], [0, 0, 1, 0], [], []>, precision = #tpu.contract_precision<fp32>} : vector<4x1024xf32>, vector<4x1024xf32>, vector<4x4xf32> -> vector<4x4xf32>
    %3 = tpu.iota {dimensions = array<i32: 0>} : vector<4x4xi32>
    %4 = tpu.iota {dimensions = array<i32: 1>} : vector<4x4xi32>
    %5 = arith.cmpi eq, %3, %4 : vector<4x4xi32>
    %cst_2 = arith.constant 0.000000e+00 : f32
    %6 = vector.broadcast %cst_2 : f32 to vector<4x4xf32>
    %7 = arith.select %5, %2, %6 : vector<4x4xi1>, vector<4x4xf32>
    %cst_3 = arith.constant dense<0.000000e+00> : vector<4xf32>
    %8 = vector.multi_reduction <add>, %7, %cst_3 [1] : vector<4x4xf32> to vector<4xf32>
    %9 = vector.shape_cast %8 : vector<4xf32> to vector<4x1xf32>
    %10 = math.sqrt %9 : vector<4x1xf32>
    %cst_4 = arith.constant dense<0.000000e+00> : vector<4xf32>
    %11 = vector.multi_reduction <add>, %7, %cst_4 [0] : vector<4x4xf32> to vector<4xf32>
    %12 = vector.shape_cast %11 : vector<4xf32> to vector<1x4xf32>
    %13 = math.sqrt %12 : vector<1x4xf32>
    %14 = vector.broadcast %10 : vector<4x1xf32> to vector<4x4xf32>
    %15 = vector.broadcast %13 : vector<1x4xf32> to vector<4x4xf32>
    %16 = arith.mulf %14, %15 : vector<4x4xf32>
    %cst_5 = arith.constant 9.99999993E-9 : f32
    %17 = vector.broadcast %cst_5 : f32 to vector<4x4xf32>
    %18 = arith.maximumf %16, %17 : vector<4x4xf32>
    %19 = arith.cmpi sgt, %4, %3 : vector<4x4xi32>
    %20 = math.absf %2 : vector<4x4xf32>
    %cst_6 = arith.constant 0.000000e+00 : f32
    %21 = vector.broadcast %cst_6 : f32 to vector<4x4xf32>
    %22 = arith.select %19, %20, %21 : vector<4x4xi1>, vector<4x4xf32>
    %23 = arith.divf %22, %18 : vector<4x4xf32>
    %cst_7 = arith.constant dense<0.000000e+00> : vector<4xf32>
    %24 = vector.multi_reduction <add>, %23, %cst_7 [1] : vector<4x4xf32> to vector<4xf32>
    %25 = vector.shape_cast %24 : vector<4xf32> to vector<4x1xf32>
    %cst_8 = arith.constant dense<0.000000e+00> : vector<1xf32>
    %26 = vector.multi_reduction <add>, %25, %cst_8 [0] : vector<4x1xf32> to vector<1xf32>
    %27 = vector.shape_cast %26 : vector<1xf32> to vector<1x1xf32>
    %28 = arith.addf %0, %27 : vector<1x1xf32>
    %c0_9 = arith.constant 0 : index
    %c1024 = arith.constant 1024 : index
    %29 = vector.load %arg1[%c0_9, %c1024] : memref<4x2048xf32, #tpu.memory_space<vmem>>, vector<4x1024xf32>
    %cst_10 = arith.constant dense<0.000000e+00> : vector<4x4xf32>
    %30 = tpu.matmul %29, %29, %cst_10 {dimension_numbers = #tpu.dot_dimension_numbers<[1], [1], [0], [0], [0, 0, 1, 0], [], []>, precision = #tpu.contract_precision<fp32>} : vector<4x1024xf32>, vector<4x1024xf32>, vector<4x4xf32> -> vector<4x4xf32>
    %31 = tpu.iota {dimensions = array<i32: 0>} : vector<4x4xi32>
    %32 = tpu.iota {dimensions = array<i32: 1>} : vector<4x4xi32>
    %33 = arith.cmpi eq, %31, %32 : vector<4x4xi32>
    %cst_11 = arith.constant 0.000000e+00 : f32
    %34 = vector.broadcast %cst_11 : f32 to vector<4x4xf32>
    %35 = arith.select %33, %30, %34 : vector<4x4xi1>, vector<4x4xf32>
    %cst_12 = arith.constant dense<0.000000e+00> : vector<4xf32>
    %36 = vector.multi_reduction <add>, %35, %cst_12 [1] : vector<4x4xf32> to vector<4xf32>
    %37 = vector.shape_cast %36 : vector<4xf32> to vector<4x1xf32>
    %38 = math.sqrt %37 : vector<4x1xf32>
    %cst_13 = arith.constant dense<0.000000e+00> : vector<4xf32>
    %39 = vector.multi_reduction <add>, %35, %cst_13 [0] : vector<4x4xf32> to vector<4xf32>
    %40 = vector.shape_cast %39 : vector<4xf32> to vector<1x4xf32>
    %41 = math.sqrt %40 : vector<1x4xf32>
    %42 = vector.broadcast %38 : vector<4x1xf32> to vector<4x4xf32>
    %43 = vector.broadcast %41 : vector<1x4xf32> to vector<4x4xf32>
    %44 = arith.mulf %42, %43 : vector<4x4xf32>
    %cst_14 = arith.constant 9.99999993E-9 : f32
    %45 = vector.broadcast %cst_14 : f32 to vector<4x4xf32>
    %46 = arith.maximumf %44, %45 : vector<4x4xf32>
    %47 = arith.cmpi sgt, %32, %31 : vector<4x4xi32>
    %48 = math.absf %30 : vector<4x4xf32>
    %cst_15 = arith.constant 0.000000e+00 : f32
    %49 = vector.broadcast %cst_15 : f32 to vector<4x4xf32>
    %50 = arith.select %47, %48, %49 : vector<4x4xi1>, vector<4x4xf32>
    %51 = arith.divf %50, %46 : vector<4x4xf32>
    %cst_16 = arith.constant dense<0.000000e+00> : vector<4xf32>
    %52 = vector.multi_reduction <add>, %51, %cst_16 [1] : vector<4x4xf32> to vector<4xf32>
    %53 = vector.shape_cast %52 : vector<4xf32> to vector<4x1xf32>
    %cst_17 = arith.constant dense<0.000000e+00> : vector<1xf32>
    %54 = vector.multi_reduction <add>, %53, %cst_17 [0] : vector<4x1xf32> to vector<1xf32>
    %55 = vector.shape_cast %54 : vector<1xf32> to vector<1x1xf32>
    %56 = arith.addf %28, %55 : vector<1x1xf32>
    %c0_18 = arith.constant 0 : index
    %c0_19 = arith.constant 0 : index
    %c0_20 = arith.constant 0 : index
    %57 = vector.load %arg2[%c0_18, %c0_19, %c0_20] : memref<1x1x1xf32, #tpu.memory_space<vmem>>, vector<1x1x1xf32>
    %58 = vector.shape_cast %57 : vector<1x1x1xf32> to vector<1x1xf32>
    %59 = vector.shape_cast %56 : vector<1x1xf32> to vector<1x1x1xf32>
    tpu.vector_store %arg2[%c0_18, %c0_19, %c0_20], %59 {strides = array<i32>} : memref<1x1x1xf32, #tpu.memory_space<vmem>>, vector<1x1x1xf32>,
    return
  }
  func.func @transform_0(%arg0: i32) -> (i32, i32) {
    %c0_i32 = arith.constant 0 : i32
    %c0_i32_0 = arith.constant 0 : i32
    return %c0_i32, %arg0 : i32, i32
  }
  func.func @transform_1(%arg0: i32) -> (i32, i32, i32) {
    %c0_i32 = arith.constant 0 : i32
    %c0_i32_0 = arith.constant 0 : i32
    %c0_i32_1 = arith.constant 0 : i32
    return %arg0, %c0_i32, %c0_i32_0 : i32, i32, i32
  }
}

</mosaic_0001>

<llo_original>
// kernel: tpu_custom_call.1
$region0: #{tpu_custom_call.1}
  #allocation0 [shape = 'u32[]', space=smem, size = 0x4, offset = 0x4, fixed_abs, tag = 'smem constant byte address 0x4 - core index']
  #allocation1 [shape = 'u32[144,128]{1,0:T(1,128)}', space=vmem, size = 0x12000, scoped, tag = 'internal scratch']
  %s0 = inlined_call_operand.hbm [shape: f32[4,2048], index: 0, kind: input, shape index: {}]
  %s1 = inlined_call_operand.hbm [shape: f32[1,1,1], index: 1, kind: output, shape index: {}]
  %s2 = sld [smem:[#allocation0]]
  $region18: #{tpu_custom_call.1} parent=0
    _
  %s4 = ssub.s32 1, %s2
  %s5 = scalar_select 0, %s4, %s2
  $region1: #{tpu_custom_call.1} parent=0
    #allocation2 [shape = 'u8[32768]{0}', space=vmem, size = 0x8000, scoped, tag = 'input window, operand 0, single buffered']
    #allocation3 [shape = 's32[1]{0}', space=sflag, size = 0x4, scoped, tag = 'scoped memory for tpu_custom_call.1']
    #allocation4 [shape = 's32[1]{0}', space=sflag, size = 0x4, scoped, tag = 'scoped memory for tpu_custom_call.1']
    #allocation5 [shape = 'u8[512]{0}', space=vmem, size = 0x400, scoped, tag = 'output window, operand 0, single buffered']
    %6 = vsyncpa [#allocation3], 0
    %7 = vsyncpa [#allocation4], 0
    // Predicated region
    $region2: #{tpu_custom_call.1} parent=1 // pred_check
      _
    $region3: #{tpu_custom_call.1} parent=1 // pred_check_branch
      %9 = sbr.rel (0) target = $region5
    $region4: #{tpu_custom_call.1} parent=1 // pred_region
      %s11 = ssub.s32 1024, 1024
      %12 = vsyncadd [#allocation3], %s11
      %s14 = sshll.u32 [#allocation2], 4
      %s15 = int_to_ptr.vmem [resolvable:$true] %s14
      %17 = dma.hbm_to_vmem [thread:$0]  %s0, 1024, %s15, [#allocation3]
    $region5: #{tpu_custom_call.1} parent=1 // pred_fallthru
      _
    // Predicated region
    $region6: #{tpu_custom_call.1} parent=1 // pred_check
      _
    $region7: #{tpu_custom_call.1} parent=1 // pred_check_branch
      %19 = sbr.rel (0) target = $region9
    $region8: #{tpu_custom_call.1} parent=1 // pred_region
      %20 = dma.done [#allocation3], 1024
    $region9: #{tpu_custom_call.1} parent=1 // pred_fallthru
      _
    %v21 = vld [vmem:[#allocation2] sm:$0xff]
    %v22 = vld [vmem:[#allocation2 + $0x8] sm:$0xff]
    %v23 = vld [vmem:[#allocation2 + $0x10] sm:$0xff]
    %v24 = vld [vmem:[#allocation2 + $0x18] sm:$0xff]
    %v29 = vcombine.high %v21, %v21
    %v30 = vcombine.high %v22, %v22
    %v31 = vcombine.high %v23, %v23
    %v32 = vcombine.high %v24, %v24
    %v37 = vand.u32 %v29, 4294901760
    %38 = vmatprep.subr.mxu0 %v37
    %v39 = vand.u32 %v21, 4294901760
    %40 = vmatpush1.xpose.msra.mxu0 %v39
    %41 = vmatprep.subr.mxu0 0.0
    %42 = vmatpush1.xpose.msra.mxu0 0.0
    %43 = vmatprep.subr.mxu0 0.0
    %44 = vmatpush1.xpose.msra.mxu0 0.0
    %45 = vmatprep.subr.mxu0 0.0
    %46 = vmatpush1.xpose.msra.mxu0 0.0
    %47 = vmatprep.subr.mxu0 0.0
    %48 = vmatpush1.xpose.msra.mxu0 0.0
    %49 = vmatprep.subr.mxu0 0.0
    %50 = vmatpush1.xpose.msra.mxu0 0.0
    %51 = vmatprep.subr.mxu0 0.0
    %52 = vmatpush1.xpose.msra.mxu0 0.0
    %53 = vmatprep.subr.mxu0 0.0
    %54 = vmatpush1.xpose.msra.mxu0 0.0
    %55 = vmatprep.subr.mxu0 0.0
    %56 = vmatpush1.xpose.msra.mxu0 0.0
    %57 = vmatprep.subr.mxu0 0.0
    %58 = vmatpush1.xpose.msra.mxu0 0.0
    %59 = vmatprep.subr.mxu0 0.0
    %60 = vmatpush1.xpose.msra.mxu0 0.0
    %61 = vmatprep.subr.mxu0 0.0
    %62 = vmatpush1.xpose.msra.mxu0 0.0
    %63 = vmatprep.subr.mxu0 0.0
    %64 = vmatpush1.xpose.msra.mxu0 0.0
    %65 = vmatprep.subr.mxu0 0.0
    %66 = vmatpush1.xpose.msra.mxu0 0.0
    %67 = vmatprep.subr.mxu0 0.0
    %68 = vmatpush1.xpose.msra.mxu0 0.0
    %69 = vmatprep.subr.mxu0 0.0
    %70 = vmatpush1.xpose.msra.mxu0 0.0
    %71 = vmatprep.subr.mxu0 0.0
    %72 = vmatpush1.xpose.msra.mxu0 0.0
    %73 = vmatprep.subr.mxu0 0.0
    %74 = vmatpush1.xpose.msra.mxu0 0.0
    %75 = vmatprep.subr.mxu0 0.0
    %76 = vmatpush1.xpose.msra.mxu0 0.0
    %77 = vmatprep.subr.mxu0 0.0
    %78 = vmatpush1.xpose.msra.mxu0 0.0
    %79 = vmatprep.subr.mxu0 0.0
    %80 = vmatpush1.xpose.msra.mxu0 0.0
    %81 = vmatprep.subr.mxu0 0.0
    %82 = vmatpush1.xpose.msra.mxu0 0.0
    %83 = vmatprep.subr.mxu0 0.0
    %84 = vmatpush1.xpose.msra.mxu0 0.0
    %85 = vmatprep.subr.mxu0 0.0
    %86 = vmatpush1.xpose.msra.mxu0 0.0
    %87 = vmatprep.subr.mxu0 0.0
    %88 = vmatpush1.xpose.msra.mxu0 0.0
    %89 = vmatprep.subr.mxu0 0.0
    %90 = vmatpush1.xpose.msra.mxu0 0.0
    %91 = vmatprep.subr.mxu0 0.0
    %92 = vmatpush1.xpose.msra.mxu0 0.0
    %93 = vmatprep.subr.mxu0 0.0
    %94 = vmatpush1.xpose.msra.mxu0 0.0
    %95 = vmatprep.subr.mxu0 0.0
    %96 = vmatpush1.xpose.msra.mxu0 0.0
    %97 = vmatprep.subr.mxu0 0.0
    %98 = vmatpush1.xpose.msra.mxu0 0.0
    %99 = vmatprep.subr.mxu0 0.0
    %100 = vmatpush1.xpose.msra.mxu0 0.0
    %101 = vmatprep.subr.mxu0 0.0
    %102 = vmatpush1.xpose.msra.mxu0 0.0
    %v103 = vand.u32 %v29, 4294901760
    %v104 = vsub.f32 %v29, %v103
    %v105 = vand.u32 %v104, 4294901760
    %v106 = vsub.f32 %v104, %v105
    %v107 = vand.u32 %v106, 4294901760
    %108 = vmatprep.mubr.f32.mxu0 %v107
    %v109 = vand.u32 %v21, 4294901760
    %v110 = vsub.f32 %v21, %v109
    %v111 = vand.u32 %v110, 4294901760
    %v112 = vsub.f32 %v110, %v111
    %v113 = vand.u32 %v112, 4294901760
    %114 = vmatmul.mubr.f32.gmra.mrb[0].mxu0 %v113
    %v115 = vpop.f32.mrb[0].mxu0
    %v116 = vadd.f32 0.0, %v115
    %v117 = vpop.f32.mrb[0].mxu0
    %118 = vdwg.mxu0
    %v119 = vand.u32 %v29, 4294901760
    %v120 = vsub.f32 %v29, %v119
    %v121 = vand.u32 %v120, 4294901760
    %v122 = vsub.f32 %v120, %v121
    %v123 = vand.u32 %v122, 4294901760
    %124 = vmatprep.subr.mxu0 %v123
    %v125 = vand.u32 %v21, 4294901760
    %v126 = vsub.f32 %v21, %v125
    %v127 = vand.u32 %v126, 4294901760
    %v128 = vsub.f32 %v126, %v127
    %v129 = vand.u32 %v128, 4294901760
    %130 = vmatpush1.xpose.msra.mxu0 %v129
    %131 = vmatprep.subr.mxu0 0.0
    %132 = vmatpush1.xpose.msra.mxu0 0.0
    %133 = vmatprep.subr.mxu0 0.0
    %134 = vmatpush1.xpose.msra.mxu0 0.0
    %135 = vmatprep.subr.mxu0 0.0
    %136 = vmatpush1.xpose.msra.mxu0 0.0
    %137 = vmatprep.subr.mxu0 0.0
    %138 = vmatpush1.xpose.msra.mxu0 0.0
    %139 = vmatprep.subr.mxu0 0.0
    %140 = vmatpush1.xpose.msra.mxu0 0.0
    %141 = vmatprep.subr.mxu0 0.0
    %142 = vmatpush1.xpose.msra.mxu0 0.0
    %143 = vmatprep.subr.mxu0 0.0
    %144 = vmatpush1.xpose.msra.mxu0 0.0
    %145 = vmatprep.subr.mxu0 0.0
    %146 = vmatpush1.xpose.msra.mxu0 0.0
    %147 = vmatprep.subr.mxu0 0.0
    %148 = vmatpush1.xpose.msra.mxu0 0.0
    %149 = vmatprep.subr.mxu0 0.0
    %150 = vmatpush1.xpose.msra.mxu0 0.0
    %151 = vmatprep.subr.mxu0 0.0
    %152 = vmatpush1.xpose.msra.mxu0 0.0
    %153 = vmatprep.subr.mxu0 0.0
    %154 = vmatpush1.xpose.msra.mxu0 0.0
    %155 = vmatprep.subr.mxu0 0.0
    %156 = vmatpush1.xpose.msra.mxu0 0.0
    %157 = vmatprep.subr.mxu0 0.0
    %158 = vmatpush1.xpose.msra.mxu0 0.0
    %159 = vmatprep.subr.mxu0 0.0
    %160 = vmatpush1.xpose.msra.mxu0 0.0
    %161 = vmatprep.subr.mxu0 0.0
    %162 = vmatpush1.xpose.msra.mxu0 0.0
    %163 = vmatprep.subr.mxu0 0.0
    %164 = vmatpush1.xpose.msra.mxu0 0.0
    %165 = vmatprep.subr.mxu0 0.0
    %166 = vmatpush1.xpose.msra.mxu0 0.0
    %167 = vmatprep.subr.mxu0 0.0
    %168 = vmatpush1.xpose.msra.mxu0 0.0
    %169 = vmatprep.subr.mxu0 0.0
    %170 = vmatpush1.xpose.msra.mxu0 0.0
    %171 = vmatprep.subr.mxu0 0.0
    %172 = vmatpush1.xpose.msra.mxu0 0.0
    %173 = vmatprep.subr.mxu0 0.0
    %174 = vmatpush1.xpose.msra.mxu0 0.0
    %175 = vmatprep.subr.mxu0 0.0
    %176 = vmatpush1.xpose.msra.mxu0 0.0
    %177 = vmatprep.subr.mxu0 0.0
    %178 = vmatpush1.xpose.msra.mxu0 0.0
    %179 = vmatprep.subr.mxu0 0.0
    %180 = vmatpush1.xpose.msra.mxu0 0.0
    %181 = vmatprep.subr.mxu0 0.0
    %182 = vmatpush1.xpose.msra.mxu0 0.0
    %183 = vmatprep.subr.mxu0 0.0
    %184 = vmatpush1.xpose.msra.mxu0 0.0
    %185 = vmatprep.subr.mxu0 0.0
    %186 = vmatpush1.xpose.msra.mxu0 0.0
    %187 = vmatprep.subr.mxu0 0.0
    %188 = vmatpush1.xpose.msra.mxu0 0.0
    %189 = vmatprep.subr.mxu0 0.0
    %190 = vmatpush1.xpose.msra.mxu0 0.0
    %191 = vmatprep.subr.mxu0 0.0
    %192 = vmatpush1.xpose.msra.mxu0 0.0
    %v193 = vand.u32 %v29, 4294901760
    %194 = vmatprep.mubr.f32.mxu0 %v193
    %v195 = vand.u32 %v21, 4294901760
    %196 = vmatmul.mubr.f32.gmra.mrb[0].mxu0 %v195
    %v197 = vpop.f32.mrb[0].mxu0
    %v198 = vadd.f32 %v116, %v197
    %v199 = vpop.f32.mrb[0].mxu0
    %200 = vdwg.mxu0
    %v201 = vand.u32 %v29, 4294901760
    %v202 = vsub.f32 %v29, %v201
    %203 = vmatprep.subr.mxu0 %v202
    %v204 = vand.u32 %v21, 4294901760
    %v205 = vsub.f32 %v21, %v204
    %206 = vmatpush1.xpose.msra.mxu0 %v205
    %207 = vmatprep.subr.mxu0 0.0
    %208 = vmatpush1.xpose.msra.mxu0 0.0
    %209 = vmatprep.subr.mxu0 0.0
    %210 = vmatpush1.xpose.msra.mxu0 0.0
    %211 = vmatprep.subr.mxu0 0.0
    %212 = vmatpush1.xpose.msra.mxu0 0.0
    %213 = vmatprep.subr.mxu0 0.0
    %214 = vmatpush1.xpose.msra.mxu0 0.0
    %215 = vmatprep.subr.mxu0 0.0
    %216 = vmatpush1.xpose.msra.mxu0 0.0
    %217 = vmatprep.subr.mxu0 0.0
    %218 = vmatpush1.xpose.msra.mxu0 0.0
    %219 = vmatprep.subr.mxu0 0.0
    %220 = vmatpush1.xpose.msra.mxu0 0.0
    %221 = vmatprep.subr.mxu0 0.0
    %222 = vmatpush1.xpose.msra.mxu0 0.0
    %223 = vmatprep.subr.mxu0 0.0
    %224 = vmatpush1.xpose.msra.mxu0 0.0
    %225 = vmatprep.subr.mxu0 0.0
    %226 = vmatpush1.xpose.msra.mxu0 0.0
    %227 = vmatprep.subr.mxu0 0.0
    %228 = vmatpush1.xpose.msra.mxu0 0.0
    %229 = vmatprep.subr.mxu0 0.0
    %230 = vmatpush1.xpose.msra.mxu0 0.0
    %231 = vmatprep.subr.mxu0 0.0
    %232 = vmatpush1.xpose.msra.mxu0 0.0
    %233 = vmatprep.subr.mxu0 0.0
    %234 = vmatpush1.xpose.msra.mxu0 0.0
    %235 = vmatprep.subr.mxu0 0.0
    %236 = vmatpush1.xpose.msra.mxu0 0.0
    %237 = vmatprep.subr.mxu0 0.0
    %238 = vmatpush1.xpose.msra.mxu0 0.0
    %239 = vmatprep.subr.mxu0 0.0
    %240 = vmatpush1.xpose.msra.mxu0 0.0
    %241 = vmatprep.subr.mxu0 0.0
    %242 = vmatpush1.xpose.msra.mxu0 0.0
    %243 = vmatprep.subr.mxu0 0.0
    %244 = vmatpush1.xpose.msra.mxu0 0.0
    %245 = vmatprep.subr.mxu0 0.0
    %246 = vmatpush1.xpose.msra.mxu0 0.0
    %247 = vmatprep.subr.mxu0 0.0
    %248 = vmatpush1.xpose.msra.mxu0 0.0
    %249 = vmatprep.subr.mxu0 0.0
    %250 = vmatpush1.xpose.msra.mxu0 0.0
    %251 = vmatprep.subr.mxu0 0.0
    %252 = vmatpush1.xpose.msra.mxu0 0.0
    %253 = vmatprep.subr.mxu0 0.0
    %254 = vmatpush1.xpose.msra.mxu0 0.0
    %255 = vmatprep.subr.mxu0 0.0
    %256 = vmatpush1.xpose.msra.mxu0 0.0
    %257 = vmatprep.subr.mxu0 0.0
    %258 = vmatpush1.xpose.msra.mxu0 0.0
    %259 = vmatprep.subr.mxu0 0.0
    %260 = vmatpush1.xpose.msra.mxu0 0.0
    %261 = vmatprep.subr.mxu0 0.0
    %262 = vmatpush1.xpose.msra.mxu0 0.0
    %263 = vmatprep.subr.mxu0 0.0
    %264 = vmatpush1.xpose.msra.mxu0 0.0
    %265 = vmatprep.subr.mxu0 0.0
    %266 = vmatpush1.xpose.msra.mxu0 0.0
    %267 = vmatprep.subr.mxu0 0.0
    %268 = vmatpush1.xpose.msra.mxu0 0.0
    %v269 = vand.u32 %v29, 4294901760
    %v270 = vsub.f32 %v29, %v269
    %271 = vmatprep.mubr.f32.mxu0 %v270
    %v272 = vand.u32 %v21, 4294901760
    %v273 = vsub.f32 %v21, %v272
    %274 = vmatmul.mubr.f32.gmra.mrb[0].mxu0 %v273
    %v275 = vpop.f32.mrb[0].mxu0
    %v276 = vadd.f32 %v198, %v275
    %v277 = vpop.f32.mrb[0].mxu0
    %278 = vdwg.mxu0
    %v279 = vand.u32 %v29, 4294901760
    %280 = vmatprep.subr.mxu0 %v279
    %v281 = vand.u32 %v21, 4294901760
    %282 = vmatpush1.xpose.msra.mxu0 %v281
    %283 = vmatprep.subr.mxu0 0.0
    %284 = vmatpush1.xpose.msra.mxu0 0.0
    %285 = vmatprep.subr.mxu0 0.0
    %286 = vmatpush1.xpose.msra.mxu0 0.0
    %287 = vmatprep.subr.mxu0 0.0
    %288 = vmatpush1.xpose.msra.mxu0 0.0
    %289 = vmatprep.subr.mxu0 0.0
    %290 = vmatpush1.xpose.msra.mxu0 0.0
    %291 = vmatprep.subr.mxu0 0.0
    %292 = vmatpush1.xpose.msra.mxu0 0.0
    %293 = vmatprep.subr.mxu0 0.0
    %294 = vmatpush1.xpose.msra.mxu0 0.0
    %295 = vmatprep.subr.mxu0 0.0
    %296 = vmatpush1.xpose.msra.mxu0 0.0
    %297 = vmatprep.subr.mxu0 0.0
    %298 = vmatpush1.xpose.msra.mxu0 0.0
    %299 = vmatprep.subr.mxu0 0.0
    %300 = vmatpush1.xpose.msra.mxu0 0.0
    %301 = vmatprep.subr.mxu0 0.0
    %302 = vmatpush1.xpose.msra.mxu0 0.0
    %303 = vmatprep.subr.mxu0 0.0
    %304 = vmatpush1.xpose.msra.mxu0 0.0
    %305 = vmatprep.subr.mxu0 0.0
    %306 = vmatpush1.xpose.msra.mxu0 0.0
    %307 = vmatprep.subr.mxu0 0.0
    %308 = vmatpush1.xpose.msra.mxu0 0.0
    %309 = vmatprep.subr.mxu0 0.0
    %310 = vmatpush1.xpose.msra.mxu0 0.0
    %311 = vmatprep.subr.mxu0 0.0
    %312 = vmatpush1.xpose.msra.mxu0 0.0
    %313 = vmatprep.subr.mxu0 0.0
    %314 = vmatpush1.xpose.msra.mxu0 0.0
    %315 = vmatprep.subr.mxu0 0.0
    %316 = vmatpush1.xpose.msra.mxu0 0.0
    %317 = vmatprep.subr.mxu0 0.0
    %318 = vmatpush1.xpose.msra.mxu0 0.0
    %319 = vmatprep.subr.mxu0 0.0
    %320 = vmatpush1.xpose.msra.mxu0 0.0
    %321 = vmatprep.subr.mxu0 0.0
    %322 = vmatpush1.xpose.msra.mxu0 0.0
    %323 = vmatprep.subr.mxu0 0.0
    %324 = vmatpush1.xpose.msra.mxu0 0.0
    %325 = vmatprep.subr.mxu0 0.0
    %326 = vmatpush1.xpose.msra.mxu0 0.0
    %327 = vmatprep.subr.mxu0 0.0
    %328 = vmatpush1.xpose.msra.mxu0 0.0
    %329 = vmatprep.subr.mxu0 0.0
    %330 = vmatpush1.xpose.msra.mxu0 0.0
    %331 = vmatprep.subr.mxu0 0.0
    %332 = vmatpush1.xpose.msra.mxu0 0.0
    %333 = vmatprep.subr.mxu0 0.0
    %334 = vmatpush1.xpose.msra.mxu0 0.0
    %335 = vmatprep.subr.mxu0 0.0
    %336 = vmatpush1.xpose.msra.mxu0 0.0
    %337 = vmatprep.subr.mxu0 0.0
    %338 = vmatpush1.xpose.msra.mxu0 0.0
    %339 = vmatprep.subr.mxu0 0.0
    %340 = vmatpush1.xpose.msra.mxu0 0.0
    %341 = vmatprep.subr.mxu0 0.0
    %342 = vmatpush1.xpose.msra.mxu0 0.0
    %343 = vmatprep.subr.mxu0 0.0
    %344 = vmatpush1.xpose.msra.mxu0 0.0
    %v345 = vand.u32 %v29, 4294901760
    %v346 = vsub.f32 %v29, %v345
    %v347 = vand.u32 %v346, 4294901760
    %348 = vmatprep.mubr.f32.mxu0 %v347
    %v349 = vand.u32 %v21, 4294901760
    %v350 = vsub.f32 %v21, %v349
    %v351 = vand.u32 %v350, 4294901760
    %352 = vmatmul.mubr.f32.gmra.mrb[0].mxu0 %v351
    %v353 = vpop.f32.mrb[0].mxu0
    %v354 = vadd.f32 %v276, %v353
    %v355 = vpop.f32.mrb[0].mxu0
    %356 = vdwg.mxu0
    %v357 = vand.u32 %v29, 4294901760
    %v358 = vsub.f32 %v29, %v357
    %v359 = vand.u32 %v358, 4294901760
    %360 = vmatprep.subr.mxu0 %v359
    %v361 = vand.u32 %v21, 4294901760
    %v362 = vsub.f32 %v21, %v361
    %v363 = vand.u32 %v362, 4294901760
    %364 = vmatpush1.xpose.msra.mxu0 %v363
    %365 = vmatprep.subr.mxu0 0.0
    %366 = vmatpush1.xpose.msra.mxu0 0.0
    %367 = vmatprep.subr.mxu0 0.0
    %368 = vmatpush1.xpose.msra.mxu0 0.0
    %369 = vmatprep.subr.mxu0 0.0
    %370 = vmatpush1.xpose.msra.mxu0 0.0
    %371 = vmatprep.subr.mxu0 0.0
    %372 = vmatpush1.xpose.msra.mxu0 0.0
    %373 = vmatprep.subr.mxu0 0.0
    %374 = vmatpush1.xpose.msra.mxu0 0.0
    %375 = vmatprep.subr.mxu0 0.0
    %376 = vmatpush1.xpose.msra.mxu0 0.0
    %377 = vmatprep.subr.mxu0 0.0
    %378 = vmatpush1.xpose.msra.mxu0 0.0
    %379 = vmatprep.subr.mxu0 0.0
    %380 = vmatpush1.xpose.msra.mxu0 0.0
    %381 = vmatprep.subr.mxu0 0.0
    %382 = vmatpush1.xpose.msra.mxu0 0.0
    %383 = vmatprep.subr.mxu0 0.0
    %384 = vmatpush1.xpose.msra.mxu0 0.0
    %385 = vmatprep.subr.mxu0 0.0
    %386 = vmatpush1.xpose.msra.mxu0 0.0
    %387 = vmatprep.subr.mxu0 0.0
    %388 = vmatpush1.xpose.msra.mxu0 0.0
    %389 = vmatprep.subr.mxu0 0.0
    %390 = vmatpush1.xpose.msra.mxu0 0.0
    %391 = vmatprep.subr.mxu0 0.0
    %392 = vmatpush1.xpose.msra.mxu0 0.0
    %393 = vmatprep.subr.mxu0 0.0
    %394 = vmatpush1.xpose.msra.mxu0 0.0
    %395 = vmatprep.subr.mxu0 0.0
    %396 = vmatpush1.xpose.msra.mxu0 0.0
    %397 = vmatprep.subr.mxu0 0.0
    %398 = vmatpush1.xpose.msra.mxu0 0.0
    %399 = vmatprep.subr.mxu0 0.0
    %400 = vmatpush1.xpose.msra.mxu0 0.0
    %401 = vmatprep.subr.mxu0 0.0
    %402 = vmatpush1.xpose.msra.mxu0 0.0
    %403 = vmatprep.subr.mxu0 0.0
    %404 = vmatpush1.xpose.msra.mxu0 0.0
    %405 = vmatprep.subr.mxu0 0.0
    %406 = vmatpush1.xpose.msra.mxu0 0.0
    %407 = vmatprep.subr.mxu0 0.0
    %408 = vmatpush1.xpose.msra.mxu0 0.0
    %409 = vmatprep.subr.mxu0 0.0
    %410 = vmatpush1.xpose.msra.mxu0 0.0
    %411 = vmatprep.subr.mxu0 0.0
    %412 = vmatpush1.xpose.msra.mxu0 0.0
    %413 = vmatprep.subr.mxu0 0.0
    %414 = vmatpush1.xpose.msra.mxu0 0.0
    %415 = vmatprep.subr.mxu0 0.0
    %416 = vmatpush1.xpose.msra.mxu0 0.0
    %417 = vmatprep.subr.mxu0 0.0
    %418 = vmatpush1.xpose.msra.mxu0 0.0
    %419 = vmatprep.subr.mxu0 0.0
    %420 = vmatpush1.xpose.msra.mxu0 0.0
    %421 = vmatprep.subr.mxu0 0.0
    %422 = vmatpush1.xpose.msra.mxu0 0.0
    %423 = vmatprep.subr.mxu0 0.0
    %424 = vmatpush1.xpose.msra.mxu0 0.0
    %425 = vmatprep.subr.mxu0 0.0
    %426 = vmatpush1.xpose.msra.mxu0 0.0
    %v427 = vand.u32 %v29, 4294901760
    %428 = vmatprep.mubr.f32.mxu0 %v427
    %v429 = vand.u32 %v21, 4294901760
    %430 = vmatmul.mubr.f32.gmra.mrb[0].mxu0 %v429
    %v431 = vpop.f32.mrb[0].mxu0
    %v432 = vadd.f32 %v354, %v431
    %v433 = vpop.f32.mrb[0].mxu0
    %434 = vdwg.mxu0
    %v435 = vand.u32 %v29, 4294901760
    %436 = vmatprep.subr.mxu0 %v435
    %v437 = vand.u32 %v21, 4294901760
    %438 = vmatpush1.xpose.msra.mxu0 %v437
    %439 = vmatprep.subr.mxu0 0.0
    %440 = vmatpush1.xpose.msra.mxu0 0.0
    %441 = vmatprep.subr.mxu0 0.0
    %442 = vmatpush1.xpose.msra.mxu0 0.0
    %443 = vmatprep.subr.mxu0 0.0
    %444 = vmatpush1.xpose.msra.mxu0 0.0
    %445 = vmatprep.subr.mxu0 0.0
    %446 = vmatpush1.xpose.msra.mxu0 0.0
    %447 = vmatprep.subr.mxu0 0.0
    %448 = vmatpush1.xpose.msra.mxu0 0.0
    %449 = vmatprep.subr.mxu0 0.0
    %450 = vmatpush1.xpose.msra.mxu0 0.0
    %451 = vmatprep.subr.mxu0 0.0
    %452 = vmatpush1.xpose.msra.mxu0 0.0
    %453 = vmatprep.subr.mxu0 0.0
    %454 = vmatpush1.xpose.msra.mxu0 0.0
    %455 = vmatprep.subr.mxu0 0.0
    %456 = vmatpush1.xpose.msra.mxu0 0.0
    %457 = vmatprep.subr.mxu0 0.0
    %458 = vmatpush1.xpose.msra.mxu0 0.0
    %459 = vmatprep.subr.mxu0 0.0
    %460 = vmatpush1.xpose.msra.mxu0 0.0
    %461 = vmatprep.subr.mxu0 0.0
    %462 = vmatpush1.xpose.msra.mxu0 0.0
    %463 = vmatprep.subr.mxu0 0.0
    %464 = vmatpush1.xpose.msra.mxu0 0.0
    %465 = vmatprep.subr.mxu0 0.0
    %466 = vmatpush1.xpose.msra.mxu0 0.0
    %467 = vmatprep.subr.mxu0 0.0
    %468 = vmatpush1.xpose.msra.mxu0 0.0
    %469 = vmatprep.subr.mxu0 0.0
    %470 = vmatpush1.xpose.msra.mxu0 0.0
    %471 = vmatprep.subr.mxu0 0.0
    %472 = vmatpush1.xpose.msra.mxu0 0.0
    %473 = vmatprep.subr.mxu0 0.0
    %474 = vmatpush1.xpose.msra.mxu0 0.0
    %475 = vmatprep.subr.mxu0 0.0
    %476 = vmatpush1.xpose.msra.mxu0 0.0
    %477 = vmatprep.subr.mxu0 0.0
    %478 = vmatpush1.xpose.msra.mxu0 0.0
    %479 = vmatprep.subr.mxu0 0.0
    %480 = vmatpush1.xpose.msra.mxu0 0.0
    %481 = vmatprep.subr.mxu0 0.0
    %482 = vmatpush1.xpose.msra.mxu0 0.0
    %483 = vmatprep.subr.mxu0 0.0
    %484 = vmatpush1.xpose.msra.mxu0 0.0
    %485 = vmatprep.subr.mxu0 0.0
    %486 = vmatpush1.xpose.msra.mxu0 0.0
    %487 = vmatprep.subr.mxu0 0.0
    %488 = vmatpush1.xpose.msra.mxu0 0.0
    %489 = vmatprep.subr.mxu0 0.0
    %490 = vmatpush1.xpose.msra.mxu0 0.0
    %491 = vmatprep.subr.mxu0 0.0
    %492 = vmatpush1.xpose.msra.mxu0 0.0
    %493 = vmatprep.subr.mxu0 0.0
    %494 = vmatpush1.xpose.msra.mxu0 0.0
    %495 = vmatprep.subr.mxu0 0.0
    %496 = vmatpush1.xpose.msra.mxu0 0.0
    %497 = vmatprep.subr.mxu0 0.0
    %498 = vmatpush1.xpose.msra.mxu0 0.0
    %499 = vmatprep.subr.mxu0 0.0
    %500 = vmatpush1.xpose.msra.mxu0 0.0
    %v501 = vand.u32 %v29, 4294901760
    %502 = vmatprep.mubr.f32.mxu0 %v501
    %v503 = vand.u32 %v21, 4294901760
    %504 = vmatmul.mubr.f32.gmra.mrb[0].mxu0 %v503
    %v505 = vpop.f32.mrb[0].mxu0
    %v506 = vadd.f32 %v432, %v505
    %v507 = vpop.f32.mrb[0].mxu0
    %508 = vdwg.mxu0
    %v509 = vand.u32 %v30, 4294901760
    %510 = vmatprep.subr.mxu0 %v509
    %v511 = vand.u32 %v22, 4294901760
    %512 = vmatpush1.xpose.msra.mxu0 %v511
    %513 = vmatprep.subr.mxu0 0.0
    %514 = vmatpush1.xpose.msra.mxu0 0.0
    %515 = vmatprep.subr.mxu0 0.0
    %516 = vmatpush1.xpose.msra.mxu0 0.0
    %517 = vmatprep.subr.mxu0 0.0
    %518 = vmatpush1.xpose.msra.mxu0 0.0
    %519 = vmatprep.subr.mxu0 0.0
    %520 = vmatpush1.xpose.msra.mxu0 0.0
    %521 = vmatprep.subr.mxu0 0.0
    %522 = vmatpush1.xpose.msra.mxu0 0.0
    %523 = vmatprep.subr.mxu0 0.0
    %524 = vmatpush1.xpose.msra.mxu0 0.0
    %525 = vmatprep.subr.mxu0 0.0
    %526 = vmatpush1.xpose.msra.mxu0 0.0
    %527 = vmatprep.subr.mxu0 0.0
    %528 = vmatpush1.xpose.msra.mxu0 0.0
    %529 = vmatprep.subr.mxu0 0.0
    %530 = vmatpush1.xpose.msra.mxu0 0.0
    %531 = vmatprep.subr.mxu0 0.0
    %532 = vmatpush1.xpose.msra.mxu0 0.0
    %533 = vmatprep.subr.mxu0 0.0
    %534 = vmatpush1.xpose.msra.mxu0 0.0
    %535 = vmatprep.subr.mxu0 0.0
    %536 = vmatpush1.xpose.msra.mxu0 0.0
    %537 = vmatprep.subr.mxu0 0.0
    %538 = vmatpush1.xpose.msra.mxu0 0.0
    %539 = vmatprep.subr.mxu0 0.0
    %540 = vmatpush1.xpose.msra.mxu0 0.0
    %541 = vmatprep.subr.mxu0 0.0
    %542 = vmatpush1.xpose.msra.mxu0 0.0
    %543 = vmatprep.subr.mxu0 0.0
    %544 = vmatpush1.xpose.msra.mxu0 0.0
    %545 = vmatprep.subr.mxu0 0.0
    %546 = vmatpush1.xpose.msra.mxu0 0.0
    %547 = vmatprep.subr.mxu0 0.0
    %548 = vmatpush1.xpose.msra.mxu0 0.0
    %549 = vmatprep.subr.mxu0 0.0
    %550 = vmatpush1.xpose.msra.mxu0 0.0
    %551 = vmatprep.subr.mxu0 0.0
    %552 = vmatpush1.xpose.msra.mxu0 0.0
    %553 = vmatprep.subr.mxu0 0.0
    %554 = vmatpush1.xpose.msra.mxu0 0.0
    %555 = vmatprep.subr.mxu0 0.0
    %556 = vmatpush1.xpose.msra.mxu0 0.0
    %557 = vmatprep.subr.mxu0 0.0
    %558 = vmatpush1.xpose.msra.mxu0 0.0
    %559 = vmatprep.subr.mxu0 0.0
    %560 = vmatpush1.xpose.msra.mxu0 0.0
    %561 = vmatprep.subr.mxu0 0.0
    %562 = vmatpush1.xpose.msra.mxu0 0.0
    %563 = vmatprep.subr.mxu0 0.0
    %564 = vmatpush1.xpose.msra.mxu0 0.0
    %565 = vmatprep.subr.mxu0 0.0
    %566 = vmatpush1.xpose.msra.mxu0 0.0
    %567 = vmatprep.subr.mxu0 0.0
    %568 = vmatpush1.xpose.msra.mxu0 0.0
    %569 = vmatprep.subr.mxu0 0.0
    %570 = vmatpush1.xpose.msra.mxu0 0.0
    %571 = vmatprep.subr.mxu0 0.0
    %572 = vmatpush1.xpose.msra.mxu0 0.0
    %573 = vmatprep.subr.mxu0 0.0
    %574 = vmatpush1.xpose.msra.mxu0 0.0
    %v575 = vand.u32 %v30, 4294901760
    %v576 = vsub.f32 %v30, %v575
    %v577 = vand.u32 %v576, 4294901760
    %v578 = vsub.f32 %v576, %v577
    %v579 = vand.u32 %v578, 4294901760
    %580 = vmatprep.mubr.f32.mxu0 %v579
    %v581 = vand.u32 %v22, 4294901760
    %v582 = vsub.f32 %v22, %v581
    %v583 = vand.u32 %v582, 4294901760
    %v584 = vsub.f32 %v582, %v583
    %v585 = vand.u32 %v584, 4294901760
    %586 = vmatmul.mubr.f32.gmra.mrb[0].mxu0 %v585
    %v587 = vpop.f32.mrb[0].mxu0
    %v588 = vadd.f32 %v506, %v587
    %v589 = vpop.f32.mrb[0].mxu0
    %590 = vdwg.mxu0
    %v591 = vand.u32 %v30, 4294901760
    %v592 = vsub.f32 %v30, %v591
    %v593 = vand.u32 %v592, 4294901760
    %v594 = vsub.f32 %v592, %v593
    %v595 = vand.u32 %v594, 4294901760
    %596 = vmatprep.subr.mxu0 %v595
    %v597 = vand.u32 %v22, 4294901760
    %v598 = vsub.f32 %v22, %v597
    %v599 = vand.u32 %v598, 4294901760
    %v600 = vsub.f32 %v598, %v599
    %v601 = vand.u32 %v600, 4294901760
    %602 = vmatpush1.xpose.msra.mxu0 %v601
    %603 = vmatprep.subr.mxu0 0.0
    %604 = vmatpush1.xpose.msra.mxu0 0.0
    %605 = vmatprep.subr.mxu0 0.0
    %606 = vmatpush1.xpose.msra.mxu0 0.0
    %607 = vmatprep.subr.mxu0 0.0
    %608 = vmatpush1.xpose.msra.mxu0 0.0
    %609 = vmatprep.subr.mxu0 0.0
    %610 = vmatpush1.xpose.msra.mxu0 0.0
    %611 = vmatprep.subr.mxu0 0.0
    %612 = vmatpush1.xpose.msra.mxu0 0.0
    %613 = vmatprep.subr.mxu0 0.0
    %614 = vmatpush1.xpose.msra.mxu0 0.0
    %615 = vmatprep.subr.mxu0 0.0
    %616 = vmatpush1.xpose.msra.mxu0 0.0
    %617 = vmatprep.subr.mxu0 0.0
    %618 = vmatpush1.xpose.msra.mxu0 0.0
    %619 = vmatprep.subr.mxu0 0.0
    %620 = vmatpush1.xpose.msra.mxu0 0.0
    %621 = vmatprep.subr.mxu0 0.0
    %622 = vmatpush1.xpose.msra.mxu0 0.0
    %623 = vmatprep.subr.mxu0 0.0
    %624 = vmatpush1.xpose.msra.mxu0 0.0
    %625 = vmatprep.subr.mxu0 0.0
    %626 = vmatpush1.xpose.msra.mxu0 0.0
    %627 = vmatprep.subr.mxu0 0.0
    %628 = vmatpush1.xpose.msra.mxu0 0.0
    %629 = vmatprep.subr.mxu0 0.0
    %630 = vmatpush1.xpose.msra.mxu0 0.0
    %631 = vmatprep.subr.mxu0 0.0
    %632 = vmatpush1.xpose.msra.mxu0 0.0
    %633 = vmatprep.subr.mxu0 0.0
    %634 = vmatpush1.xpose.msra.mxu0 0.0
    %635 = vmatprep.subr.mxu0 0.0
    %636 = vmatpush1.xpose.msra.mxu0 0.0
    %637 = vmatprep.subr.mxu0 0.0
    %638 = vmatpush1.xpose.msra.mxu0 0.0
    %639 = vmatprep.subr.mxu0 0.0
    %640 = vmatpush1.xpose.msra.mxu0 0.0
    %641 = vmatprep.subr.mxu0 0.0
    %642 = vmatpush1.xpose.msra.mxu0 0.0
    %643 = vmatprep.subr.mxu0 0.0
    %644 = vmatpush1.xpose.msra.mxu0 0.0
    %645 = vmatprep.subr.mxu0 0.0
    %646 = vmatpush1.xpose.msra.mxu0 0.0
    %647 = vmatprep.subr.mxu0 0.0
    %648 = vmatpush1.xpose.msra.mxu0 0.0
    %649 = vmatprep.subr.mxu0 0.0
    %650 = vmatpush1.xpose.msra.mxu0 0.0
    %651 = vmatprep.subr.mxu0 0.0
    %652 = vmatpush1.xpose.msra.mxu0 0.0
    %653 = vmatprep.subr.mxu0 0.0
    %654 = vmatpush1.xpose.msra.mxu0 0.0
    %655 = vmatprep.subr.mxu0 0.0
    %656 = vmatpush1.xpose.msra.mxu0 0.0
    %657 = vmatprep.subr.mxu0 0.0
    %658 = vmatpush1.xpose.msra.mxu0 0.0
    %659 = vmatprep.subr.mxu0 0.0
    %660 = vmatpush1.xpose.msra.mxu0 0.0
    %661 = vmatprep.subr.mxu0 0.0
    %662 = vmatpush1.xpose.msra.mxu0 0.0
    %663 = vmatprep.subr.mxu0 0.0
    %664 = vmatpush1.xpose.msra.mxu0 0.0
    %v665 = vand.u32 %v30, 4294901760
    %666 = vmatprep.mubr.f32.mxu0 %v665
    %v667 = vand.u32 %v22, 4294901760
    %668 = vmatmul.mubr.f32.gmra.mrb[0].mxu0 %v667
    %v669 = vpop.f32.mrb[0].mxu0
    %v670 = vadd.f32 %v588, %v669
    %v671 = vpop.f32.mrb[0].mxu0
    %672 = vdwg.mxu0
    %v673 = vand.u32 %v30, 4294901760
    %v674 = vsub.f32 %v30, %v673
    %675 = vmatprep.subr.mxu0 %v674
    %v676 = vand.u32 %v22, 4294901760
    %v677 = vsub.f32 %v22, %v676
    %678 = vmatpush1.xpose.msra.mxu0 %v677
    %679 = vmatprep.subr.mxu0 0.0
    %680 = vmatpush1.xpose.msra.mxu0 0.0
    %681 = vmatprep.subr.mxu0 0.0
    %682 = vmatpush1.xpose.msra.mxu0 0.0
    %683 = vmatprep.subr.mxu0 0.0
    %684 = vmatpush1.xpose.msra.mxu0 0.0
    %685 = vmatprep.subr.mxu0 0.0
    %686 = vmatpush1.xpose.msra.mxu0 0.0
    %687 = vmatprep.subr.mxu0 0.0
    %688 = vmatpush1.xpose.msra.mxu0 0.0
    %689 = vmatprep.subr.mxu0 0.0
    %690 = vmatpush1.xpose.msra.mxu0 0.0
    %691 = vmatprep.subr.mxu0 0.0
    %692 = vmatpush1.xpose.msra.mxu0 0.0
    %693 = vmatprep.subr.mxu0 0.0
    %694 = vmatpush1.xpose.msra.mxu0 0.0
    %695 = vmatprep.subr.mxu0 0.0
    %696 = vmatpush1.xpose.msra.mxu0 0.0
    %697 = vmatprep.subr.mxu0 0.0
    %698 = vmatpush1.xpose.msra.mxu0 0.0
    %699 = vmatprep.subr.mxu0 0.0
    %700 = vmatpush1.xpose.msra.mxu0 0.0
    %701 = vmatprep.subr.mxu0 0.0
    %702 = vmatpush1.xpose.msra.mxu0 0.0
    %703 = vmatprep.subr.mxu0 0.0
    %704 = vmatpush1.xpose.msra.mxu0 0.0
    %705 = vmatprep.subr.mxu0 0.0
    %706 = vmatpush1.xpose.msra.mxu0 0.0
    %707 = vmatprep.subr.mxu0 0.0
    %708 = vmatpush1.xpose.msra.mxu0 0.0
    %709 = vmatprep.subr.mxu0 0.0
    %710 = vmatpush1.xpose.msra.mxu0 0.0
    %711 = vmatprep.subr.mxu0 0.0
    %712 = vmatpush1.xpose.msra.mxu0 0.0
    %713 = vmatprep.subr.mxu0 0.0
    %714 = vmatpush1.xpose.msra.mxu0 0.0
    %715 = vmatprep.subr.mxu0 0.0
    %716 = vmatpush1.xpose.msra.mxu0 0.0
    %717 = vmatprep.subr.mxu0 0.0
    %718 = vmatpush1.xpose.msra.mxu0 0.0
    %719 = vmatprep.subr.mxu0 0.0
    %720 = vmatpush1.xpose.msra.mxu0 0.0
    %721 = vmatprep.subr.mxu0 0.0
    %722 = vmatpush1.xpose.msra.mxu0 0.0
    %723 = vmatprep.subr.mxu0 0.0
    %724 = vmatpush1.xpose.msra.mxu0 0.0
    %725 = vmatprep.subr.mxu0 0.0
    %726 = vmatpush1.xpose.msra.mxu0 0.0
    %727 = vmatprep.subr.mxu0 0.0
    %728 = vmatpush1.xpose.msra.mxu0 0.0
    %729 = vmatprep.subr.mxu0 0.0
    %730 = vmatpush1.xpose.msra.mxu0 0.0
    %731 = vmatprep.subr.mxu0 0.0
    %732 = vmatpush1.xpose.msra.mxu0 0.0
    %733 = vmatprep.subr.mxu0 0.0
    %734 = vmatpush1.xpose.msra.mxu0 0.0
    %735 = vmatprep.subr.mxu0 0.0
    %736 = vmatpush1.xpose.msra.mxu0 0.0
    %737 = vmatprep.subr.mxu0 0.0
    %738 = vmatpush1.xpose.msra.mxu0 0.0
    %739 = vmatprep.subr.mxu0 0.0
    %740 = vmatpush1.xpose.msra.mxu0 0.0
    %v741 = vand.u32 %v30, 4294901760
    %v742 = vsub.f32 %v30, %v741
    %743 = vmatprep.mubr.f32.mxu0 %v742
    %v744 = vand.u32 %v22, 4294901760
    %v745 = vsub.f32 %v22, %v744
    %746 = vmatmul.mubr.f32.gmra.mrb[0].mxu0 %v745
    %v747 = vpop.f32.mrb[0].mxu0
    %v748 = vadd.f32 %v670, %v747
    %v749 = vpop.f32.mrb[0].mxu0
    %750 = vdwg.mxu0
    %v751 = vand.u32 %v30, 4294901760
    %752 = vmatprep.subr.mxu0 %v751
    %v753 = vand.u32 %v22, 4294901760
    %754 = vmatpush1.xpose.msra.mxu0 %v753
    %755 = vmatprep.subr.mxu0 0.0
    %756 = vmatpush1.xpose.msra.mxu0 0.0
    %757 = vmatprep.subr.mxu0 0.0
    %758 = vmatpush1.xpose.msra.mxu0 0.0
    %759 = vmatprep.subr.mxu0 0.0
    %760 = vmatpush1.xpose.msra.mxu0 0.0
    %761 = vmatprep.subr.mxu0 0.0
    %762 = vmatpush1.xpose.msra.mxu0 0.0
    %763 = vmatprep.subr.mxu0 0.0
    %764 = vmatpush1.xpose.msra.mxu0 0.0
    %765 = vmatprep.subr.mxu0 0.0
    %766 = vmatpush1.xpose.msra.mxu0 0.0
    %767 = vmatprep.subr.mxu0 0.0
    %768 = vmatpush1.xpose.msra.mxu0 0.0
    %769 = vmatprep.subr.mxu0 0.0
    %770 = vmatpush1.xpose.msra.mxu0 0.0
    %771 = vmatprep.subr.mxu0 0.0
    %772 = vmatpush1.xpose.msra.mxu0 0.0
    %773 = vmatprep.subr.mxu0 0.0
    %774 = vmatpush1.xpose.msra.mxu0 0.0
    %775 = vmatprep.subr.mxu0 0.0
    %776 = vmatpush1.xpose.msra.mxu0 0.0
    %777 = vmatprep.subr.mxu0 0.0
    %778 = vmatpush1.xpose.msra.mxu0 0.0
    %779 = vmatprep.subr.mxu0 0.0
    %780 = vmatpush1.xpose.msra.mxu0 0.0
    %781 = vmatprep.subr.mxu0 0.0
    %782 = vmatpush1.xpose.msra.mxu0 0.0
    %783 = vmatprep.subr.mxu0 0.0
    %784 = vmatpush1.xpose.msra.mxu0 0.0
    %785 = vmatprep.subr.mxu0 0.0
    %786 = vmatpush1.xpose.msra.mxu0 0.0
    %787 = vmatprep.subr.mxu0 0.0
    %788 = vmatpush1.xpose.msra.mxu0 0.0
    %789 = vmatprep.subr.mxu0 0.0
    %790 = vmatpush1.xpose.msra.mxu0 0.0
    %791 = vmatprep.subr.mxu0 0.0
    %792 = vmatpush1.xpose.msra.mxu0 0.0
    %793 = vmatprep.subr.mxu0 0.0
    %794 = vmatpush1.xpose.msra.mxu0 0.0
    %795 = vmatprep.subr.mxu0 0.0
    %796 = vmatpush1.xpose.msra.mxu0 0.0
    %797 = vmatprep.subr.mxu0 0.0
    %798 = vmatpush1.xpose.msra.mxu0 0.0
    %799 = vmatprep.subr.mxu0 0.0
    %800 = vmatpush1.xpose.msra.mxu0 0.0
    %801 = vmatprep.subr.mxu0 0.0
    %802 = vmatpush1.xpose.msra.mxu0 0.0
    %803 = vmatprep.subr.mxu0 0.0
    %804 = vmatpush1.xpose.msra.mxu0 0.0
    %805 = vmatprep.subr.mxu0 0.0
    %806 = vmatpush1.xpose.msra.mxu0 0.0
    %807 = vmatprep.subr.mxu0 0.0
    %808 = vmatpush1.xpose.msra.mxu0 0.0
    %809 = vmatprep.subr.mxu0 0.0
    %810 = vmatpush1.xpose.msra.mxu0 0.0
    %811 = vmatprep.subr.mxu0 0.0
    %812 = vmatpush1.xpose.msra.mxu0 0.0
    %813 = vmatprep.subr.mxu0 0.0
    %814 = vmatpush1.xpose.msra.mxu0 0.0
    %815 = vmatprep.subr.mxu0 0.0
    %816 = vmatpush1.xpose.msra.mxu0 0.0
    %v817 = vand.u32 %v30, 4294901760
    %v818 = vsub.f32 %v30, %v817
    %v819 = vand.u32 %v818, 4294901760
    %820 = vmatprep.mubr.f32.mxu0 %v819
    %v821 = vand.u32 %v22, 4294901760
    %v822 = vsub.f32 %v22, %v821
    %v823 = vand.u32 %v822, 4294901760
    %824 = vmatmul.mubr.f32.gmra.mrb[0].mxu0 %v823
    %v825 = vpop.f32.mrb[0].mxu0
    %v826 = vadd.f32 %v748, %v825
    %v827 = vpop.f32.mrb[0].mxu0
    %828 = vdwg.mxu0
    %v829 = vand.u32 %v30, 4294901760
    %v830 = vsub.f32 %v30, %v829
    %v831 = vand.u32 %v830, 4294901760
    %832 = vmatprep.subr.mxu0 %v831
    %v833 = vand.u32 %v22, 4294901760
    %v834 = vsub.f32 %v22, %v833
    %v835 = vand.u32 %v834, 4294901760
    %836 = vmatpush1.xpose.msra.mxu0 %v835
    %837 = vmatprep.subr.mxu0 0.0
    %838 = vmatpush1.xpose.msra.mxu0 0.0
    %839 = vmatprep.subr.mxu0 0.0
    %840 = vmatpush1.xpose.msra.mxu0 0.0
    %841 = vmatprep.subr.mxu0 0.0
    %842 = vmatpush1.xpose.msra.mxu0 0.0
    %843 = vmatprep.subr.mxu0 0.0
    %844 = vmatpush1.xpose.msra.mxu0 0.0
    %845 = vmatprep.subr.mxu0 0.0
    %846 = vmatpush1.xpose.msra.mxu0 0.0
    %847 = vmatprep.subr.mxu0 0.0
    %848 = vmatpush1.xpose.msra.mxu0 0.0
    %849 = vmatprep.subr.mxu0 0.0
    %850 = vmatpush1.xpose.msra.mxu0 0.0
    %851 = vmatprep.subr.mxu0 0.0
    %852 = vmatpush1.xpose.msra.mxu0 0.0
    %853 = vmatprep.subr.mxu0 0.0
    %854 = vmatpush1.xpose.msra.mxu0 0.0
    %855 = vmatprep.subr.mxu0 0.0
    %856 = vmatpush1.xpose.msra.mxu0 0.0
    %857 = vmatprep.subr.mxu0 0.0
    %858 = vmatpush1.xpose.msra.mxu0 0.0
    %859 = vmatprep.subr.mxu0 0.0
    %860 = vmatpush1.xpose.msra.mxu0 0.0
    %861 = vmatprep.subr.mxu0 0.0
    %862 = vmatpush1.xpose.msra.mxu0 0.0
    %863 = vmatprep.subr.mxu0 0.0
    %864 = vmatpush1.xpose.msra.mxu0 0.0
    %865 = vmatprep.subr.mxu0 0.0
    %866 = vmatpush1.xpose.msra.mxu0 0.0
    %867 = vmatprep.subr.mxu0 0.0
    %868 = vmatpush1.xpose.msra.mxu0 0.0
    %869 = vmatprep.subr.mxu0 0.0
    %870 = vmatpush1.xpose.msra.mxu0 0.0
    %871 = vmatprep.subr.mxu0 0.0
    %872 = vmatpush1.xpose.msra.mxu0 0.0
    %873 = vmatprep.subr.mxu0 0.0
    %874 = vmatpush1.xpose.msra.mxu0 0.0
    %875 = vmatprep.subr.mxu0 0.0
    %876 = vmatpush1.xpose.msra.mxu0 0.0
    %877 = vmatprep.subr.mxu0 0.0
    %878 = vmatpush1.xpose.msra.mxu0 0.0
    %879 = vmatprep.subr.mxu0 0.0
    %880 = vmatpush1.xpose.msra.mxu0 0.0
    %881 = vmatprep.subr.mxu0 0.0
    %882 = vmatpush1.xpose.msra.mxu0 0.0
    %883 = vmatprep.subr.mxu0 0.0
    %884 = vmatpush1.xpose.msra.mxu0 0.0
    %885 = vmatprep.subr.mxu0 0.0
    %886 = vmatpush1.xpose.msra.mxu0 0.0
    %887 = vmatprep.subr.mxu0 0.0
    %888 = vmatpush1.xpose.msra.mxu0 0.0
    %889 = vmatprep.subr.mxu0 0.0
    %890 = vmatpush1.xpose.msra.mxu0 0.0
    %891 = vmatprep.subr.mxu0 0.0
    %892 = vmatpush1.xpose.msra.mxu0 0.0
    %893 = vmatprep.subr.mxu0 0.0
    %894 = vmatpush1.xpose.msra.mxu0 0.0
    %895 = vmatprep.subr.mxu0 0.0
    %896 = vmatpush1.xpose.msra.mxu0 0.0
    %897 = vmatprep.subr.mxu0 0.0
    %898 = vmatpush1.xpose.msra.mxu0 0.0
    %v899 = vand.u32 %v30, 4294901760
    %900 = vmatprep.mubr.f32.mxu0 %v899
    %v901 = vand.u32 %v22, 4294901760
    %902 = vmatmul.mubr.f32.gmra.mrb[0].mxu0 %v901
    %v903 = vpop.f32.mrb[0].mxu0
    %v904 = vadd.f32 %v826, %v903
    %v905 = vpop.f32.mrb[0].mxu0
    %906 = vdwg.mxu0
    %v907 = vand.u32 %v30, 4294901760
    %908 = vmatprep.subr.mxu0 %v907
    %v909 = vand.u32 %v22, 4294901760
    %910 = vmatpush1.xpose.msra.mxu0 %v909
    %911 = vmatprep.subr.mxu0 0.0
    %912 = vmatpush1.xpose.msra.mxu0 0.0
    %913 = vmatprep.subr.mxu0 0.0
    %914 = vmatpush1.xpose.msra.mxu0 0.0
    %915 = vmatprep.subr.mxu0 0.0
    %916 = vmatpush1.xpose.msra.mxu0 0.0
    %917 = vmatprep.subr.mxu0 0.0
    %918 = vmatpush1.xpose.msra.mxu0 0.0
    %919 = vmatprep.subr.mxu0 0.0
    %920 = vmatpush1.xpose.msra.mxu0 0.0
    %921 = vmatprep.subr.mxu0 0.0
    %922 = vmatpush1.xpose.msra.mxu0 0.0
    %923 = vmatprep.subr.mxu0 0.0
    %924 = vmatpush1.xpose.msra.mxu0 0.0
    %925 = vmatprep.subr.mxu0 0.0
    %926 = vmatpush1.xpose.msra.mxu0 0.0
    %927 = vmatprep.subr.mxu0 0.0
    %928 = vmatpush1.xpose.msra.mxu0 0.0
    %929 = vmatprep.subr.mxu0 0.0
    %930 = vmatpush1.xpose.msra.mxu0 0.0
    %931 = vmatprep.subr.mxu0 0.0
    %932 = vmatpush1.xpose.msra.mxu0 0.0
    %933 = vmatprep.subr.mxu0 0.0
    %934 = vmatpush1.xpose.msra.mxu0 0.0
    %935 = vmatprep.subr.mxu0 0.0
    %936 = vmatpush1.xpose.msra.mxu0 0.0
    %937 = vmatprep.subr.mxu0 0.0
    %938 = vmatpush1.xpose.msra.mxu0 0.0
    %939 = vmatprep.subr.mxu0 0.0
    %940 = vmatpush1.xpose.msra.mxu0 0.0
    %941 = vmatprep.subr.mxu0 0.0
    %942 = vmatpush1.xpose.msra.mxu0 0.0
    %943 = vmatprep.subr.mxu0 0.0
    %944 = vmatpush1.xpose.msra.mxu0 0.0
    %945 = vmatprep.subr.mxu0 0.0
    %946 = vmatpush1.xpose.msra.mxu0 0.0
    %947 = vmatprep.subr.mxu0 0.0
    %948 = vmatpush1.xpose.msra.mxu0 0.0
    %949 = vmatprep.subr.mxu0 0.0
    %950 = vmatpush1.xpose.msra.mxu0 0.0
    %951 = vmatprep.subr.mxu0 0.0
    %952 = vmatpush1.xpose.msra.mxu0 0.0
    %953 = vmatprep.subr.mxu0 0.0
    %954 = vmatpush1.xpose.msra.mxu0 0.0
    %955 = vmatprep.subr.mxu0 0.0
    %956 = vmatpush1.xpose.msra.mxu0 0.0
    %957 = vmatprep.subr.mxu0 0.0
    %958 = vmatpush1.xpose.msra.mxu0 0.0
    %959 = vmatprep.subr.mxu0 0.0
    %960 = vmatpush1.xpose.msra.mxu0 0.0
    %961 = vmatprep.subr.mxu0 0.0
    %962 = vmatpush1.xpose.msra.mxu0 0.0
    %963 = vmatprep.subr.mxu0 0.0
    %964 = vmatpush1.xpose.msra.mxu0 0.0
    %965 = vmatprep.subr.mxu0 0.0
    %966 = vmatpush1.xpose.msra.mxu0 0.0
    %967 = vmatprep.subr.mxu0 0.0
    %968 = vmatpush1.xpose.msra.mxu0 0.0
    %969 = vmatprep.subr.mxu0 0.0
    %970 = vmatpush1.xpose.msra.mxu0 0.0
    %971 = vmatprep.subr.mxu0 0.0
    %972 = vmatpush1.xpose.msra.mxu0 0.0
    %v973 = vand.u32 %v30, 4294901760
    %974 = vmatprep.mubr.f32.mxu0 %v973
    %v975 = vand.u32 %v22, 4294901760
    %976 = vmatmul.mubr.f32.gmra.mrb[0].mxu0 %v975
    %v977 = vpop.f32.mrb[0].mxu0
    %v978 = vadd.f32 %v904, %v977
    %v979 = vpop.f32.mrb[0].mxu0
    %980 = vdwg.mxu0
    %v981 = vand.u32 %v31, 4294901760
    %982 = vmatprep.subr.mxu0 %v981
    %v983 = vand.u32 %v23, 4294901760
    %984 = vmatpush1.xpose.msra.mxu0 %v983
    %985 = vmatprep.subr.mxu0 0.0
    %986 = vmatpush1.xpose.msra.mxu0 0.0
    %987 = vmatprep.subr.mxu0 0.0
    %988 = vmatpush1.xpose.msra.mxu0 0.0
    %989 = vmatprep.subr.mxu0 0.0
    %990 = vmatpush1.xpose.msra.mxu0 0.0
    %991 = vmatprep.subr.mxu0 0.0
    %992 = vmatpush1.xpose.msra.mxu0 0.0
    %993 = vmatprep.subr.mxu0 0.0
    %994 = vmatpush1.xpose.msra.mxu0 0.0
    %995 = vmatprep.subr.mxu0 0.0
    %996 = vmatpush1.xpose.msra.mxu0 0.0
    %997 = vmatprep.subr.mxu0 0.0
    %998 = vmatpush1.xpose.msra.mxu0 0.0
    %999 = vmatprep.subr.mxu0 0.0
    %1000 = vmatpush1.xpose.msra.mxu0 0.0
    %1001 = vmatprep.subr.mxu0 0.0
    %1002 = vmatpush1.xpose.msra.mxu0 0.0
    %1003 = vmatprep.subr.mxu0 0.0
    %1004 = vmatpush1.xpose.msra.mxu0 0.0
    %1005 = vmatprep.subr.mxu0 0.0
    %1006 = vmatpush1.xpose.msra.mxu0 0.0
    %1007 = vmatprep.subr.mxu0 0.0
    %1008 = vmatpush1.xpose.msra.mxu0 0.0
    %1009 = vmatprep.subr.mxu0 0.0
    %1010 = vmatpush1.xpose.msra.mxu0 0.0
    %1011 = vmatprep.subr.mxu0 0.0
    %1012 = vmatpush1.xpose.msra.mxu0 0.0
    %1013 = vmatprep.subr.mxu0 0.0
    %1014 = vmatpush1.xpose.msra.mxu0 0.0
    %1015 = vmatprep.subr.mxu0 0.0
    %1016 = vmatpush1.xpose.msra.mxu0 0.0
    %1017 = vmatprep.subr.mxu0 0.0
    %1018 = vmatpush1.xpose.msra.mxu0 0.0
    %1019 = vmatprep.subr.mxu0 0.0
    %1020 = vmatpush1.xpose.msra.mxu0 0.0
    %1021 = vmatprep.subr.mxu0 0.0
    %1022 = vmatpush1.xpose.msra.mxu0 0.0
    %1023 = vmatprep.subr.mxu0 0.0
    %1024 = vmatpush1.xpose.msra.mxu0 0.0
    %1025 = vmatprep.subr.mxu0 0.0
    %1026 = vmatpush1.xpose.msra.mxu0 0.0
    %1027 = vmatprep.subr.mxu0 0.0
    %1028 = vmatpush1.xpose.msra.mxu0 0.0
    %1029 = vmatprep.subr.mxu0 0.0
    %1030 = vmatpush1.xpose.msra.mxu0 0.0
    %1031 = vmatprep.subr.mxu0 0.0
    %1032 = vmatpush1.xpose.msra.mxu0 0.0
    %1033 = vmatprep.subr.mxu0 0.0
    %1034 = vmatpush1.xpose.msra.mxu0 0.0
    %1035 = vmatprep.subr.mxu0 0.0
    %1036 = vmatpush1.xpose.msra.mxu0 0.0
    %1037 = vmatprep.subr.mxu0 0.0
    %1038 = vmatpush1.xpose.msra.mxu0 0.0
    %1039 = vmatprep.subr.mxu0 0.0
    %1040 = vmatpush1.xpose.msra.mxu0 0.0
    %1041 = vmatprep.subr.mxu0 0.0
    %1042 = vmatpush1.xpose.msra.mxu0 0.0
    %1043 = vmatprep.subr.mxu0 0.0
    %1044 = vmatpush1.xpose.msra.mxu0 0.0
    %1045 = vmatprep.subr.mxu0 0.0
    %1046 = vmatpush1.xpose.msra.mxu0 0.0
    %v1047 = vand.u32 %v31, 4294901760
    %v1048 = vsub.f32 %v31, %v1047
    %v1049 = vand.u32 %v1048, 4294901760
    %v1050 = vsub.f32 %v1048, %v1049
    %v1051 = vand.u32 %v1050, 4294901760
    %1052 = vmatprep.mubr.f32.mxu0 %v1051
    %v1053 = vand.u32 %v23, 4294901760
    %v1054 = vsub.f32 %v23, %v1053
    %v1055 = vand.u32 %v1054, 4294901760
    %v1056 = vsub.f32 %v1054, %v1055
    %v1057 = vand.u32 %v1056, 4294901760
    %1058 = vmatmul.mubr.f32.gmra.mrb[0].mxu0 %v1057
    %v1059 = vpop.f32.mrb[0].mxu0
    %v1060 = vadd.f32 %v978, %v1059
    %v1061 = vpop.f32.mrb[0].mxu0
    %1062 = vdwg.mxu0
    %v1063 = vand.u32 %v31, 4294901760
    %v1064 = vsub.f32 %v31, %v1063
    %v1065 = vand.u32 %v1064, 4294901760
    %v1066 = vsub.f32 %v1064, %v1065
    %v1067 = vand.u32 %v1066, 4294901760
    %1068 = vmatprep.subr.mxu0 %v1067
    %v1069 = vand.u32 %v23, 4294901760
    %v1070 = vsub.f32 %v23, %v1069
    %v1071 = vand.u32 %v1070, 4294901760
    %v1072 = vsub.f32 %v1070, %v1071
    %v1073 = vand.u32 %v1072, 4294901760
    %1074 = vmatpush1.xpose.msra.mxu0 %v1073
    %1075 = vmatprep.subr.mxu0 0.0
    %1076 = vmatpush1.xpose.msra.mxu0 0.0
    %1077 = vmatprep.subr.mxu0 0.0
    %1078 = vmatpush1.xpose.msra.mxu0 0.0
    %1079 = vmatprep.subr.mxu0 0.0
    %1080 = vmatpush1.xpose.msra.mxu0 0.0
    %1081 = vmatprep.subr.mxu0 0.0
    %1082 = vmatpush1.xpose.msra.mxu0 0.0
    %1083 = vmatprep.subr.mxu0 0.0
    %1084 = vmatpush1.xpose.msra.mxu0 0.0
    %1085 = vmatprep.subr.mxu0 0.0
    %1086 = vmatpush1.xpose.msra.mxu0 0.0
    %1087 = vmatprep.subr.mxu0 0.0
    %1088 = vmatpush1.xpose.msra.mxu0 0.0
    %1089 = vmatprep.subr.mxu0 0.0
    %1090 = vmatpush1.xpose.msra.mxu0 0.0
    %1091 = vmatprep.subr.mxu0 0.0
    %1092 = vmatpush1.xpose.msra.mxu0 0.0
    %1093 = vmatprep.subr.mxu0 0.0
    %1094 = vmatpush1.xpose.msra.mxu0 0.0
    %1095 = vmatprep.subr.mxu0 0.0
    %1096 = vmatpush1.xpose.msra.mxu0 0.0
    %1097 = vmatprep.subr.mxu0 0.0
    %1098 = vmatpush1.xpose.msra.mxu0 0.0
    %1099 = vmatprep.subr.mxu0 0.0
    %1100 = vmatpush1.xpose.msra.mxu0 0.0
    %1101 = vmatprep.subr.mxu0 0.0
    %1102 = vmatpush1.xpose.msra.mxu0 0.0
    %1103 = vmatprep.subr.mxu0 0.0
    %1104 = vmatpush1.xpose.msra.mxu0 0.0
    %1105 = vmatprep.subr.mxu0 0.0
    %1106 = vmatpush1.xpose.msra.mxu0 0.0
    %1107 = vmatprep.subr.mxu0 0.0
    %1108 = vmatpush1.xpose.msra.mxu0 0.0
    %1109 = vmatprep.subr.mxu0 0.0
    %1110 = vmatpush1.xpose.msra.mxu0 0.0
    %1111 = vmatprep.subr.mxu0 0.0
    %1112 = vmatpush1.xpose.msra.mxu0 0.0
    %1113 = vmatprep.subr.mxu0 0.0
    %1114 = vmatpush1.xpose.msra.mxu0 0.0
    %1115 = vmatprep.subr.mxu0 0.0
    %1116 = vmatpush1.xpose.msra.mxu0 0.0
    %1117 = vmatprep.subr.mxu0 0.0
    %1118 = vmatpush1.xpose.msra.mxu0 0.0
    %1119 = vmatprep.subr.mxu0 0.0
    %1120 = vmatpush1.xpose.msra.mxu0 0.0
    %1121 = vmatprep.subr.mxu0 0.0
    %1122 = vmatpush1.xpose.msra.mxu0 0.0
    %1123 = vmatprep.subr.mxu0 0.0
    %1124 = vmatpush1.xpose.msra.mxu0 0.0
    %1125 = vmatprep.subr.mxu0 0.0
    %1126 = vmatpush1.xpose.msra.mxu0 0.0
    %1127 = vmatprep.subr.mxu0 0.0
    %1128 = vmatpush1.xpose.msra.mxu0 0.0
    %1129 = vmatprep.subr.mxu0 0.0
    %1130 = vmatpush1.xpose.msra.mxu0 0.0
    %1131 = vmatprep.subr.mxu0 0.0
    %1132 = vmatpush1.xpose.msra.mxu0 0.0
    %1133 = vmatprep.subr.mxu0 0.0
    %1134 = vmatpush1.xpose.msra.mxu0 0.0
    %1135 = vmatprep.subr.mxu0 0.0
    %1136 = vmatpush1.xpose.msra.mxu0 0.0
    %v1137 = vand.u32 %v31, 4294901760
    %1138 = vmatprep.mubr.f32.mxu0 %v1137
    %v1139 = vand.u32 %v23, 4294901760
    %1140 = vmatmul.mubr.f32.gmra.mrb[0].mxu0 %v1139
    %v1141 = vpop.f32.mrb[0].mxu0
    %v1142 = vadd.f32 %v1060, %v1141
    %v1143 = vpop.f32.mrb[0].mxu0
    %1144 = vdwg.mxu0
    %v1145 = vand.u32 %v31, 4294901760
    %v1146 = vsub.f32 %v31, %v1145
    %1147 = vmatprep.subr.mxu0 %v1146
    %v1148 = vand.u32 %v23, 4294901760
    %v1149 = vsub.f32 %v23, %v1148
    %1150 = vmatpush1.xpose.msra.mxu0 %v1149
    %1151 = vmatprep.subr.mxu0 0.0
    %1152 = vmatpush1.xpose.msra.mxu0 0.0
    %1153 = vmatprep.subr.mxu0 0.0
    %1154 = vmatpush1.xpose.msra.mxu0 0.0
    %1155 = vmatprep.subr.mxu0 0.0
    %1156 = vmatpush1.xpose.msra.mxu0 0.0
    %1157 = vmatprep.subr.mxu0 0.0
    %1158 = vmatpush1.xpose.msra.mxu0 0.0
    %1159 = vmatprep.subr.mxu0 0.0
    %1160 = vmatpush1.xpose.msra.mxu0 0.0
    %1161 = vmatprep.subr.mxu0 0.0
    %1162 = vmatpush1.xpose.msra.mxu0 0.0
    %1163 = vmatprep.subr.mxu0 0.0
    %1164 = vmatpush1.xpose.msra.mxu0 0.0
    %1165 = vmatprep.subr.mxu0 0.0
    %1166 = vmatpush1.xpose.msra.mxu0 0.0
    %1167 = vmatprep.subr.mxu0 0.0
    %1168 = vmatpush1.xpose.msra.mxu0 0.0
    %1169 = vmatprep.subr.mxu0 0.0
    %1170 = vmatpush1.xpose.msra.mxu0 0.0
    %1171 = vmatprep.subr.mxu0 0.0
    %1172 = vmatpush1.xpose.msra.mxu0 0.0
    %1173 = vmatprep.subr.mxu0 0.0
    %1174 = vmatpush1.xpose.msra.mxu0 0.0
    %1175 = vmatprep.subr.mxu0 0.0
    %1176 = vmatpush1.xpose.msra.mxu0 0.0
    %1177 = vmatprep.subr.mxu0 0.0
    %1178 = vmatpush1.xpose.msra.mxu0 0.0
    %1179 = vmatprep.subr.mxu0 0.0
    %1180 = vmatpush1.xpose.msra.mxu0 0.0
    %1181 = vmatprep.subr.mxu0 0.0
    %1182 = vmatpush1.xpose.msra.mxu0 0.0
    %1183 = vmatprep.subr.mxu0 0.0
    %1184 = vmatpush1.xpose.msra.mxu0 0.0
    %1185 = vmatprep.subr.mxu0 0.0
    %1186 = vmatpush1.xpose.msra.mxu0 0.0
    %1187 = vmatprep.subr.mxu0 0.0
    %1188 = vmatpush1.xpose.msra.mxu0 0.0
    %1189 = vmatprep.subr.mxu0 0.0
    %1190 = vmatpush1.xpose.msra.mxu0 0.0
    %1191 = vmatprep.subr.mxu0 0.0
    %1192 = vmatpush1.xpose.msra.mxu0 0.0
    %1193 = vmatprep.subr.mxu0 0.0
    %1194 = vmatpush1.xpose.msra.mxu0 0.0
    %1195 = vmatprep.subr.mxu0 0.0
    %1196 = vmatpush1.xpose.msra.mxu0 0.0
    %1197 = vmatprep.subr.mxu0 0.0
    %1198 = vmatpush1.xpose.msra.mxu0 0.0
    %1199 = vmatprep.subr.mxu0 0.0
    %1200 = vmatpush1.xpose.msra.mxu0 0.0
    %1201 = vmatprep.subr.mxu0 0.0
    %1202 = vmatpush1.xpose.msra.mxu0 0.0
    %1203 = vmatprep.subr.mxu0 0.0
    %1204 = vmatpush1.xpose.msra.mxu0 0.0
    %1205 = vmatprep.subr.mxu0 0.0
    %1206 = vmatpush1.xpose.msra.mxu0 0.0
    %1207 = vmatprep.subr.mxu0 0.0
    %1208 = vmatpush1.xpose.msra.mxu0 0.0
    %1209 = vmatprep.subr.mxu0 0.0
    %1210 = vmatpush1.xpose.msra.mxu0 0.0
    %1211 = vmatprep.subr.mxu0 0.0
    %1212 = vmatpush1.xpose.msra.mxu0 0.0
    %v1213 = vand.u32 %v31, 4294901760
    %v1214 = vsub.f32 %v31, %v1213
    %1215 = vmatprep.mubr.f32.mxu0 %v1214
    %v1216 = vand.u32 %v23, 4294901760
    %v1217 = vsub.f32 %v23, %v1216
    %1218 = vmatmul.mubr.f32.gmra.mrb[0].mxu0 %v1217
    %v1219 = vpop.f32.mrb[0].mxu0
    %v1220 = vadd.f32 %v1142, %v1219
    %v1221 = vpop.f32.mrb[0].mxu0
    %1222 = vdwg.mxu0
    %v1223 = vand.u32 %v31, 4294901760
    %1224 = vmatprep.subr.mxu0 %v1223
    %v1225 = vand.u32 %v23, 4294901760
    %1226 = vmatpush1.xpose.msra.mxu0 %v1225
    %1227 = vmatprep.subr.mxu0 0.0
    %1228 = vmatpush1.xpose.msra.mxu0 0.0
    %1229 = vmatprep.subr.mxu0 0.0
    %1230 = vmatpush1.xpose.msra.mxu0 0.0
    %1231 = vmatprep.subr.mxu0 0.0
    %1232 = vmatpush1.xpose.msra.mxu0 0.0
    %1233 = vmatprep.subr.mxu0 0.0
    %1234 = vmatpush1.xpose.msra.mxu0 0.0
    %1235 = vmatprep.subr.mxu0 0.0
    %1236 = vmatpush1.xpose.msra.mxu0 0.0
    %1237 = vmatprep.subr.mxu0 0.0
    %1238 = vmatpush1.xpose.msra.mxu0 0.0
    %1239 = vmatprep.subr.mxu0 0.0
    %1240 = vmatpush1.xpose.msra.mxu0 0.0
    %1241 = vmatprep.subr.mxu0 0.0
    %1242 = vmatpush1.xpose.msra.mxu0 0.0
    %1243 = vmatprep.subr.mxu0 0.0
    %1244 = vmatpush1.xpose.msra.mxu0 0.0
    %1245 = vmatprep.subr.mxu0 0.0
    %1246 = vmatpush1.xpose.msra.mxu0 0.0
    %1247 = vmatprep.subr.mxu0 0.0
    %1248 = vmatpush1.xpose.msra.mxu0 0.0
    %1249 = vmatprep.subr.mxu0 0.0
    %1250 = vmatpush1.xpose.msra.mxu0 0.0
    %1251 = vmatprep.subr.mxu0 0.0
    %1252 = vmatpush1.xpose.msra.mxu0 0.0
    %1253 = vmatprep.subr.mxu0 0.0
    %1254 = vmatpush1.xpose.msra.mxu0 0.0
    %1255 = vmatprep.subr.mxu0 0.0
    %1256 = vmatpush1.xpose.msra.mxu0 0.0
    %1257 = vmatprep.subr.mxu0 0.0
    %1258 = vmatpush1.xpose.msra.mxu0 0.0
    %1259 = vmatprep.subr.mxu0 0.0
    %1260 = vmatpush1.xpose.msra.mxu0 0.0
    %1261 = vmatprep.subr.mxu0 0.0
    %1262 = vmatpush1.xpose.msra.mxu0 0.0
    %1263 = vmatprep.subr.mxu0 0.0
    %1264 = vmatpush1.xpose.msra.mxu0 0.0
    %1265 = vmatprep.subr.mxu0 0.0
    %1266 = vmatpush1.xpose.msra.mxu0 0.0
    %1267 = vmatprep.subr.mxu0 0.0
    %1268 = vmatpush1.xpose.msra.mxu0 0.0
    %1269 = vmatprep.subr.mxu0 0.0
    %1270 = vmatpush1.xpose.msra.mxu0 0.0
    %1271 = vmatprep.subr.mxu0 0.0
    %1272 = vmatpush1.xpose.msra.mxu0 0.0
    %1273 = vmatprep.subr.mxu0 0.0
    %1274 = vmatpush1.xpose.msra.mxu0 0.0
    %1275 = vmatprep.subr.mxu0 0.0
    %1276 = vmatpush1.xpose.msra.mxu0 0.0
    %1277 = vmatprep.subr.mxu0 0.0
    %1278 = vmatpush1.xpose.msra.mxu0 0.0
    %1279 = vmatprep.subr.mxu0 0.0
    %1280 = vmatpush1.xpose.msra.mxu0 0.0
    %1281 = vmatprep.subr.mxu0 0.0
    %1282 = vmatpush1.xpose.msra.mxu0 0.0
    %1283 = vmatprep.subr.mxu0 0.0
    %1284 = vmatpush1.xpose.msra.mxu0 0.0
    %1285 = vmatprep.subr.mxu0 0.0
    %1286 = vmatpush1.xpose.msra.mxu0 0.0
    %1287 = vmatprep.subr.mxu0 0.0
    %1288 = vmatpush1.xpose.msra.mxu0 0.0
    %v1289 = vand.u32 %v31, 4294901760
    %v1290 = vsub.f32 %v31, %v1289
    %v1291 = vand.u32 %v1290, 4294901760
    %1292 = vmatprep.mubr.f32.mxu0 %v1291
    %v1293 = vand.u32 %v23, 4294901760
    %v1294 = vsub.f32 %v23, %v1293
    %v1295 = vand.u32 %v1294, 4294901760
    %1296 = vmatmul.mubr.f32.gmra.mrb[0].mxu0 %v1295
    %v1297 = vpop.f32.mrb[0].mxu0
    %v1298 = vadd.f32 %v1220, %v1297
    %v1299 = vpop.f32.mrb[0].mxu0
    %1300 = vdwg.mxu0
    %v1301 = vand.u32 %v31, 4294901760
    %v1302 = vsub.f32 %v31, %v1301
    %v1303 = vand.u32 %v1302, 4294901760
    %1304 = vmatprep.subr.mxu0 %v1303
    %v1305 = vand.u32 %v23, 4294901760
    %v1306 = vsub.f32 %v23, %v1305
    %v1307 = vand.u32 %v1306, 4294901760
    %1308 = vmatpush1.xpose.msra.mxu0 %v1307
    %1309 = vmatprep.subr.mxu0 0.0
    %1310 = vmatpush1.xpose.msra.mxu0 0.0
    %1311 = vmatprep.subr.mxu0 0.0
    %1312 = vmatpush1.xpose.msra.mxu0 0.0
    %1313 = vmatprep.subr.mxu0 0.0
    %1314 = vmatpush1.xpose.msra.mxu0 0.0
    %1315 = vmatprep.subr.mxu0 0.0
    %1316 = vmatpush1.xpose.msra.mxu0 0.0
    %1317 = vmatprep.subr.mxu0 0.0
    %1318 = vmatpush1.xpose.msra.mxu0 0.0
    %1319 = vmatprep.subr.mxu0 0.0
    %1320 = vmatpush1.xpose.msra.mxu0 0.0
    %1321 = vmatprep.subr.mxu0 0.0
    %1322 = vmatpush1.xpose.msra.mxu0 0.0
    %1323 = vmatprep.subr.mxu0 0.0
    %1324 = vmatpush1.xpose.msra.mxu0 0.0
    %1325 = vmatprep.subr.mxu0 0.0
    %1326 = vmatpush1.xpose.msra.mxu0 0.0
    %1327 = vmatprep.subr.mxu0 0.0
    %1328 = vmatpush1.xpose.msra.mxu0 0.0
    %1329 = vmatprep.subr.mxu0 0.0
    %1330 = vmatpush1.xpose.msra.mxu0 0.0
    %1331 = vmatprep.subr.mxu0 0.0
    %1332 = vmatpush1.xpose.msra.mxu0 0.0
    %1333 = vmatprep.subr.mxu0 0.0
    %1334 = vmatpush1.xpose.msra.mxu0 0.0
    %1335 = vmatprep.subr.mxu0 0.0
    %1336 = vmatpush1.xpose.msra.mxu0 0.0
    %1337 = vmatprep.subr.mxu0 0.0
    %1338 = vmatpush1.xpose.msra.mxu0 0.0
    %1339 = vmatprep.subr.mxu0 0.0
    %1340 = vmatpush1.xpose.msra.mxu0 0.0
    %1341 = vmatprep.subr.mxu0 0.0
    %1342 = vmatpush1.xpose.msra.mxu0 0.0
    %1343 = vmatprep.subr.mxu0 0.0
    %1344 = vmatpush1.xpose.msra.mxu0 0.0
    %1345 = vmatprep.subr.mxu0 0.0
    %1346 = vmatpush1.xpose.msra.mxu0 0.0
    %1347 = vmatprep.subr.mxu0 0.0
    %1348 = vmatpush1.xpose.msra.mxu0 0.0
    %1349 = vmatprep.subr.mxu0 0.0
    %1350 = vmatpush1.xpose.msra.mxu0 0.0
    %1351 = vmatprep.subr.mxu0 0.0
    %1352 = vmatpush1.xpose.msra.mxu0 0.0
    %1353 = vmatprep.subr.mxu0 0.0
    %1354 = vmatpush1.xpose.msra.mxu0 0.0
    %1355 = vmatprep.subr.mxu0 0.0
    %1356 = vmatpush1.xpose.msra.mxu0 0.0
    %1357 = vmatprep.subr.mxu0 0.0
    %1358 = vmatpush1.xpose.msra.mxu0 0.0
    %1359 = vmatprep.subr.mxu0 0.0
    %1360 = vmatpush1.xpose.msra.mxu0 0.0
    %1361 = vmatprep.subr.mxu0 0.0
    %1362 = vmatpush1.xpose.msra.mxu0 0.0
    %1363 = vmatprep.subr.mxu0 0.0
    %1364 = vmatpush1.xpose.msra.mxu0 0.0
    %1365 = vmatprep.subr.mxu0 0.0
    %1366 = vmatpush1.xpose.msra.mxu0 0.0
    %1367 = vmatprep.subr.mxu0 0.0
    %1368 = vmatpush1.xpose.msra.mxu0 0.0
    %1369 = vmatprep.subr.mxu0 0.0
    %1370 = vmatpush1.xpose.msra.mxu0 0.0
    %v1371 = vand.u32 %v31, 4294901760
    %1372 = vmatprep.mubr.f32.mxu0 %v1371
    %v1373 = vand.u32 %v23, 4294901760
    %1374 = vmatmul.mubr.f32.gmra.mrb[0].mxu0 %v1373
    %v1375 = vpop.f32.mrb[0].mxu0
    %v1376 = vadd.f32 %v1298, %v1375
    %v1377 = vpop.f32.mrb[0].mxu0
    %1378 = vdwg.mxu0
    %v1379 = vand.u32 %v31, 4294901760
    %1380 = vmatprep.subr.mxu0 %v1379
    %v1381 = vand.u32 %v23, 4294901760
    %1382 = vmatpush1.xpose.msra.mxu0 %v1381
    %1383 = vmatprep.subr.mxu0 0.0
    %1384 = vmatpush1.xpose.msra.mxu0 0.0
    %1385 = vmatprep.subr.mxu0 0.0
    %1386 = vmatpush1.xpose.msra.mxu0 0.0
    %1387 = vmatprep.subr.mxu0 0.0
    %1388 = vmatpush1.xpose.msra.mxu0 0.0
    %1389 = vmatprep.subr.mxu0 0.0
    %1390 = vmatpush1.xpose.msra.mxu0 0.0
    %1391 = vmatprep.subr.mxu0 0.0
    %1392 = vmatpush1.xpose.msra.mxu0 0.0
    %1393 = vmatprep.subr.mxu0 0.0
    %1394 = vmatpush1.xpose.msra.mxu0 0.0
    %1395 = vmatprep.subr.mxu0 0.0
    %1396 = vmatpush1.xpose.msra.mxu0 0.0
    %1397 = vmatprep.subr.mxu0 0.0
    %1398 = vmatpush1.xpose.msra.mxu0 0.0
    %1399 = vmatprep.subr.mxu0 0.0
    %1400 = vmatpush1.xpose.msra.mxu0 0.0
    %1401 = vmatprep.subr.mxu0 0.0
    %1402 = vmatpush1.xpose.msra.mxu0 0.0
    %1403 = vmatprep.subr.mxu0 0.0
    %1404 = vmatpush1.xpose.msra.mxu0 0.0
    %1405 = vmatprep.subr.mxu0 0.0
    %1406 = vmatpush1.xpose.msra.mxu0 0.0
    %1407 = vmatprep.subr.mxu0 0.0
    %1408 = vmatpush1.xpose.msra.mxu0 0.0
    %1409 = vmatprep.subr.mxu0 0.0
    %1410 = vmatpush1.xpose.msra.mxu0 0.0
    %1411 = vmatprep.subr.mxu0 0.0
    %1412 = vmatpush1.xpose.msra.mxu0 0.0
    %1413 = vmatprep.subr.mxu0 0.0
    %1414 = vmatpush1.xpose.msra.mxu0 0.0
    %1415 = vmatprep.subr.mxu0 0.0
    %1416 = vmatpush1.xpose.msra.mxu0 0.0
    %1417 = vmatprep.subr.mxu0 0.0
    %1418 = vmatpush1.xpose.msra.mxu0 0.0
    %1419 = vmatprep.subr.mxu0 0.0
    %1420 = vmatpush1.xpose.msra.mxu0 0.0
    %1421 = vmatprep.subr.mxu0 0.0
    %1422 = vmatpush1.xpose.msra.mxu0 0.0
    %1423 = vmatprep.subr.mxu0 0.0
    %1424 = vmatpush1.xpose.msra.mxu0 0.0
    %1425 = vmatprep.subr.mxu0 0.0
    %1426 = vmatpush1.xpose.msra.mxu0 0.0
    %1427 = vmatprep.subr.mxu0 0.0
    %1428 = vmatpush1.xpose.msra.mxu0 0.0
    %1429 = vmatprep.subr.mxu0 0.0
    %1430 = vmatpush1.xpose.msra.mxu0 0.0
    %1431 = vmatprep.subr.mxu0 0.0
    %1432 = vmatpush1.xpose.msra.mxu0 0.0
    %1433 = vmatprep.subr.mxu0 0.0
    %1434 = vmatpush1.xpose.msra.mxu0 0.0
    %1435 = vmatprep.subr.mxu0 0.0
    %1436 = vmatpush1.xpose.msra.mxu0 0.0
    %1437 = vmatprep.subr.mxu0 0.0
    %1438 = vmatpush1.xpose.msra.mxu0 0.0
    %1439 = vmatprep.subr.mxu0 0.0
    %1440 = vmatpush1.xpose.msra.mxu0 0.0
    %1441 = vmatprep.subr.mxu0 0.0
    %1442 = vmatpush1.xpose.msra.mxu0 0.0
    %1443 = vmatprep.subr.mxu0 0.0
    %1444 = vmatpush1.xpose.msra.mxu0 0.0
    %v1445 = vand.u32 %v31, 4294901760
    %1446 = vmatprep.mubr.f32.mxu0 %v1445
    %v1447 = vand.u32 %v23, 4294901760
    %1448 = vmatmul.mubr.f32.gmra.mrb[0].mxu0 %v1447
    %v1449 = vpop.f32.mrb[0].mxu0
    %v1450 = vadd.f32 %v1376, %v1449
    %v1451 = vpop.f32.mrb[0].mxu0
    %1452 = vdwg.mxu0
    %v1453 = vand.u32 %v32, 4294901760
    %1454 = vmatprep.subr.mxu0 %v1453
    %v1455 = vand.u32 %v24, 4294901760
    %1456 = vmatpush1.xpose.msra.mxu0 %v1455
    %1457 = vmatprep.subr.mxu0 0.0
    %1458 = vmatpush1.xpose.msra.mxu0 0.0
    %1459 = vmatprep.subr.mxu0 0.0
    %1460 = vmatpush1.xpose.msra.mxu0 0.0
    %1461 = vmatprep.subr.mxu0 0.0
    %1462 = vmatpush1.xpose.msra.mxu0 0.0
    %1463 = vmatprep.subr.mxu0 0.0
    %1464 = vmatpush1.xpose.msra.mxu0 0.0
    %1465 = vmatprep.subr.mxu0 0.0
    %1466 = vmatpush1.xpose.msra.mxu0 0.0
    %1467 = vmatprep.subr.mxu0 0.0
    %1468 = vmatpush1.xpose.msra.mxu0 0.0
    %1469 = vmatprep.subr.mxu0 0.0
    %1470 = vmatpush1.xpose.msra.mxu0 0.0
    %1471 = vmatprep.subr.mxu0 0.0
    %1472 = vmatpush1.xpose.msra.mxu0 0.0
    %1473 = vmatprep.subr.mxu0 0.0
    %1474 = vmatpush1.xpose.msra.mxu0 0.0
    %1475 = vmatprep.subr.mxu0 0.0
    %1476 = vmatpush1.xpose.msra.mxu0 0.0
    %1477 = vmatprep.subr.mxu0 0.0
    %1478 = vmatpush1.xpose.msra.mxu0 0.0
    %1479 = vmatprep.subr.mxu0 0.0
    %1480 = vmatpush1.xpose.msra.mxu0 0.0
    %1481 = vmatprep.subr.mxu0 0.0
    %1482 = vmatpush1.xpose.msra.mxu0 0.0
    %1483 = vmatprep.subr.mxu0 0.0
    %1484 = vmatpush1.xpose.msra.mxu0 0.0
    %1485 = vmatprep.subr.mxu0 0.0
    %1486 = vmatpush1.xpose.msra.mxu0 0.0
    %1487 = vmatprep.subr.mxu0 0.0
    %1488 = vmatpush1.xpose.msra.mxu0 0.0
    %1489 = vmatprep.subr.mxu0 0.0
    %1490 = vmatpush1.xpose.msra.mxu0 0.0
    %1491 = vmatprep.subr.mxu0 0.0
    %1492 = vmatpush1.xpose.msra.mxu0 0.0
    %1493 = vmatprep.subr.mxu0 0.0
    %1494 = vmatpush1.xpose.msra.mxu0 0.0
    %1495 = vmatprep.subr.mxu0 0.0
    %1496 = vmatpush1.xpose.msra.mxu0 0.0
    %1497 = vmatprep.subr.mxu0 0.0
    %1498 = vmatpush1.xpose.msra.mxu0 0.0
    %1499 = vmatprep.subr.mxu0 0.0
    %1500 = vmatpush1.xpose.msra.mxu0 0.0
    %1501 = vmatprep.subr.mxu0 0.0
    %1502 = vmatpush1.xpose.msra.mxu0 0.0
    %1503 = vmatprep.subr.mxu0 0.0
    %1504 = vmatpush1.xpose.msra.mxu0 0.0
    %1505 = vmatprep.subr.mxu0 0.0
    %1506 = vmatpush1.xpose.msra.mxu0 0.0
    %1507 = vmatprep.subr.mxu0 0.0
    %1508 = vmatpush1.xpose.msra.mxu0 0.0
    %1509 = vmatprep.subr.mxu0 0.0
    %1510 = vmatpush1.xpose.msra.mxu0 0.0
    %1511 = vmatprep.subr.mxu0 0.0
    %1512 = vmatpush1.xpose.msra.mxu0 0.0
    %1513 = vmatprep.subr.mxu0 0.0
    %1514 = vmatpush1.xpose.msra.mxu0 0.0
    %1515 = vmatprep.subr.mxu0 0.0
    %1516 = vmatpush1.xpose.msra.mxu0 0.0
    %1517 = vmatprep.subr.mxu0 0.0
    %1518 = vmatpush1.xpose.msra.mxu0 0.0
    %v1519 = vand.u32 %v32, 4294901760
    %v1520 = vsub.f32 %v32, %v1519
    %v1521 = vand.u32 %v1520, 4294901760
    %v1522 = vsub.f32 %v1520, %v1521
    %v1523 = vand.u32 %v1522, 4294901760
    %1524 = vmatprep.mubr.f32.mxu0 %v1523
    %v1525 = vand.u32 %v24, 4294901760
    %v1526 = vsub.f32 %v24, %v1525
    %v1527 = vand.u32 %v1526, 4294901760
    %v1528 = vsub.f32 %v1526, %v1527
    %v1529 = vand.u32 %v1528, 4294901760
    %1530 = vmatmul.mubr.f32.gmra.mrb[0].mxu0 %v1529
    %v1531 = vpop.f32.mrb[0].mxu0
    %v1532 = vadd.f32 %v1450, %v1531
    %v1533 = vpop.f32.mrb[0].mxu0
    %1534 = vdwg.mxu0
    %v1535 = vand.u32 %v32, 4294901760
    %v1536 = vsub.f32 %v32, %v1535
    %v1537 = vand.u32 %v1536, 4294901760
    %v1538 = vsub.f32 %v1536, %v1537
    %v1539 = vand.u32 %v1538, 4294901760
    %1540 = vmatprep.subr.mxu0 %v1539
    %v1541 = vand.u32 %v24, 4294901760
    %v1542 = vsub.f32 %v24, %v1541
    %v1543 = vand.u32 %v1542, 4294901760
    %v1544 = vsub.f32 %v1542, %v1543
    %v1545 = vand.u32 %v1544, 4294901760
    %1546 = vmatpush1.xpose.msra.mxu0 %v1545
    %1547 = vmatprep.subr.mxu0 0.0
    %1548 = vmatpush1.xpose.msra.mxu0 0.0
    %1549 = vmatprep.subr.mxu0 0.0
    %1550 = vmatpush1.xpose.msra.mxu0 0.0
    %1551 = vmatprep.subr.mxu0 0.0
    %1552 = vmatpush1.xpose.msra.mxu0 0.0
    %1553 = vmatprep.subr.mxu0 0.0
    %1554 = vmatpush1.xpose.msra.mxu0 0.0
    %1555 = vmatprep.subr.mxu0 0.0
    %1556 = vmatpush1.xpose.msra.mxu0 0.0
    %1557 = vmatprep.subr.mxu0 0.0
    %1558 = vmatpush1.xpose.msra.mxu0 0.0
    %1559 = vmatprep.subr.mxu0 0.0
    %1560 = vmatpush1.xpose.msra.mxu0 0.0
    %1561 = vmatprep.subr.mxu0 0.0
    %1562 = vmatpush1.xpose.msra.mxu0 0.0
    %1563 = vmatprep.subr.mxu0 0.0
    %1564 = vmatpush1.xpose.msra.mxu0 0.0
    %1565 = vmatprep.subr.mxu0 0.0
    %1566 = vmatpush1.xpose.msra.mxu0 0.0
    %1567 = vmatprep.subr.mxu0 0.0
    %1568 = vmatpush1.xpose.msra.mxu0 0.0
    %1569 = vmatprep.subr.mxu0 0.0
    %1570 = vmatpush1.xpose.msra.mxu0 0.0
    %1571 = vmatprep.subr.mxu0 0.0
    %1572 = vmatpush1.xpose.msra.mxu0 0.0
    %1573 = vmatprep.subr.mxu0 0.0
    %1574 = vmatpush1.xpose.msra.mxu0 0.0
    %1575 = vmatprep.subr.mxu0 0.0
    %1576 = vmatpush1.xpose.msra.mxu0 0.0
    %1577 = vmatprep.subr.mxu0 0.0
    %1578 = vmatpush1.xpose.msra.mxu0 0.0
    %1579 = vmatprep.subr.mxu0 0.0
    %1580 = vmatpush1.xpose.msra.mxu0 0.0
    %1581 = vmatprep.subr.mxu0 0.0
    %1582 = vmatpush1.xpose.msra.mxu0 0.0
    %1583 = vmatprep.subr.mxu0 0.0
    %1584 = vmatpush1.xpose.msra.mxu0 0.0
    %1585 = vmatprep.subr.mxu0 0.0
    %1586 = vmatpush1.xpose.msra.mxu0 0.0
    %1587 = vmatprep.subr.mxu0 0.0
    %1588 = vmatpush1.xpose.msra.mxu0 0.0
    %1589 = vmatprep.subr.mxu0 0.0
    %1590 = vmatpush1.xpose.msra.mxu0 0.0
    %1591 = vmatprep.subr.mxu0 0.0
    %1592 = vmatpush1.xpose.msra.mxu0 0.0
    %1593 = vmatprep.subr.mxu0 0.0
    %1594 = vmatpush1.xpose.msra.mxu0 0.0
    %1595 = vmatprep.subr.mxu0 0.0
    %1596 = vmatpush1.xpose.msra.mxu0 0.0
    %1597 = vmatprep.subr.mxu0 0.0
    %1598 = vmatpush1.xpose.msra.mxu0 0.0
    %1599 = vmatprep.subr.mxu0 0.0
    %1600 = vmatpush1.xpose.msra.mxu0 0.0
    %1601 = vmatprep.subr.mxu0 0.0
    %1602 = vmatpush1.xpose.msra.mxu0 0.0
    %1603 = vmatprep.subr.mxu0 0.0
    %1604 = vmatpush1.xpose.msra.mxu0 0.0
    %1605 = vmatprep.subr.mxu0 0.0
    %1606 = vmatpush1.xpose.msra.mxu0 0.0
    %1607 = vmatprep.subr.mxu0 0.0
    %1608 = vmatpush1.xpose.msra.mxu0 0.0
    %v1609 = vand.u32 %v32, 4294901760
    %1610 = vmatprep.mubr.f32.mxu0 %v1609
    %v1611 = vand.u32 %v24, 4294901760
    %1612 = vmatmul.mubr.f32.gmra.mrb[0].mxu0 %v1611
    %v1613 = vpop.f32.mrb[0].mxu0
    %v1614 = vadd.f32 %v1532, %v1613
    %v1615 = vpop.f32.mrb[0].mxu0
    %1616 = vdwg.mxu0
    %v1617 = vand.u32 %v32, 4294901760
    %v1618 = vsub.f32 %v32, %v1617
    %1619 = vmatprep.subr.mxu0 %v1618
    %v1620 = vand.u32 %v24, 4294901760
    %v1621 = vsub.f32 %v24, %v1620
    %1622 = vmatpush1.xpose.msra.mxu0 %v1621
    %1623 = vmatprep.subr.mxu0 0.0
    %1624 = vmatpush1.xpose.msra.mxu0 0.0
    %1625 = vmatprep.subr.mxu0 0.0
    %1626 = vmatpush1.xpose.msra.mxu0 0.0
    %1627 = vmatprep.subr.mxu0 0.0
    %1628 = vmatpush1.xpose.msra.mxu0 0.0
    %1629 = vmatprep.subr.mxu0 0.0
    %1630 = vmatpush1.xpose.msra.mxu0 0.0
    %1631 = vmatprep.subr.mxu0 0.0
    %1632 = vmatpush1.xpose.msra.mxu0 0.0
    %1633 = vmatprep.subr.mxu0 0.0
    %1634 = vmatpush1.xpose.msra.mxu0 0.0
    %1635 = vmatprep.subr.mxu0 0.0
    %1636 = vmatpush1.xpose.msra.mxu0 0.0
    %1637 = vmatprep.subr.mxu0 0.0
    %1638 = vmatpush1.xpose.msra.mxu0 0.0
    %1639 = vmatprep.subr.mxu0 0.0
    %1640 = vmatpush1.xpose.msra.mxu0 0.0
    %1641 = vmatprep.subr.mxu0 0.0
    %1642 = vmatpush1.xpose.msra.mxu0 0.0
    %1643 = vmatprep.subr.mxu0 0.0
    %1644 = vmatpush1.xpose.msra.mxu0 0.0
    %1645 = vmatprep.subr.mxu0 0.0
    %1646 = vmatpush1.xpose.msra.mxu0 0.0
    %1647 = vmatprep.subr.mxu0 0.0
    %1648 = vmatpush1.xpose.msra.mxu0 0.0
    %1649 = vmatprep.subr.mxu0 0.0
    %1650 = vmatpush1.xpose.msra.mxu0 0.0
    %1651 = vmatprep.subr.mxu0 0.0
    %1652 = vmatpush1.xpose.msra.mxu0 0.0
    %1653 = vmatprep.subr.mxu0 0.0
    %1654 = vmatpush1.xpose.msra.mxu0 0.0
    %1655 = vmatprep.subr.mxu0 0.0
    %1656 = vmatpush1.xpose.msra.mxu0 0.0
    %1657 = vmatprep.subr.mxu0 0.0
    %1658 = vmatpush1.xpose.msra.mxu0 0.0
    %1659 = vmatprep.subr.mxu0 0.0
    %1660 = vmatpush1.xpose.msra.mxu0 0.0
    %1661 = vmatprep.subr.mxu0 0.0
    %1662 = vmatpush1.xpose.msra.mxu0 0.0
    %1663 = vmatprep.subr.mxu0 0.0
    %1664 = vmatpush1.xpose.msra.mxu0 0.0
    %1665 = vmatprep.subr.mxu0 0.0
    %1666 = vmatpush1.xpose.msra.mxu0 0.0
    %1667 = vmatprep.subr.mxu0 0.0
    %1668 = vmatpush1.xpose.msra.mxu0 0.0
    %1669 = vmatprep.subr.mxu0 0.0
    %1670 = vmatpush1.xpose.msra.mxu0 0.0
    %1671 = vmatprep.subr.mxu0 0.0
    %1672 = vmatpush1.xpose.msra.mxu0 0.0
    %1673 = vmatprep.subr.mxu0 0.0
    %1674 = vmatpush1.xpose.msra.mxu0 0.0
    %1675 = vmatprep.subr.mxu0 0.0
    %1676 = vmatpush1.xpose.msra.mxu0 0.0
    %1677 = vmatprep.subr.mxu0 0.0
    %1678 = vmatpush1.xpose.msra.mxu0 0.0
    %1679 = vmatprep.subr.mxu0 0.0
    %1680 = vmatpush1.xpose.msra.mxu0 0.0
    %1681 = vmatprep.subr.mxu0 0.0
    %1682 = vmatpush1.xpose.msra.mxu0 0.0
    %1683 = vmatprep.subr.mxu0 0.0
    %1684 = vmatpush1.xpose.msra.mxu0 0.0
    %v1685 = vand.u32 %v32, 4294901760
    %v1686 = vsub.f32 %v32, %v1685
    %1687 = vmatprep.mubr.f32.mxu0 %v1686
    %v1688 = vand.u32 %v24, 4294901760
    %v1689 = vsub.f32 %v24, %v1688
    %1690 = vmatmul.mubr.f32.gmra.mrb[0].mxu0 %v1689
    %v1691 = vpop.f32.mrb[0].mxu0
    %v1692 = vadd.f32 %v1614, %v1691
    %v1693 = vpop.f32.mrb[0].mxu0
    %1694 = vdwg.mxu0
    %v1695 = vand.u32 %v32, 4294901760
    %1696 = vmatprep.subr.mxu0 %v1695
    %v1697 = vand.u32 %v24, 4294901760
    %1698 = vmatpush1.xpose.msra.mxu0 %v1697
    %1699 = vmatprep.subr.mxu0 0.0
    %1700 = vmatpush1.xpose.msra.mxu0 0.0
    %1701 = vmatprep.subr.mxu0 0.0
    %1702 = vmatpush1.xpose.msra.mxu0 0.0
    %1703 = vmatprep.subr.mxu0 0.0
    %1704 = vmatpush1.xpose.msra.mxu0 0.0
    %1705 = vmatprep.subr.mxu0 0.0
    %1706 = vmatpush1.xpose.msra.mxu0 0.0
    %1707 = vmatprep.subr.mxu0 0.0
    %1708 = vmatpush1.xpose.msra.mxu0 0.0
    %1709 = vmatprep.subr.mxu0 0.0
    %1710 = vmatpush1.xpose.msra.mxu0 0.0
    %1711 = vmatprep.subr.mxu0 0.0
    %1712 = vmatpush1.xpose.msra.mxu0 0.0
    %1713 = vmatprep.subr.mxu0 0.0
    %1714 = vmatpush1.xpose.msra.mxu0 0.0
    %1715 = vmatprep.subr.mxu0 0.0
    %1716 = vmatpush1.xpose.msra.mxu0 0.0
    %1717 = vmatprep.subr.mxu0 0.0
    %1718 = vmatpush1.xpose.msra.mxu0 0.0
    %1719 = vmatprep.subr.mxu0 0.0
    %1720 = vmatpush1.xpose.msra.mxu0 0.0
    %1721 = vmatprep.subr.mxu0 0.0
    %1722 = vmatpush1.xpose.msra.mxu0 0.0
    %1723 = vmatprep.subr.mxu0 0.0
    %1724 = vmatpush1.xpose.msra.mxu0 0.0
    %1725 = vmatprep.subr.mxu0 0.0
    %1726 = vmatpush1.xpose.msra.mxu0 0.0
    %1727 = vmatprep.subr.mxu0 0.0
    %1728 = vmatpush1.xpose.msra.mxu0 0.0
    %1729 = vmatprep.subr.mxu0 0.0
    %1730 = vmatpush1.xpose.msra.mxu0 0.0
    %1731 = vmatprep.subr.mxu0 0.0
    %1732 = vmatpush1.xpose.msra.mxu0 0.0
    %1733 = vmatprep.subr.mxu0 0.0
    %1734 = vmatpush1.xpose.msra.mxu0 0.0
    %1735 = vmatprep.subr.mxu0 0.0
    %1736 = vmatpush1.xpose.msra.mxu0 0.0
    %1737 = vmatprep.subr.mxu0 0.0
    %1738 = vmatpush1.xpose.msra.mxu0 0.0
    %1739 = vmatprep.subr.mxu0 0.0
    %1740 = vmatpush1.xpose.msra.mxu0 0.0
    %1741 = vmatprep.subr.mxu0 0.0
    %1742 = vmatpush1.xpose.msra.mxu0 0.0
    %1743 = vmatprep.subr.mxu0 0.0
    %1744 = vmatpush1.xpose.msra.mxu0 0.0
    %1745 = vmatprep.subr.mxu0 0.0
    %1746 = vmatpush1.xpose.msra.mxu0 0.0
    %1747 = vmatprep.subr.mxu0 0.0
    %1748 = vmatpush1.xpose.msra.mxu0 0.0
    %1749 = vmatprep.subr.mxu0 0.0
    %1750 = vmatpush1.xpose.msra.mxu0 0.0
    %1751 = vmatprep.subr.mxu0 0.0
    %1752 = vmatpush1.xpose.msra.mxu0 0.0
    %1753 = vmatprep.subr.mxu0 0.0
    %1754 = vmatpush1.xpose.msra.mxu0 0.0
    %1755 = vmatprep.subr.mxu0 0.0
    %1756 = vmatpush1.xpose.msra.mxu0 0.0
    %1757 = vmatprep.subr.mxu0 0.0
    %1758 = vmatpush1.xpose.msra.mxu0 0.0
    %1759 = vmatprep.subr.mxu0 0.0
    %1760 = vmatpush1.xpose.msra.mxu0 0.0
    %v1761 = vand.u32 %v32, 4294901760
    %v1762 = vsub.f32 %v32, %v1761
    %v1763 = vand.u32 %v1762, 4294901760
    %1764 = vmatprep.mubr.f32.mxu0 %v1763
    %v1765 = vand.u32 %v24, 4294901760
    %v1766 = vsub.f32 %v24, %v1765
    %v1767 = vand.u32 %v1766, 4294901760
    %1768 = vmatmul.mubr.f32.gmra.mrb[0].mxu0 %v1767
    %v1769 = vpop.f32.mrb[0].mxu0
    %v1770 = vadd.f32 %v1692, %v1769
    %v1771 = vpop.f32.mrb[0].mxu0
    %1772 = vdwg.mxu0
    %v1773 = vand.u32 %v32, 4294901760
    %v1774 = vsub.f32 %v32, %v1773
    %v1775 = vand.u32 %v1774, 4294901760
    %1776 = vmatprep.subr.mxu0 %v1775
    %v1777 = vand.u32 %v24, 4294901760
    %v1778 = vsub.f32 %v24, %v1777
    %v1779 = vand.u32 %v1778, 4294901760
    %1780 = vmatpush1.xpose.msra.mxu0 %v1779
    %1781 = vmatprep.subr.mxu0 0.0
    %1782 = vmatpush1.xpose.msra.mxu0 0.0
    %1783 = vmatprep.subr.mxu0 0.0
    %1784 = vmatpush1.xpose.msra.mxu0 0.0
    %1785 = vmatprep.subr.mxu0 0.0
    %1786 = vmatpush1.xpose.msra.mxu0 0.0
    %1787 = vmatprep.subr.mxu0 0.0
    %1788 = vmatpush1.xpose.msra.mxu0 0.0
    %1789 = vmatprep.subr.mxu0 0.0
    %1790 = vmatpush1.xpose.msra.mxu0 0.0
    %1791 = vmatprep.subr.mxu0 0.0
    %1792 = vmatpush1.xpose.msra.mxu0 0.0
    %1793 = vmatprep.subr.mxu0 0.0
    %1794 = vmatpush1.xpose.msra.mxu0 0.0
    %1795 = vmatprep.subr.mxu0 0.0
    %1796 = vmatpush1.xpose.msra.mxu0 0.0
    %1797 = vmatprep.subr.mxu0 0.0
    %1798 = vmatpush1.xpose.msra.mxu0 0.0
    %1799 = vmatprep.subr.mxu0 0.0
    %1800 = vmatpush1.xpose.msra.mxu0 0.0
    %1801 = vmatprep.subr.mxu0 0.0
    %1802 = vmatpush1.xpose.msra.mxu0 0.0
    %1803 = vmatprep.subr.mxu0 0.0
    %1804 = vmatpush1.xpose.msra.mxu0 0.0
    %1805 = vmatprep.subr.mxu0 0.0
    %1806 = vmatpush1.xpose.msra.mxu0 0.0
    %1807 = vmatprep.subr.mxu0 0.0
    %1808 = vmatpush1.xpose.msra.mxu0 0.0
    %1809 = vmatprep.subr.mxu0 0.0
    %1810 = vmatpush1.xpose.msra.mxu0 0.0
    %1811 = vmatprep.subr.mxu0 0.0
    %1812 = vmatpush1.xpose.msra.mxu0 0.0
    %1813 = vmatprep.subr.mxu0 0.0
    %1814 = vmatpush1.xpose.msra.mxu0 0.0
    %1815 = vmatprep.subr.mxu0 0.0
    %1816 = vmatpush1.xpose.msra.mxu0 0.0
    %1817 = vmatprep.subr.mxu0 0.0
    %1818 = vmatpush1.xpose.msra.mxu0 0.0
    %1819 = vmatprep.subr.mxu0 0.0
    %1820 = vmatpush1.xpose.msra.mxu0 0.0
    %1821 = vmatprep.subr.mxu0 0.0
    %1822 = vmatpush1.xpose.msra.mxu0 0.0
    %1823 = vmatprep.subr.mxu0 0.0
    %1824 = vmatpush1.xpose.msra.mxu0 0.0
    %1825 = vmatprep.subr.mxu0 0.0
    %1826 = vmatpush1.xpose.msra.mxu0 0.0
    %1827 = vmatprep.subr.mxu0 0.0
    %1828 = vmatpush1.xpose.msra.mxu0 0.0
    %1829 = vmatprep.subr.mxu0 0.0
    %1830 = vmatpush1.xpose.msra.mxu0 0.0
    %1831 = vmatprep.subr.mxu0 0.0
    %1832 = vmatpush1.xpose.msra.mxu0 0.0
    %1833 = vmatprep.subr.mxu0 0.0
    %1834 = vmatpush1.xpose.msra.mxu0 0.0
    %1835 = vmatprep.subr.mxu0 0.0
    %1836 = vmatpush1.xpose.msra.mxu0 0.0
    %1837 = vmatprep.subr.mxu0 0.0
    %1838 = vmatpush1.xpose.msra.mxu0 0.0
    %1839 = vmatprep.subr.mxu0 0.0
    %1840 = vmatpush1.xpose.msra.mxu0 0.0
    %1841 = vmatprep.subr.mxu0 0.0
    %1842 = vmatpush1.xpose.msra.mxu0 0.0
    %v1843 = vand.u32 %v32, 4294901760
    %1844 = vmatprep.mubr.f32.mxu0 %v1843
    %v1845 = vand.u32 %v24, 4294901760
    %1846 = vmatmul.mubr.f32.gmra.mrb[0].mxu0 %v1845
    %v1847 = vpop.f32.mrb[0].mxu0
    %v1848 = vadd.f32 %v1770, %v1847
    %v1849 = vpop.f32.mrb[0].mxu0
    %1850 = vdwg.mxu0
    %v1851 = vand.u32 %v32, 4294901760
    %1852 = vmatprep.subr.mxu0 %v1851
    %v1853 = vand.u32 %v24, 4294901760
    %1854 = vmatpush1.xpose.msra.mxu0 %v1853
    %1855 = vmatprep.subr.mxu0 0.0
    %1856 = vmatpush1.xpose.msra.mxu0 0.0
    %1857 = vmatprep.subr.mxu0 0.0
    %1858 = vmatpush1.xpose.msra.mxu0 0.0
    %1859 = vmatprep.subr.mxu0 0.0
    %1860 = vmatpush1.xpose.msra.mxu0 0.0
    %1861 = vmatprep.subr.mxu0 0.0
    %1862 = vmatpush1.xpose.msra.mxu0 0.0
    %1863 = vmatprep.subr.mxu0 0.0
    %1864 = vmatpush1.xpose.msra.mxu0 0.0
    %1865 = vmatprep.subr.mxu0 0.0
    %1866 = vmatpush1.xpose.msra.mxu0 0.0
    %1867 = vmatprep.subr.mxu0 0.0
    %1868 = vmatpush1.xpose.msra.mxu0 0.0
    %1869 = vmatprep.subr.mxu0 0.0
    %1870 = vmatpush1.xpose.msra.mxu0 0.0
    %1871 = vmatprep.subr.mxu0 0.0
    %1872 = vmatpush1.xpose.msra.mxu0 0.0
    %1873 = vmatprep.subr.mxu0 0.0
    %1874 = vmatpush1.xpose.msra.mxu0 0.0
    %1875 = vmatprep.subr.mxu0 0.0
    %1876 = vmatpush1.xpose.msra.mxu0 0.0
    %1877 = vmatprep.subr.mxu0 0.0
    %1878 = vmatpush1.xpose.msra.mxu0 0.0
    %1879 = vmatprep.subr.mxu0 0.0
    %1880 = vmatpush1.xpose.msra.mxu0 0.0
    %1881 = vmatprep.subr.mxu0 0.0
    %1882 = vmatpush1.xpose.msra.mxu0 0.0
    %1883 = vmatprep.subr.mxu0 0.0
    %1884 = vmatpush1.xpose.msra.mxu0 0.0
    %1885 = vmatprep.subr.mxu0 0.0
    %1886 = vmatpush1.xpose.msra.mxu0 0.0
    %1887 = vmatprep.subr.mxu0 0.0
    %1888 = vmatpush1.xpose.msra.mxu0 0.0
    %1889 = vmatprep.subr.mxu0 0.0
    %1890 = vmatpush1.xpose.msra.mxu0 0.0
    %1891 = vmatprep.subr.mxu0 0.0
    %1892 = vmatpush1.xpose.msra.mxu0 0.0
    %1893 = vmatprep.subr.mxu0 0.0
    %1894 = vmatpush1.xpose.msra.mxu0 0.0
    %1895 = vmatprep.subr.mxu0 0.0
    %1896 = vmatpush1.xpose.msra.mxu0 0.0
    %1897 = vmatprep.subr.mxu0 0.0
    %1898 = vmatpush1.xpose.msra.mxu0 0.0
    %1899 = vmatprep.subr.mxu0 0.0
    %1900 = vmatpush1.xpose.msra.mxu0 0.0
    %1901 = vmatprep.subr.mxu0 0.0
    %1902 = vmatpush1.xpose.msra.mxu0 0.0
    %1903 = vmatprep.subr.mxu0 0.0
    %1904 = vmatpush1.xpose.msra.mxu0 0.0
    %1905 = vmatprep.subr.mxu0 0.0
    %1906 = vmatpush1.xpose.msra.mxu0 0.0
    %1907 = vmatprep.subr.mxu0 0.0
    %1908 = vmatpush1.xpose.msra.mxu0 0.0
    %1909 = vmatprep.subr.mxu0 0.0
    %1910 = vmatpush1.xpose.msra.mxu0 0.0
    %1911 = vmatprep.subr.mxu0 0.0
    %1912 = vmatpush1.xpose.msra.mxu0 0.0
    %1913 = vmatprep.subr.mxu0 0.0
    %1914 = vmatpush1.xpose.msra.mxu0 0.0
    %1915 = vmatprep.subr.mxu0 0.0
    %1916 = vmatpush1.xpose.msra.mxu0 0.0
    %v1917 = vand.u32 %v32, 4294901760
    %1918 = vmatprep.mubr.f32.mxu0 %v1917
    %v1919 = vand.u32 %v24, 4294901760
    %1920 = vmatmul.mubr.f32.gmra.mrb[0].mxu0 %v1919
    %v1921 = vpop.f32.mrb[0].mxu0
    %v1922 = vadd.f32 %v1848, %v1921
    %v1923 = vpop.f32.mrb[0].mxu0
    %1924 = vdwg.mxu0
    %v1925 = vlaneseq
    %v1926 = vshrl.u32 %v1925, 7
    %v1927 = vlaneseq
    %v1928 = vand.u32 %v1927, 127
    %vm1929 = vcmp.eq.s32.totalorder %v1926, %v1928
    %v1930 = vsel %vm1929, %v1922, 0.0
    %vm1931 = vcmask 27648
    %v1932 = vsel %vm1931, %v1930, 0.0
    %1933 = vadd.xlane.f32.xlu0 %v1932
    %v1934 = vpop.xlane.xlu0 %1933
    %v1935 = vrsqrt.pop %v1934
    %v1936 = vmul.f32 %v1934, %v1935
    %vm1937 = vcmp.eq.f32.partialorder %v1934, inf
    %v1938 = vsel %vm1937, %v1934, %v1936
    %vm1939 = vcmp.eq.f32.partialorder %v1934, 0.0
    %v1940 = vand.u32 %v1934, 2147483648
    %v1941 = vsel %vm1939, %v1940, %v1938
    %v1942 = vrot.slane %v1932, 4
    %v1943 = vadd.f32 %v1932, %v1942
    %v1944 = vrot.slane %v1943, 2
    %v1945 = vadd.f32 %v1943, %v1944
    %v1946 = vrot.slane %v1945, 1
    %v1947 = vadd.f32 %v1945, %v1946
    %v1948 = vrsqrt.pop %v1947
    %v1949 = vmul.f32 %v1947, %v1948
    %vm1950 = vcmp.eq.f32.partialorder %v1947, inf
    %v1951 = vsel %vm1950, %v1947, %v1949
    %vm1952 = vcmp.eq.f32.partialorder %v1947, 0.0
    %v1953 = vand.u32 %v1947, 2147483648
    %v1954 = vsel %vm1952, %v1953, %v1951
    %v1955 = vmul.f32 %v1941, %v1954
    %v1956 = vmax.f32 %v1955, 1e-08
    %vm1957 = vcmp.gt.s32.totalorder %v1928, %v1926
    %v1958 = vand.u32 2147483647, %v1922
    %v1959 = vsel %vm1957, %v1958, 0.0
    %v1960 = vrcp.pop %v1956
    %v1961 = vmul.f32 %v1959, %v1960
    %v1962 = vsel %vm1931, %v1961, 0.0
    %1963 = vadd.xlane.f32.xlu0 %v1962
    %v1964 = vpop.xlane.xlu0 %1963
    %vm1965 = vcmask 1043456
    %v1966 = vsel %vm1965, %v1964, 0.0
    %v1967 = vrot.slane %v1966, 4
    %v1968 = vadd.f32 %v1966, %v1967
    %v1969 = vrot.slane %v1968, 2
    %v1970 = vadd.f32 %v1968, %v1969
    %v1971 = vrot.slane %v1970, 1
    %v1972 = vadd.f32 %v1970, %v1971
    %v1973 = vadd.f32 %v1972, 0.0
    %v1974 = vld [vmem:[#allocation2 + $0x20] sm:$0xff]
    %v1975 = vld [vmem:[#allocation2 + $0x28] sm:$0xff]
    %v1976 = vld [vmem:[#allocation2 + $0x30] sm:$0xff]
    %v1977 = vld [vmem:[#allocation2 + $0x38] sm:$0xff]
    %v1982 = vcombine.high %v1974, %v1974
    %v1983 = vcombine.high %v1975, %v1975
    %v1984 = vcombine.high %v1976, %v1976
    %v1985 = vcombine.high %v1977, %v1977
    %v1990 = vand.u32 %v1982, 4294901760
    %1991 = vmatprep.subr.mxu0 %v1990
    %v1992 = vand.u32 %v1974, 4294901760
    %1993 = vmatpush1.xpose.msra.mxu0 %v1992
    %1994 = vmatprep.subr.mxu0 0.0
    %1995 = vmatpush1.xpose.msra.mxu0 0.0
    %1996 = vmatprep.subr.mxu0 0.0
    %1997 = vmatpush1.xpose.msra.mxu0 0.0
    %1998 = vmatprep.subr.mxu0 0.0
    %1999 = vmatpush1.xpose.msra.mxu0 0.0
    %2000 = vmatprep.subr.mxu0 0.0
    %2001 = vmatpush1.xpose.msra.mxu0 0.0
    %2002 = vmatprep.subr.mxu0 0.0
    %2003 = vmatpush1.xpose.msra.mxu0 0.0
    %2004 = vmatprep.subr.mxu0 0.0
    %2005 = vmatpush1.xpose.msra.mxu0 0.0
    %2006 = vmatprep.subr.mxu0 0.0
    %2007 = vmatpush1.xpose.msra.mxu0 0.0
    %2008 = vmatprep.subr.mxu0 0.0
    %2009 = vmatpush1.xpose.msra.mxu0 0.0
    %2010 = vmatprep.subr.mxu0 0.0
    %2011 = vmatpush1.xpose.msra.mxu0 0.0
    %2012 = vmatprep.subr.mxu0 0.0
    %2013 = vmatpush1.xpose.msra.mxu0 0.0
    %2014 = vmatprep.subr.mxu0 0.0
    %2015 = vmatpush1.xpose.msra.mxu0 0.0
    %2016 = vmatprep.subr.mxu0 0.0
    %2017 = vmatpush1.xpose.msra.mxu0 0.0
    %2018 = vmatprep.subr.mxu0 0.0
    %2019 = vmatpush1.xpose.msra.mxu0 0.0
    %2020 = vmatprep.subr.mxu0 0.0
    %2021 = vmatpush1.xpose.msra.mxu0 0.0
    %2022 = vmatprep.subr.mxu0 0.0
    %2023 = vmatpush1.xpose.msra.mxu0 0.0
    %2024 = vmatprep.subr.mxu0 0.0
    %2025 = vmatpush1.xpose.msra.mxu0 0.0
    %2026 = vmatprep.subr.mxu0 0.0
    %2027 = vmatpush1.xpose.msra.mxu0 0.0
    %2028 = vmatprep.subr.mxu0 0.0
    %2029 = vmatpush1.xpose.msra.mxu0 0.0
    %2030 = vmatprep.subr.mxu0 0.0
    %2031 = vmatpush1.xpose.msra.mxu0 0.0
    %2032 = vmatprep.subr.mxu0 0.0
    %2033 = vmatpush1.xpose.msra.mxu0 0.0
    %2034 = vmatprep.subr.mxu0 0.0
    %2035 = vmatpush1.xpose.msra.mxu0 0.0
    %2036 = vmatprep.subr.mxu0 0.0
    %2037 = vmatpush1.xpose.msra.mxu0 0.0
    %2038 = vmatprep.subr.mxu0 0.0
    %2039 = vmatpush1.xpose.msra.mxu0 0.0
    %2040 = vmatprep.subr.mxu0 0.0
    %2041 = vmatpush1.xpose.msra.mxu0 0.0
    %2042 = vmatprep.subr.mxu0 0.0
    %2043 = vmatpush1.xpose.msra.mxu0 0.0
    %2044 = vmatprep.subr.mxu0 0.0
    %2045 = vmatpush1.xpose.msra.mxu0 0.0
    %2046 = vmatprep.subr.mxu0 0.0
    %2047 = vmatpush1.xpose.msra.mxu0 0.0
    %2048 = vmatprep.subr.mxu0 0.0
    %2049 = vmatpush1.xpose.msra.mxu0 0.0
    %2050 = vmatprep.subr.mxu0 0.0
    %2051 = vmatpush1.xpose.msra.mxu0 0.0
    %2052 = vmatprep.subr.mxu0 0.0
    %2053 = vmatpush1.xpose.msra.mxu0 0.0
    %2054 = vmatprep.subr.mxu0 0.0
    %2055 = vmatpush1.xpose.msra.mxu0 0.0
    %v2056 = vand.u32 %v1982, 4294901760
    %v2057 = vsub.f32 %v1982, %v2056
    %v2058 = vand.u32 %v2057, 4294901760
    %v2059 = vsub.f32 %v2057, %v2058
    %v2060 = vand.u32 %v2059, 4294901760
    %2061 = vmatprep.mubr.f32.mxu0 %v2060
    %v2062 = vand.u32 %v1974, 4294901760
    %v2063 = vsub.f32 %v1974, %v2062
    %v2064 = vand.u32 %v2063, 4294901760
    %v2065 = vsub.f32 %v2063, %v2064
    %v2066 = vand.u32 %v2065, 4294901760
    %2067 = vmatmul.mubr.f32.gmra.mrb[0].mxu0 %v2066
    %v2068 = vpop.f32.mrb[0].mxu0
    %v2069 = vadd.f32 0.0, %v2068
    %v2070 = vpop.f32.mrb[0].mxu0
    %2071 = vdwg.mxu0
    %v2072 = vand.u32 %v1982, 4294901760
    %v2073 = vsub.f32 %v1982, %v2072
    %v2074 = vand.u32 %v2073, 4294901760
    %v2075 = vsub.f32 %v2073, %v2074
    %v2076 = vand.u32 %v2075, 4294901760
    %2077 = vmatprep.subr.mxu0 %v2076
    %v2078 = vand.u32 %v1974, 4294901760
    %v2079 = vsub.f32 %v1974, %v2078
    %v2080 = vand.u32 %v2079, 4294901760
    %v2081 = vsub.f32 %v2079, %v2080
    %v2082 = vand.u32 %v2081, 4294901760
    %2083 = vmatpush1.xpose.msra.mxu0 %v2082
    %2084 = vmatprep.subr.mxu0 0.0
    %2085 = vmatpush1.xpose.msra.mxu0 0.0
    %2086 = vmatprep.subr.mxu0 0.0
    %2087 = vmatpush1.xpose.msra.mxu0 0.0
    %2088 = vmatprep.subr.mxu0 0.0
    %2089 = vmatpush1.xpose.msra.mxu0 0.0
    %2090 = vmatprep.subr.mxu0 0.0
    %2091 = vmatpush1.xpose.msra.mxu0 0.0
    %2092 = vmatprep.subr.mxu0 0.0
    %2093 = vmatpush1.xpose.msra.mxu0 0.0
    %2094 = vmatprep.subr.mxu0 0.0
    %2095 = vmatpush1.xpose.msra.mxu0 0.0
    %2096 = vmatprep.subr.mxu0 0.0
    %2097 = vmatpush1.xpose.msra.mxu0 0.0
    %2098 = vmatprep.subr.mxu0 0.0
    %2099 = vmatpush1.xpose.msra.mxu0 0.0
    %2100 = vmatprep.subr.mxu0 0.0
    %2101 = vmatpush1.xpose.msra.mxu0 0.0
    %2102 = vmatprep.subr.mxu0 0.0
    %2103 = vmatpush1.xpose.msra.mxu0 0.0
    %2104 = vmatprep.subr.mxu0 0.0
    %2105 = vmatpush1.xpose.msra.mxu0 0.0
    %2106 = vmatprep.subr.mxu0 0.0
    %2107 = vmatpush1.xpose.msra.mxu0 0.0
    %2108 = vmatprep.subr.mxu0 0.0
    %2109 = vmatpush1.xpose.msra.mxu0 0.0
    %2110 = vmatprep.subr.mxu0 0.0
    %2111 = vmatpush1.xpose.msra.mxu0 0.0
    %2112 = vmatprep.subr.mxu0 0.0
    %2113 = vmatpush1.xpose.msra.mxu0 0.0
    %2114 = vmatprep.subr.mxu0 0.0
    %2115 = vmatpush1.xpose.msra.mxu0 0.0
    %2116 = vmatprep.subr.mxu0 0.0
    %2117 = vmatpush1.xpose.msra.mxu0 0.0
    %2118 = vmatprep.subr.mxu0 0.0
    %2119 = vmatpush1.xpose.msra.mxu0 0.0
    %2120 = vmatprep.subr.mxu0 0.0
    %2121 = vmatpush1.xpose.msra.mxu0 0.0
    %2122 = vmatprep.subr.mxu0 0.0
    %2123 = vmatpush1.xpose.msra.mxu0 0.0
    %2124 = vmatprep.subr.mxu0 0.0
    %2125 = vmatpush1.xpose.msra.mxu0 0.0
    %2126 = vmatprep.subr.mxu0 0.0
    %2127 = vmatpush1.xpose.msra.mxu0 0.0
    %2128 = vmatprep.subr.mxu0 0.0
    %2129 = vmatpush1.xpose.msra.mxu0 0.0
    %2130 = vmatprep.subr.mxu0 0.0
    %2131 = vmatpush1.xpose.msra.mxu0 0.0
    %2132 = vmatprep.subr.mxu0 0.0
    %2133 = vmatpush1.xpose.msra.mxu0 0.0
    %2134 = vmatprep.subr.mxu0 0.0
    %2135 = vmatpush1.xpose.msra.mxu0 0.0
    %2136 = vmatprep.subr.mxu0 0.0
    %2137 = vmatpush1.xpose.msra.mxu0 0.0
    %2138 = vmatprep.subr.mxu0 0.0
    %2139 = vmatpush1.xpose.msra.mxu0 0.0
    %2140 = vmatprep.subr.mxu0 0.0
    %2141 = vmatpush1.xpose.msra.mxu0 0.0
    %2142 = vmatprep.subr.mxu0 0.0
    %2143 = vmatpush1.xpose.msra.mxu0 0.0
    %2144 = vmatprep.subr.mxu0 0.0
    %2145 = vmatpush1.xpose.msra.mxu0 0.0
    %v2146 = vand.u32 %v1982, 4294901760
    %2147 = vmatprep.mubr.f32.mxu0 %v2146
    %v2148 = vand.u32 %v1974, 4294901760
    %2149 = vmatmul.mubr.f32.gmra.mrb[0].mxu0 %v2148
    %v2150 = vpop.f32.mrb[0].mxu0
    %v2151 = vadd.f32 %v2069, %v2150
    %v2152 = vpop.f32.mrb[0].mxu0
    %2153 = vdwg.mxu0
    %v2154 = vand.u32 %v1982, 4294901760
    %v2155 = vsub.f32 %v1982, %v2154
    %2156 = vmatprep.subr.mxu0 %v2155
    %v2157 = vand.u32 %v1974, 4294901760
    %v2158 = vsub.f32 %v1974, %v2157
    %2159 = vmatpush1.xpose.msra.mxu0 %v2158
    %2160 = vmatprep.subr.mxu0 0.0
    %2161 = vmatpush1.xpose.msra.mxu0 0.0
    %2162 = vmatprep.subr.mxu0 0.0
    %2163 = vmatpush1.xpose.msra.mxu0 0.0
    %2164 = vmatprep.subr.mxu0 0.0
    %2165 = vmatpush1.xpose.msra.mxu0 0.0
    %2166 = vmatprep.subr.mxu0 0.0
    %2167 = vmatpush1.xpose.msra.mxu0 0.0
    %2168 = vmatprep.subr.mxu0 0.0
    %2169 = vmatpush1.xpose.msra.mxu0 0.0
    %2170 = vmatprep.subr.mxu0 0.0
    %2171 = vmatpush1.xpose.msra.mxu0 0.0
    %2172 = vmatprep.subr.mxu0 0.0
    %2173 = vmatpush1.xpose.msra.mxu0 0.0
    %2174 = vmatprep.subr.mxu0 0.0
    %2175 = vmatpush1.xpose.msra.mxu0 0.0
    %2176 = vmatprep.subr.mxu0 0.0
    %2177 = vmatpush1.xpose.msra.mxu0 0.0
    %2178 = vmatprep.subr.mxu0 0.0
    %2179 = vmatpush1.xpose.msra.mxu0 0.0
    %2180 = vmatprep.subr.mxu0 0.0
    %2181 = vmatpush1.xpose.msra.mxu0 0.0
    %2182 = vmatprep.subr.mxu0 0.0
    %2183 = vmatpush1.xpose.msra.mxu0 0.0
    %2184 = vmatprep.subr.mxu0 0.0
    %2185 = vmatpush1.xpose.msra.mxu0 0.0
    %2186 = vmatprep.subr.mxu0 0.0
    %2187 = vmatpush1.xpose.msra.mxu0 0.0
    %2188 = vmatprep.subr.mxu0 0.0
    %2189 = vmatpush1.xpose.msra.mxu0 0.0
    %2190 = vmatprep.subr.mxu0 0.0
    %2191 = vmatpush1.xpose.msra.mxu0 0.0
    %2192 = vmatprep.subr.mxu0 0.0
    %2193 = vmatpush1.xpose.msra.mxu0 0.0
    %2194 = vmatprep.subr.mxu0 0.0
    %2195 = vmatpush1.xpose.msra.mxu0 0.0
    %2196 = vmatprep.subr.mxu0 0.0
    %2197 = vmatpush1.xpose.msra.mxu0 0.0
    %2198 = vmatprep.subr.mxu0 0.0
    %2199 = vmatpush1.xpose.msra.mxu0 0.0
    %2200 = vmatprep.subr.mxu0 0.0
    %2201 = vmatpush1.xpose.msra.mxu0 0.0
    %2202 = vmatprep.subr.mxu0 0.0
    %2203 = vmatpush1.xpose.msra.mxu0 0.0
    %2204 = vmatprep.subr.mxu0 0.0
    %2205 = vmatpush1.xpose.msra.mxu0 0.0
    %2206 = vmatprep.subr.mxu0 0.0
    %2207 = vmatpush1.xpose.msra.mxu0 0.0
    %2208 = vmatprep.subr.mxu0 0.0
    %2209 = vmatpush1.xpose.msra.mxu0 0.0
    %2210 = vmatprep.subr.mxu0 0.0
    %2211 = vmatpush1.xpose.msra.mxu0 0.0
    %2212 = vmatprep.subr.mxu0 0.0
    %2213 = vmatpush1.xpose.msra.mxu0 0.0
    %2214 = vmatprep.subr.mxu0 0.0
    %2215 = vmatpush1.xpose.msra.mxu0 0.0
    %2216 = vmatprep.subr.mxu0 0.0
    %2217 = vmatpush1.xpose.msra.mxu0 0.0
    %2218 = vmatprep.subr.mxu0 0.0
    %2219 = vmatpush1.xpose.msra.mxu0 0.0
    %2220 = vmatprep.subr.mxu0 0.0
    %2221 = vmatpush1.xpose.msra.mxu0 0.0
    %v2222 = vand.u32 %v1982, 4294901760
    %v2223 = vsub.f32 %v1982, %v2222
    %2224 = vmatprep.mubr.f32.mxu0 %v2223
    %v2225 = vand.u32 %v1974, 4294901760
    %v2226 = vsub.f32 %v1974, %v2225
    %2227 = vmatmul.mubr.f32.gmra.mrb[0].mxu0 %v2226
    %v2228 = vpop.f32.mrb[0].mxu0
    %v2229 = vadd.f32 %v2151, %v2228
    %v2230 = vpop.f32.mrb[0].mxu0
    %2231 = vdwg.mxu0
    %v2232 = vand.u32 %v1982, 4294901760
    %2233 = vmatprep.subr.mxu0 %v2232
    %v2234 = vand.u32 %v1974, 4294901760
    %2235 = vmatpush1.xpose.msra.mxu0 %v2234
    %2236 = vmatprep.subr.mxu0 0.0
    %2237 = vmatpush1.xpose.msra.mxu0 0.0
    %2238 = vmatprep.subr.mxu0 0.0
    %2239 = vmatpush1.xpose.msra.mxu0 0.0
    %2240 = vmatprep.subr.mxu0 0.0
    %2241 = vmatpush1.xpose.msra.mxu0 0.0
    %2242 = vmatprep.subr.mxu0 0.0
    %2243 = vmatpush1.xpose.msra.mxu0 0.0
    %2244 = vmatprep.subr.mxu0 0.0
    %2245 = vmatpush1.xpose.msra.mxu0 0.0
    %2246 = vmatprep.subr.mxu0 0.0
    %2247 = vmatpush1.xpose.msra.mxu0 0.0
    %2248 = vmatprep.subr.mxu0 0.0
    %2249 = vmatpush1.xpose.msra.mxu0 0.0
    %2250 = vmatprep.subr.mxu0 0.0
    %2251 = vmatpush1.xpose.msra.mxu0 0.0
    %2252 = vmatprep.subr.mxu0 0.0
    %2253 = vmatpush1.xpose.msra.mxu0 0.0
    %2254 = vmatprep.subr.mxu0 0.0
    %2255 = vmatpush1.xpose.msra.mxu0 0.0
    %2256 = vmatprep.subr.mxu0 0.0
    %2257 = vmatpush1.xpose.msra.mxu0 0.0
    %2258 = vmatprep.subr.mxu0 0.0
    %2259 = vmatpush1.xpose.msra.mxu0 0.0
    %2260 = vmatprep.subr.mxu0 0.0
    %2261 = vmatpush1.xpose.msra.mxu0 0.0
    %2262 = vmatprep.subr.mxu0 0.0
    %2263 = vmatpush1.xpose.msra.mxu0 0.0
    %2264 = vmatprep.subr.mxu0 0.0
    %2265 = vmatpush1.xpose.msra.mxu0 0.0
    %2266 = vmatprep.subr.mxu0 0.0
    %2267 = vmatpush1.xpose.msra.mxu0 0.0
    %2268 = vmatprep.subr.mxu0 0.0
    %2269 = vmatpush1.xpose.msra.mxu0 0.0
    %2270 = vmatprep.subr.mxu0 0.0
    %2271 = vmatpush1.xpose.msra.mxu0 0.0
    %2272 = vmatprep.subr.mxu0 0.0
    %2273 = vmatpush1.xpose.msra.mxu0 0.0
    %2274 = vmatprep.subr.mxu0 0.0
    %2275 = vmatpush1.xpose.msra.mxu0 0.0
    %2276 = vmatprep.subr.mxu0 0.0
    %2277 = vmatpush1.xpose.msra.mxu0 0.0
    %2278 = vmatprep.subr.mxu0 0.0
    %2279 = vmatpush1.xpose.msra.mxu0 0.0
    %2280 = vmatprep.subr.mxu0 0.0
    %2281 = vmatpush1.xpose.msra.mxu0 0.0
    %2282 = vmatprep.subr.mxu0 0.0
    %2283 = vmatpush1.xpose.msra.mxu0 0.0
    %2284 = vmatprep.subr.mxu0 0.0
    %2285 = vmatpush1.xpose.msra.mxu0 0.0
    %2286 = vmatprep.subr.mxu0 0.0
    %2287 = vmatpush1.xpose.msra.mxu0 0.0
    %2288 = vmatprep.subr.mxu0 0.0
    %2289 = vmatpush1.xpose.msra.mxu0 0.0
    %2290 = vmatprep.subr.mxu0 0.0
    %2291 = vmatpush1.xpose.msra.mxu0 0.0
    %2292 = vmatprep.subr.mxu0 0.0
    %2293 = vmatpush1.xpose.msra.mxu0 0.0
    %2294 = vmatprep.subr.mxu0 0.0
    %2295 = vmatpush1.xpose.msra.mxu0 0.0
    %2296 = vmatprep.subr.mxu0 0.0
    %2297 = vmatpush1.xpose.msra.mxu0 0.0
    %v2298 = vand.u32 %v1982, 4294901760
    %v2299 = vsub.f32 %v1982, %v2298
    %v2300 = vand.u32 %v2299, 4294901760
    %2301 = vmatprep.mubr.f32.mxu0 %v2300
    %v2302 = vand.u32 %v1974, 4294901760
    %v2303 = vsub.f32 %v1974, %v2302
    %v2304 = vand.u32 %v2303, 4294901760
    %2305 = vmatmul.mubr.f32.gmra.mrb[0].mxu0 %v2304
    %v2306 = vpop.f32.mrb[0].mxu0
    %v2307 = vadd.f32 %v2229, %v2306
    %v2308 = vpop.f32.mrb[0].mxu0
    %2309 = vdwg.mxu0
    %v2310 = vand.u32 %v1982, 4294901760
    %v2311 = vsub.f32 %v1982, %v2310
    %v2312 = vand.u32 %v2311, 4294901760
    %2313 = vmatprep.subr.mxu0 %v2312
    %v2314 = vand.u32 %v1974, 4294901760
    %v2315 = vsub.f32 %v1974, %v2314
    %v2316 = vand.u32 %v2315, 4294901760
    %2317 = vmatpush1.xpose.msra.mxu0 %v2316
    %2318 = vmatprep.subr.mxu0 0.0
    %2319 = vmatpush1.xpose.msra.mxu0 0.0
    %2320 = vmatprep.subr.mxu0 0.0
    %2321 = vmatpush1.xpose.msra.mxu0 0.0
    %2322 = vmatprep.subr.mxu0 0.0
    %2323 = vmatpush1.xpose.msra.mxu0 0.0
    %2324 = vmatprep.subr.mxu0 0.0
    %2325 = vmatpush1.xpose.msra.mxu0 0.0
    %2326 = vmatprep.subr.mxu0 0.0
    %2327 = vmatpush1.xpose.msra.mxu0 0.0
    %2328 = vmatprep.subr.mxu0 0.0
    %2329 = vmatpush1.xpose.msra.mxu0 0.0
    %2330 = vmatprep.subr.mxu0 0.0
    %2331 = vmatpush1.xpose.msra.mxu0 0.0
    %2332 = vmatprep.subr.mxu0 0.0
    %2333 = vmatpush1.xpose.msra.mxu0 0.0
    %2334 = vmatprep.subr.mxu0 0.0
    %2335 = vmatpush1.xpose.msra.mxu0 0.0
    %2336 = vmatprep.subr.mxu0 0.0
    %2337 = vmatpush1.xpose.msra.mxu0 0.0
    %2338 = vmatprep.subr.mxu0 0.0
    %2339 = vmatpush1.xpose.msra.mxu0 0.0
    %2340 = vmatprep.subr.mxu0 0.0
    %2341 = vmatpush1.xpose.msra.mxu0 0.0
    %2342 = vmatprep.subr.mxu0 0.0
    %2343 = vmatpush1.xpose.msra.mxu0 0.0
    %2344 = vmatprep.subr.mxu0 0.0
    %2345 = vmatpush1.xpose.msra.mxu0 0.0
    %2346 = vmatprep.subr.mxu0 0.0
    %2347 = vmatpush1.xpose.msra.mxu0 0.0
    %2348 = vmatprep.subr.mxu0 0.0
    %2349 = vmatpush1.xpose.msra.mxu0 0.0
    %2350 = vmatprep.subr.mxu0 0.0
    %2351 = vmatpush1.xpose.msra.mxu0 0.0
    %2352 = vmatprep.subr.mxu0 0.0
    %2353 = vmatpush1.xpose.msra.mxu0 0.0
    %2354 = vmatprep.subr.mxu0 0.0
    %2355 = vmatpush1.xpose.msra.mxu0 0.0
    %2356 = vmatprep.subr.mxu0 0.0
    %2357 = vmatpush1.xpose.msra.mxu0 0.0
    %2358 = vmatprep.subr.mxu0 0.0
    %2359 = vmatpush1.xpose.msra.mxu0 0.0
    %2360 = vmatprep.subr.mxu0 0.0
    %2361 = vmatpush1.xpose.msra.mxu0 0.0
    %2362 = vmatprep.subr.mxu0 0.0
    %2363 = vmatpush1.xpose.msra.mxu0 0.0
    %2364 = vmatprep.subr.mxu0 0.0
    %2365 = vmatpush1.xpose.msra.mxu0 0.0
    %2366 = vmatprep.subr.mxu0 0.0
    %2367 = vmatpush1.xpose.msra.mxu0 0.0
    %2368 = vmatprep.subr.mxu0 0.0
    %2369 = vmatpush1.xpose.msra.mxu0 0.0
    %2370 = vmatprep.subr.mxu0 0.0
    %2371 = vmatpush1.xpose.msra.mxu0 0.0
    %2372 = vmatprep.subr.mxu0 0.0
    %2373 = vmatpush1.xpose.msra.mxu0 0.0
    %2374 = vmatprep.subr.mxu0 0.0
    %2375 = vmatpush1.xpose.msra.mxu0 0.0
    %2376 = vmatprep.subr.mxu0 0.0
    %2377 = vmatpush1.xpose.msra.mxu0 0.0
    %2378 = vmatprep.subr.mxu0 0.0
    %2379 = vmatpush1.xpose.msra.mxu0 0.0
    %v2380 = vand.u32 %v1982, 4294901760
    %2381 = vmatprep.mubr.f32.mxu0 %v2380
    %v2382 = vand.u32 %v1974, 4294901760
    %2383 = vmatmul.mubr.f32.gmra.mrb[0].mxu0 %v2382
    %v2384 = vpop.f32.mrb[0].mxu0
    %v2385 = vadd.f32 %v2307, %v2384
    %v2386 = vpop.f32.mrb[0].mxu0
    %2387 = vdwg.mxu0
    %v2388 = vand.u32 %v1982, 4294901760
    %2389 = vmatprep.subr.mxu0 %v2388
    %v2390 = vand.u32 %v1974, 4294901760
    %2391 = vmatpush1.xpose.msra.mxu0 %v2390
    %2392 = vmatprep.subr.mxu0 0.0
    %2393 = vmatpush1.xpose.msra.mxu0 0.0
    %2394 = vmatprep.subr.mxu0 0.0
    %2395 = vmatpush1.xpose.msra.mxu0 0.0
    %2396 = vmatprep.subr.mxu0 0.0
    %2397 = vmatpush1.xpose.msra.mxu0 0.0
    %2398 = vmatprep.subr.mxu0 0.0
    %2399 = vmatpush1.xpose.msra.mxu0 0.0
    %2400 = vmatprep.subr.mxu0 0.0
    %2401 = vmatpush1.xpose.msra.mxu0 0.0
    %2402 = vmatprep.subr.mxu0 0.0
    %2403 = vmatpush1.xpose.msra.mxu0 0.0
    %2404 = vmatprep.subr.mxu0 0.0
    %2405 = vmatpush1.xpose.msra.mxu0 0.0
    %2406 = vmatprep.subr.mxu0 0.0
    %2407 = vmatpush1.xpose.msra.mxu0 0.0
    %2408 = vmatprep.subr.mxu0 0.0
    %2409 = vmatpush1.xpose.msra.mxu0 0.0
    %2410 = vmatprep.subr.mxu0 0.0
    %2411 = vmatpush1.xpose.msra.mxu0 0.0
    %2412 = vmatprep.subr.mxu0 0.0
    %2413 = vmatpush1.xpose.msra.mxu0 0.0
    %2414 = vmatprep.subr.mxu0 0.0
    %2415 = vmatpush1.xpose.msra.mxu0 0.0
    %2416 = vmatprep.subr.mxu0 0.0
    %2417 = vmatpush1.xpose.msra.mxu0 0.0
    %2418 = vmatprep.subr.mxu0 0.0
    %2419 = vmatpush1.xpose.msra.mxu0 0.0
    %2420 = vmatprep.subr.mxu0 0.0
    %2421 = vmatpush1.xpose.msra.mxu0 0.0
    %2422 = vmatprep.subr.mxu0 0.0
    %2423 = vmatpush1.xpose.msra.mxu0 0.0
    %2424 = vmatprep.subr.mxu0 0.0
    %2425 = vmatpush1.xpose.msra.mxu0 0.0
    %2426 = vmatprep.subr.mxu0 0.0
    %2427 = vmatpush1.xpose.msra.mxu0 0.0
    %2428 = vmatprep.subr.mxu0 0.0
    %2429 = vmatpush1.xpose.msra.mxu0 0.0
    %2430 = vmatprep.subr.mxu0 0.0
    %2431 = vmatpush1.xpose.msra.mxu0 0.0
    %2432 = vmatprep.subr.mxu0 0.0
    %2433 = vmatpush1.xpose.msra.mxu0 0.0
    %2434 = vmatprep.subr.mxu0 0.0
    %2435 = vmatpush1.xpose.msra.mxu0 0.0
    %2436 = vmatprep.subr.mxu0 0.0
    %2437 = vmatpush1.xpose.msra.mxu0 0.0
    %2438 = vmatprep.subr.mxu0 0.0
    %2439 = vmatpush1.xpose.msra.mxu0 0.0
    %2440 = vmatprep.subr.mxu0 0.0
    %2441 = vmatpush1.xpose.msra.mxu0 0.0
    %2442 = vmatprep.subr.mxu0 0.0
    %2443 = vmatpush1.xpose.msra.mxu0 0.0
    %2444 = vmatprep.subr.mxu0 0.0
    %2445 = vmatpush1.xpose.msra.mxu0 0.0
    %2446 = vmatprep.subr.mxu0 0.0
    %2447 = vmatpush1.xpose.msra.mxu0 0.0
    %2448 = vmatprep.subr.mxu0 0.0
    %2449 = vmatpush1.xpose.msra.mxu0 0.0
    %2450 = vmatprep.subr.mxu0 0.0
    %2451 = vmatpush1.xpose.msra.mxu0 0.0
    %2452 = vmatprep.subr.mxu0 0.0
    %2453 = vmatpush1.xpose.msra.mxu0 0.0
    %v2454 = vand.u32 %v1982, 4294901760
    %2455 = vmatprep.mubr.f32.mxu0 %v2454
    %v2456 = vand.u32 %v1974, 4294901760
    %2457 = vmatmul.mubr.f32.gmra.mrb[0].mxu0 %v2456
    %v2458 = vpop.f32.mrb[0].mxu0
    %v2459 = vadd.f32 %v2385, %v2458
    %v2460 = vpop.f32.mrb[0].mxu0
    %2461 = vdwg.mxu0
    %v2462 = vand.u32 %v1983, 4294901760
    %2463 = vmatprep.subr.mxu0 %v2462
    %v2464 = vand.u32 %v1975, 4294901760
    %2465 = vmatpush1.xpose.msra.mxu0 %v2464
    %2466 = vmatprep.subr.mxu0 0.0
    %2467 = vmatpush1.xpose.msra.mxu0 0.0
    %2468 = vmatprep.subr.mxu0 0.0
    %2469 = vmatpush1.xpose.msra.mxu0 0.0
    %2470 = vmatprep.subr.mxu0 0.0
    %2471 = vmatpush1.xpose.msra.mxu0 0.0
    %2472 = vmatprep.subr.mxu0 0.0
    %2473 = vmatpush1.xpose.msra.mxu0 0.0
    %2474 = vmatprep.subr.mxu0 0.0
    %2475 = vmatpush1.xpose.msra.mxu0 0.0
    %2476 = vmatprep.subr.mxu0 0.0
    %2477 = vmatpush1.xpose.msra.mxu0 0.0
    %2478 = vmatprep.subr.mxu0 0.0
    %2479 = vmatpush1.xpose.msra.mxu0 0.0
    %2480 = vmatprep.subr.mxu0 0.0
    %2481 = vmatpush1.xpose.msra.mxu0 0.0
    %2482 = vmatprep.subr.mxu0 0.0
    %2483 = vmatpush1.xpose.msra.mxu0 0.0
    %2484 = vmatprep.subr.mxu0 0.0
    %2485 = vmatpush1.xpose.msra.mxu0 0.0
    %2486 = vmatprep.subr.mxu0 0.0
    %2487 = vmatpush1.xpose.msra.mxu0 0.0
    %2488 = vmatprep.subr.mxu0 0.0
    %2489 = vmatpush1.xpose.msra.mxu0 0.0
    %2490 = vmatprep.subr.mxu0 0.0
    %2491 = vmatpush1.xpose.msra.mxu0 0.0
    %2492 = vmatprep.subr.mxu0 0.0
    %2493 = vmatpush1.xpose.msra.mxu0 0.0
    %2494 = vmatprep.subr.mxu0 0.0
    %2495 = vmatpush1.xpose.msra.mxu0 0.0
    %2496 = vmatprep.subr.mxu0 0.0
    %2497 = vmatpush1.xpose.msra.mxu0 0.0
    %2498 = vmatprep.subr.mxu0 0.0
    %2499 = vmatpush1.xpose.msra.mxu0 0.0
    %2500 = vmatprep.subr.mxu0 0.0
    %2501 = vmatpush1.xpose.msra.mxu0 0.0
    %2502 = vmatprep.subr.mxu0 0.0
    %2503 = vmatpush1.xpose.msra.mxu0 0.0
    %2504 = vmatprep.subr.mxu0 0.0
    %2505 = vmatpush1.xpose.msra.mxu0 0.0
    %2506 = vmatprep.subr.mxu0 0.0
    %2507 = vmatpush1.xpose.msra.mxu0 0.0
    %2508 = vmatprep.subr.mxu0 0.0
    %2509 = vmatpush1.xpose.msra.mxu0 0.0
    %2510 = vmatprep.subr.mxu0 0.0
    %2511 = vmatpush1.xpose.msra.mxu0 0.0
    %2512 = vmatprep.subr.mxu0 0.0
    %2513 = vmatpush1.xpose.msra.mxu0 0.0
    %2514 = vmatprep.subr.mxu0 0.0
    %2515 = vmatpush1.xpose.msra.mxu0 0.0
    %2516 = vmatprep.subr.mxu0 0.0
    %2517 = vmatpush1.xpose.msra.mxu0 0.0
    %2518 = vmatprep.subr.mxu0 0.0
    %2519 = vmatpush1.xpose.msra.mxu0 0.0
    %2520 = vmatprep.subr.mxu0 0.0
    %2521 = vmatpush1.xpose.msra.mxu0 0.0
    %2522 = vmatprep.subr.mxu0 0.0
    %2523 = vmatpush1.xpose.msra.mxu0 0.0
    %2524 = vmatprep.subr.mxu0 0.0
    %2525 = vmatpush1.xpose.msra.mxu0 0.0
    %2526 = vmatprep.subr.mxu0 0.0
    %2527 = vmatpush1.xpose.msra.mxu0 0.0
    %v2528 = vand.u32 %v1983, 4294901760
    %v2529 = vsub.f32 %v1983, %v2528
    %v2530 = vand.u32 %v2529, 4294901760
    %v2531 = vsub.f32 %v2529, %v2530
    %v2532 = vand.u32 %v2531, 4294901760
    %2533 = vmatprep.mubr.f32.mxu0 %v2532
    %v2534 = vand.u32 %v1975, 4294901760
    %v2535 = vsub.f32 %v1975, %v2534
    %v2536 = vand.u32 %v2535, 4294901760
    %v2537 = vsub.f32 %v2535, %v2536
    %v2538 = vand.u32 %v2537, 4294901760
    %2539 = vmatmul.mubr.f32.gmra.mrb[0].mxu0 %v2538
    %v2540 = vpop.f32.mrb[0].mxu0
    %v2541 = vadd.f32 %v2459, %v2540
    %v2542 = vpop.f32.mrb[0].mxu0
    %2543 = vdwg.mxu0
    %v2544 = vand.u32 %v1983, 4294901760
    %v2545 = vsub.f32 %v1983, %v2544
    %v2546 = vand.u32 %v2545, 4294901760
    %v2547 = vsub.f32 %v2545, %v2546
    %v2548 = vand.u32 %v2547, 4294901760
    %2549 = vmatprep.subr.mxu0 %v2548
    %v2550 = vand.u32 %v1975, 4294901760
    %v2551 = vsub.f32 %v1975, %v2550
    %v2552 = vand.u32 %v2551, 4294901760
    %v2553 = vsub.f32 %v2551, %v2552
    %v2554 = vand.u32 %v2553, 4294901760
    %2555 = vmatpush1.xpose.msra.mxu0 %v2554
    %2556 = vmatprep.subr.mxu0 0.0
    %2557 = vmatpush1.xpose.msra.mxu0 0.0
    %2558 = vmatprep.subr.mxu0 0.0
    %2559 = vmatpush1.xpose.msra.mxu0 0.0
    %2560 = vmatprep.subr.mxu0 0.0
    %2561 = vmatpush1.xpose.msra.mxu0 0.0
    %2562 = vmatprep.subr.mxu0 0.0
    %2563 = vmatpush1.xpose.msra.mxu0 0.0
    %2564 = vmatprep.subr.mxu0 0.0
    %2565 = vmatpush1.xpose.msra.mxu0 0.0
    %2566 = vmatprep.subr.mxu0 0.0
    %2567 = vmatpush1.xpose.msra.mxu0 0.0
    %2568 = vmatprep.subr.mxu0 0.0
    %2569 = vmatpush1.xpose.msra.mxu0 0.0
    %2570 = vmatprep.subr.mxu0 0.0
    %2571 = vmatpush1.xpose.msra.mxu0 0.0
    %2572 = vmatprep.subr.mxu0 0.0
    %2573 = vmatpush1.xpose.msra.mxu0 0.0
    %2574 = vmatprep.subr.mxu0 0.0
    %2575 = vmatpush1.xpose.msra.mxu0 0.0
    %2576 = vmatprep.subr.mxu0 0.0
    %2577 = vmatpush1.xpose.msra.mxu0 0.0
    %2578 = vmatprep.subr.mxu0 0.0
    %2579 = vmatpush1.xpose.msra.mxu0 0.0
    %2580 = vmatprep.subr.mxu0 0.0
    %2581 = vmatpush1.xpose.msra.mxu0 0.0
    %2582 = vmatprep.subr.mxu0 0.0
    %2583 = vmatpush1.xpose.msra.mxu0 0.0
    %2584 = vmatprep.subr.mxu0 0.0
    %2585 = vmatpush1.xpose.msra.mxu0 0.0
    %2586 = vmatprep.subr.mxu0 0.0
    %2587 = vmatpush1.xpose.msra.mxu0 0.0
    %2588 = vmatprep.subr.mxu0 0.0
    %2589 = vmatpush1.xpose.msra.mxu0 0.0
    %2590 = vmatprep.subr.mxu0 0.0
    %2591 = vmatpush1.xpose.msra.mxu0 0.0
    %2592 = vmatprep.subr.mxu0 0.0
    %2593 = vmatpush1.xpose.msra.mxu0 0.0
    %2594 = vmatprep.subr.mxu0 0.0
    %2595 = vmatpush1.xpose.msra.mxu0 0.0
    %2596 = vmatprep.subr.mxu0 0.0
    %2597 = vmatpush1.xpose.msra.mxu0 0.0
    %2598 = vmatprep.subr.mxu0 0.0
    %2599 = vmatpush1.xpose.msra.mxu0 0.0
    %2600 = vmatprep.subr.mxu0 0.0
    %2601 = vmatpush1.xpose.msra.mxu0 0.0
    %2602 = vmatprep.subr.mxu0 0.0
    %2603 = vmatpush1.xpose.msra.mxu0 0.0
    %2604 = vmatprep.subr.mxu0 0.0
    %2605 = vmatpush1.xpose.msra.mxu0 0.0
    %2606 = vmatprep.subr.mxu0 0.0
    %2607 = vmatpush1.xpose.msra.mxu0 0.0
    %2608 = vmatprep.subr.mxu0 0.0
    %2609 = vmatpush1.xpose.msra.mxu0 0.0
    %2610 = vmatprep.subr.mxu0 0.0
    %2611 = vmatpush1.xpose.msra.mxu0 0.0
    %2612 = vmatprep.subr.mxu0 0.0
    %2613 = vmatpush1.xpose.msra.mxu0 0.0
    %2614 = vmatprep.subr.mxu0 0.0
    %2615 = vmatpush1.xpose.msra.mxu0 0.0
    %2616 = vmatprep.subr.mxu0 0.0
    %2617 = vmatpush1.xpose.msra.mxu0 0.0
    %v2618 = vand.u32 %v1983, 4294901760
    %2619 = vmatprep.mubr.f32.mxu0 %v2618
    %v2620 = vand.u32 %v1975, 4294901760
    %2621 = vmatmul.mubr.f32.gmra.mrb[0].mxu0 %v2620
    %v2622 = vpop.f32.mrb[0].mxu0
    %v2623 = vadd.f32 %v2541, %v2622
    %v2624 = vpop.f32.mrb[0].mxu0
    %2625 = vdwg.mxu0
    %v2626 = vand.u32 %v1983, 4294901760
    %v2627 = vsub.f32 %v1983, %v2626
    %2628 = vmatprep.subr.mxu0 %v2627
    %v2629 = vand.u32 %v1975, 4294901760
    %v2630 = vsub.f32 %v1975, %v2629
    %2631 = vmatpush1.xpose.msra.mxu0 %v2630
    %2632 = vmatprep.subr.mxu0 0.0
    %2633 = vmatpush1.xpose.msra.mxu0 0.0
    %2634 = vmatprep.subr.mxu0 0.0
    %2635 = vmatpush1.xpose.msra.mxu0 0.0
    %2636 = vmatprep.subr.mxu0 0.0
    %2637 = vmatpush1.xpose.msra.mxu0 0.0
    %2638 = vmatprep.subr.mxu0 0.0
    %2639 = vmatpush1.xpose.msra.mxu0 0.0
    %2640 = vmatprep.subr.mxu0 0.0
    %2641 = vmatpush1.xpose.msra.mxu0 0.0
    %2642 = vmatprep.subr.mxu0 0.0
    %2643 = vmatpush1.xpose.msra.mxu0 0.0
    %2644 = vmatprep.subr.mxu0 0.0
    %2645 = vmatpush1.xpose.msra.mxu0 0.0
    %2646 = vmatprep.subr.mxu0 0.0
    %2647 = vmatpush1.xpose.msra.mxu0 0.0
    %2648 = vmatprep.subr.mxu0 0.0
    %2649 = vmatpush1.xpose.msra.mxu0 0.0
    %2650 = vmatprep.subr.mxu0 0.0
    %2651 = vmatpush1.xpose.msra.mxu0 0.0
    %2652 = vmatprep.subr.mxu0 0.0
    %2653 = vmatpush1.xpose.msra.mxu0 0.0
    %2654 = vmatprep.subr.mxu0 0.0
    %2655 = vmatpush1.xpose.msra.mxu0 0.0
    %2656 = vmatprep.subr.mxu0 0.0
    %2657 = vmatpush1.xpose.msra.mxu0 0.0
    %2658 = vmatprep.subr.mxu0 0.0
    %2659 = vmatpush1.xpose.msra.mxu0 0.0
    %2660 = vmatprep.subr.mxu0 0.0
    %2661 = vmatpush1.xpose.msra.mxu0 0.0
    %2662 = vmatprep.subr.mxu0 0.0
    %2663 = vmatpush1.xpose.msra.mxu0 0.0
    %2664 = vmatprep.subr.mxu0 0.0
    %2665 = vmatpush1.xpose.msra.mxu0 0.0
    %2666 = vmatprep.subr.mxu0 0.0
    %2667 = vmatpush1.xpose.msra.mxu0 0.0
    %2668 = vmatprep.subr.mxu0 0.0
    %2669 = vmatpush1.xpose.msra.mxu0 0.0
    %2670 = vmatprep.subr.mxu0 0.0
    %2671 = vmatpush1.xpose.msra.mxu0 0.0
    %2672 = vmatprep.subr.mxu0 0.0
    %2673 = vmatpush1.xpose.msra.mxu0 0.0
    %2674 = vmatprep.subr.mxu0 0.0
    %2675 = vmatpush1.xpose.msra.mxu0 0.0
    %2676 = vmatprep.subr.mxu0 0.0
    %2677 = vmatpush1.xpose.msra.mxu0 0.0
    %2678 = vmatprep.subr.mxu0 0.0
    %2679 = vmatpush1.xpose.msra.mxu0 0.0
    %2680 = vmatprep.subr.mxu0 0.0
    %2681 = vmatpush1.xpose.msra.mxu0 0.0
    %2682 = vmatprep.subr.mxu0 0.0
    %2683 = vmatpush1.xpose.msra.mxu0 0.0
    %2684 = vmatprep.subr.mxu0 0.0
    %2685 = vmatpush1.xpose.msra.mxu0 0.0
    %2686 = vmatprep.subr.mxu0 0.0
    %2687 = vmatpush1.xpose.msra.mxu0 0.0
    %2688 = vmatprep.subr.mxu0 0.0
    %2689 = vmatpush1.xpose.msra.mxu0 0.0
    %2690 = vmatprep.subr.mxu0 0.0
    %2691 = vmatpush1.xpose.msra.mxu0 0.0
    %2692 = vmatprep.subr.mxu0 0.0
    %2693 = vmatpush1.xpose.msra.mxu0 0.0
    %v2694 = vand.u32 %v1983, 4294901760
    %v2695 = vsub.f32 %v1983, %v2694
    %2696 = vmatprep.mubr.f32.mxu0 %v2695
    %v2697 = vand.u32 %v1975, 4294901760
    %v2698 = vsub.f32 %v1975, %v2697
    %2699 = vmatmul.mubr.f32.gmra.mrb[0].mxu0 %v2698
    %v2700 = vpop.f32.mrb[0].mxu0
    %v2701 = vadd.f32 %v2623, %v2700
    %v2702 = vpop.f32.mrb[0].mxu0
    %2703 = vdwg.mxu0
    %v2704 = vand.u32 %v1983, 4294901760
    %2705 = vmatprep.subr.mxu0 %v2704
    %v2706 = vand.u32 %v1975, 4294901760
    %2707 = vmatpush1.xpose.msra.mxu0 %v2706
    %2708 = vmatprep.subr.mxu0 0.0
    %2709 = vmatpush1.xpose.msra.mxu0 0.0
    %2710 = vmatprep.subr.mxu0 0.0
    %2711 = vmatpush1.xpose.msra.mxu0 0.0
    %2712 = vmatprep.subr.mxu0 0.0
    %2713 = vmatpush1.xpose.msra.mxu0 0.0
    %2714 = vmatprep.subr.mxu0 0.0
    %2715 = vmatpush1.xpose.msra.mxu0 0.0
    %2716 = vmatprep.subr.mxu0 0.0
    %2717 = vmatpush1.xpose.msra.mxu0 0.0
    %2718 = vmatprep.subr.mxu0 0.0
    %2719 = vmatpush1.xpose.msra.mxu0 0.0
    %2720 = vmatprep.subr.mxu0 0.0
    %2721 = vmatpush1.xpose.msra.mxu0 0.0
    %2722 = vmatprep.subr.mxu0 0.0
    %2723 = vmatpush1.xpose.msra.mxu0 0.0
    %2724 = vmatprep.subr.mxu0 0.0
    %2725 = vmatpush1.xpose.msra.mxu0 0.0
    %2726 = vmatprep.subr.mxu0 0.0
    %2727 = vmatpush1.xpose.msra.mxu0 0.0
    %2728 = vmatprep.subr.mxu0 0.0
    %2729 = vmatpush1.xpose.msra.mxu0 0.0
    %2730 = vmatprep.subr.mxu0 0.0
    %2731 = vmatpush1.xpose.msra.mxu0 0.0
    %2732 = vmatprep.subr.mxu0 0.0
    %2733 = vmatpush1.xpose.msra.mxu0 0.0
    %2734 = vmatprep.subr.mxu0 0.0
    %2735 = vmatpush1.xpose.msra.mxu0 0.0
    %2736 = vmatprep.subr.mxu0 0.0
    %2737 = vmatpush1.xpose.msra.mxu0 0.0
    %2738 = vmatprep.subr.mxu0 0.0
    %2739 = vmatpush1.xpose.msra.mxu0 0.0
    %2740 = vmatprep.subr.mxu0 0.0
    %2741 = vmatpush1.xpose.msra.mxu0 0.0
    %2742 = vmatprep.subr.mxu0 0.0
    %2743 = vmatpush1.xpose.msra.mxu0 0.0
    %2744 = vmatprep.subr.mxu0 0.0
    %2745 = vmatpush1.xpose.msra.mxu0 0.0
    %2746 = vmatprep.subr.mxu0 0.0
    %2747 = vmatpush1.xpose.msra.mxu0 0.0
    %2748 = vmatprep.subr.mxu0 0.0
    %2749 = vmatpush1.xpose.msra.mxu0 0.0
    %2750 = vmatprep.subr.mxu0 0.0
    %2751 = vmatpush1.xpose.msra.mxu0 0.0
    %2752 = vmatprep.subr.mxu0 0.0
    %2753 = vmatpush1.xpose.msra.mxu0 0.0
    %2754 = vmatprep.subr.mxu0 0.0
    %2755 = vmatpush1.xpose.msra.mxu0 0.0
    %2756 = vmatprep.subr.mxu0 0.0
    %2757 = vmatpush1.xpose.msra.mxu0 0.0
    %2758 = vmatprep.subr.mxu0 0.0
    %2759 = vmatpush1.xpose.msra.mxu0 0.0
    %2760 = vmatprep.subr.mxu0 0.0
    %2761 = vmatpush1.xpose.msra.mxu0 0.0
    %2762 = vmatprep.subr.mxu0 0.0
    %2763 = vmatpush1.xpose.msra.mxu0 0.0
    %2764 = vmatprep.subr.mxu0 0.0
    %2765 = vmatpush1.xpose.msra.mxu0 0.0
    %2766 = vmatprep.subr.mxu0 0.0
    %2767 = vmatpush1.xpose.msra.mxu0 0.0
    %2768 = vmatprep.subr.mxu0 0.0
    %2769 = vmatpush1.xpose.msra.mxu0 0.0
    %v2770 = vand.u32 %v1983, 4294901760
    %v2771 = vsub.f32 %v1983, %v2770
    %v2772 = vand.u32 %v2771, 4294901760
    %2773 = vmatprep.mubr.f32.mxu0 %v2772
    %v2774 = vand.u32 %v1975, 4294901760
    %v2775 = vsub.f32 %v1975, %v2774
    %v2776 = vand.u32 %v2775, 4294901760
    %2777 = vmatmul.mubr.f32.gmra.mrb[0].mxu0 %v2776
    %v2778 = vpop.f32.mrb[0].mxu0
    %v2779 = vadd.f32 %v2701, %v2778
    %v2780 = vpop.f32.mrb[0].mxu0
    %2781 = vdwg.mxu0
    %v2782 = vand.u32 %v1983, 4294901760
    %v2783 = vsub.f32 %v1983, %v2782
    %v2784 = vand.u32 %v2783, 4294901760
    %2785 = vmatprep.subr.mxu0 %v2784
    %v2786 = vand.u32 %v1975, 4294901760
    %v2787 = vsub.f32 %v1975, %v2786
    %v2788 = vand.u32 %v2787, 4294901760
    %2789 = vmatpush1.xpose.msra.mxu0 %v2788
    %2790 = vmatprep.subr.mxu0 0.0
    %2791 = vmatpush1.xpose.msra.mxu0 0.0
    %2792 = vmatprep.subr.mxu0 0.0
    %2793 = vmatpush1.xpose.msra.mxu0 0.0
    %2794 = vmatprep.subr.mxu0 0.0
    %2795 = vmatpush1.xpose.msra.mxu0 0.0
    %2796 = vmatprep.subr.mxu0 0.0
    %2797 = vmatpush1.xpose.msra.mxu0 0.0
    %2798 = vmatprep.subr.mxu0 0.0
    %2799 = vmatpush1.xpose.msra.mxu0 0.0
    %2800 = vmatprep.subr.mxu0 0.0
    %2801 = vmatpush1.xpose.msra.mxu0 0.0
    %2802 = vmatprep.subr.mxu0 0.0
    %2803 = vmatpush1.xpose.msra.mxu0 0.0
    %2804 = vmatprep.subr.mxu0 0.0
    %2805 = vmatpush1.xpose.msra.mxu0 0.0
    %2806 = vmatprep.subr.mxu0 0.0
    %2807 = vmatpush1.xpose.msra.mxu0 0.0
    %2808 = vmatprep.subr.mxu0 0.0
    %2809 = vmatpush1.xpose.msra.mxu0 0.0
    %2810 = vmatprep.subr.mxu0 0.0
    %2811 = vmatpush1.xpose.msra.mxu0 0.0
    %2812 = vmatprep.subr.mxu0 0.0
    %2813 = vmatpush1.xpose.msra.mxu0 0.0
    %2814 = vmatprep.subr.mxu0 0.0
    %2815 = vmatpush1.xpose.msra.mxu0 0.0
    %2816 = vmatprep.subr.mxu0 0.0
    %2817 = vmatpush1.xpose.msra.mxu0 0.0
    %2818 = vmatprep.subr.mxu0 0.0
    %2819 = vmatpush1.xpose.msra.mxu0 0.0
    %2820 = vmatprep.subr.mxu0 0.0
    %2821 = vmatpush1.xpose.msra.mxu0 0.0
    %2822 = vmatprep.subr.mxu0 0.0
    %2823 = vmatpush1.xpose.msra.mxu0 0.0
    %2824 = vmatprep.subr.mxu0 0.0
    %2825 = vmatpush1.xpose.msra.mxu0 0.0
    %2826 = vmatprep.subr.mxu0 0.0
    %2827 = vmatpush1.xpose.msra.mxu0 0.0
    %2828 = vmatprep.subr.mxu0 0.0
    %2829 = vmatpush1.xpose.msra.mxu0 0.0
    %2830 = vmatprep.subr.mxu0 0.0
    %2831 = vmatpush1.xpose.msra.mxu0 0.0
    %2832 = vmatprep.subr.mxu0 0.0
    %2833 = vmatpush1.xpose.msra.mxu0 0.0
    %2834 = vmatprep.subr.mxu0 0.0
    %2835 = vmatpush1.xpose.msra.mxu0 0.0
    %2836 = vmatprep.subr.mxu0 0.0
    %2837 = vmatpush1.xpose.msra.mxu0 0.0
    %2838 = vmatprep.subr.mxu0 0.0
    %2839 = vmatpush1.xpose.msra.mxu0 0.0
    %2840 = vmatprep.subr.mxu0 0.0
    %2841 = vmatpush1.xpose.msra.mxu0 0.0
    %2842 = vmatprep.subr.mxu0 0.0
    %2843 = vmatpush1.xpose.msra.mxu0 0.0
    %2844 = vmatprep.subr.mxu0 0.0
    %2845 = vmatpush1.xpose.msra.mxu0 0.0
    %2846 = vmatprep.subr.mxu0 0.0
    %2847 = vmatpush1.xpose.msra.mxu0 0.0
    %2848 = vmatprep.subr.mxu0 0.0
    %2849 = vmatpush1.xpose.msra.mxu0 0.0
    %2850 = vmatprep.subr.mxu0 0.0
    %2851 = vmatpush1.xpose.msra.mxu0 0.0
    %v2852 = vand.u32 %v1983, 4294901760
    %2853 = vmatprep.mubr.f32.mxu0 %v2852
    %v2854 = vand.u32 %v1975, 4294901760
    %2855 = vmatmul.mubr.f32.gmra.mrb[0].mxu0 %v2854
    %v2856 = vpop.f32.mrb[0].mxu0
    %v2857 = vadd.f32 %v2779, %v2856
    %v2858 = vpop.f32.mrb[0].mxu0
    %2859 = vdwg.mxu0
    %v2860 = vand.u32 %v1983, 4294901760
    %2861 = vmatprep.subr.mxu0 %v2860
    %v2862 = vand.u32 %v1975, 4294901760
    %2863 = vmatpush1.xpose.msra.mxu0 %v2862
    %2864 = vmatprep.subr.mxu0 0.0
    %2865 = vmatpush1.xpose.msra.mxu0 0.0
    %2866 = vmatprep.subr.mxu0 0.0
    %2867 = vmatpush1.xpose.msra.mxu0 0.0
    %2868 = vmatprep.subr.mxu0 0.0
    %2869 = vmatpush1.xpose.msra.mxu0 0.0
    %2870 = vmatprep.subr.mxu0 0.0
    %2871 = vmatpush1.xpose.msra.mxu0 0.0
    %2872 = vmatprep.subr.mxu0 0.0
    %2873 = vmatpush1.xpose.msra.mxu0 0.0
    %2874 = vmatprep.subr.mxu0 0.0
    %2875 = vmatpush1.xpose.msra.mxu0 0.0
    %2876 = vmatprep.subr.mxu0 0.0
    %2877 = vmatpush1.xpose.msra.mxu0 0.0
    %2878 = vmatprep.subr.mxu0 0.0
    %2879 = vmatpush1.xpose.msra.mxu0 0.0
    %2880 = vmatprep.subr.mxu0 0.0
    %2881 = vmatpush1.xpose.msra.mxu0 0.0
    %2882 = vmatprep.subr.mxu0 0.0
    %2883 = vmatpush1.xpose.msra.mxu0 0.0
    %2884 = vmatprep.subr.mxu0 0.0
    %2885 = vmatpush1.xpose.msra.mxu0 0.0
    %2886 = vmatprep.subr.mxu0 0.0
    %2887 = vmatpush1.xpose.msra.mxu0 0.0
    %2888 = vmatprep.subr.mxu0 0.0
    %2889 = vmatpush1.xpose.msra.mxu0 0.0
    %2890 = vmatprep.subr.mxu0 0.0
    %2891 = vmatpush1.xpose.msra.mxu0 0.0
    %2892 = vmatprep.subr.mxu0 0.0
    %2893 = vmatpush1.xpose.msra.mxu0 0.0
    %2894 = vmatprep.subr.mxu0 0.0
    %2895 = vmatpush1.xpose.msra.mxu0 0.0
    %2896 = vmatprep.subr.mxu0 0.0
    %2897 = vmatpush1.xpose.msra.mxu0 0.0
    %2898 = vmatprep.subr.mxu0 0.0
    %2899 = vmatpush1.xpose.msra.mxu0 0.0
    %2900 = vmatprep.subr.mxu0 0.0
    %2901 = vmatpush1.xpose.msra.mxu0 0.0
    %2902 = vmatprep.subr.mxu0 0.0
    %2903 = vmatpush1.xpose.msra.mxu0 0.0
    %2904 = vmatprep.subr.mxu0 0.0
    %2905 = vmatpush1.xpose.msra.mxu0 0.0
    %2906 = vmatprep.subr.mxu0 0.0
    %2907 = vmatpush1.xpose.msra.mxu0 0.0
    %2908 = vmatprep.subr.mxu0 0.0
    %2909 = vmatpush1.xpose.msra.mxu0 0.0
    %2910 = vmatprep.subr.mxu0 0.0
    %2911 = vmatpush1.xpose.msra.mxu0 0.0
    %2912 = vmatprep.subr.mxu0 0.0
    %2913 = vmatpush1.xpose.msra.mxu0 0.0
    %2914 = vmatprep.subr.mxu0 0.0
    %2915 = vmatpush1.xpose.msra.mxu0 0.0
    %2916 = vmatprep.subr.mxu0 0.0
    %2917 = vmatpush1.xpose.msra.mxu0 0.0
    %2918 = vmatprep.subr.mxu0 0.0
    %2919 = vmatpush1.xpose.msra.mxu0 0.0
    %2920 = vmatprep.subr.mxu0 0.0
    %2921 = vmatpush1.xpose.msra.mxu0 0.0
    %2922 = vmatprep.subr.mxu0 0.0
    %2923 = vmatpush1.xpose.msra.mxu0 0.0
    %2924 = vmatprep.subr.mxu0 0.0
    %2925 = vmatpush1.xpose.msra.mxu0 0.0
    %v2926 = vand.u32 %v1983, 4294901760
    %2927 = vmatprep.mubr.f32.mxu0 %v2926
    %v2928 = vand.u32 %v1975, 4294901760
    %2929 = vmatmul.mubr.f32.gmra.mrb[0].mxu0 %v2928
    %v2930 = vpop.f32.mrb[0].mxu0
    %v2931 = vadd.f32 %v2857, %v2930
    %v2932 = vpop.f32.mrb[0].mxu0
    %2933 = vdwg.mxu0
    %v2934 = vand.u32 %v1984, 4294901760
    %2935 = vmatprep.subr.mxu0 %v2934
    %v2936 = vand.u32 %v1976, 4294901760
    %2937 = vmatpush1.xpose.msra.mxu0 %v2936
    %2938 = vmatprep.subr.mxu0 0.0
    %2939 = vmatpush1.xpose.msra.mxu0 0.0
    %2940 = vmatprep.subr.mxu0 0.0
    %2941 = vmatpush1.xpose.msra.mxu0 0.0
    %2942 = vmatprep.subr.mxu0 0.0
    %2943 = vmatpush1.xpose.msra.mxu0 0.0
    %2944 = vmatprep.subr.mxu0 0.0
    %2945 = vmatpush1.xpose.msra.mxu0 0.0
    %2946 = vmatprep.subr.mxu0 0.0
    %2947 = vmatpush1.xpose.msra.mxu0 0.0
    %2948 = vmatprep.subr.mxu0 0.0
    %2949 = vmatpush1.xpose.msra.mxu0 0.0
    %2950 = vmatprep.subr.mxu0 0.0
    %2951 = vmatpush1.xpose.msra.mxu0 0.0
    %2952 = vmatprep.subr.mxu0 0.0
    %2953 = vmatpush1.xpose.msra.mxu0 0.0
    %2954 = vmatprep.subr.mxu0 0.0
    %2955 = vmatpush1.xpose.msra.mxu0 0.0
    %2956 = vmatprep.subr.mxu0 0.0
    %2957 = vmatpush1.xpose.msra.mxu0 0.0
    %2958 = vmatprep.subr.mxu0 0.0
    %2959 = vmatpush1.xpose.msra.mxu0 0.0
    %2960 = vmatprep.subr.mxu0 0.0
    %2961 = vmatpush1.xpose.msra.mxu0 0.0
    %2962 = vmatprep.subr.mxu0 0.0
    %2963 = vmatpush1.xpose.msra.mxu0 0.0
    %2964 = vmatprep.subr.mxu0 0.0
    %2965 = vmatpush1.xpose.msra.mxu0 0.0
    %2966 = vmatprep.subr.mxu0 0.0
    %2967 = vmatpush1.xpose.msra.mxu0 0.0
    %2968 = vmatprep.subr.mxu0 0.0
    %2969 = vmatpush1.xpose.msra.mxu0 0.0
    %2970 = vmatprep.subr.mxu0 0.0
    %2971 = vmatpush1.xpose.msra.mxu0 0.0
    %2972 = vmatprep.subr.mxu0 0.0
    %2973 = vmatpush1.xpose.msra.mxu0 0.0
    %2974 = vmatprep.subr.mxu0 0.0
    %2975 = vmatpush1.xpose.msra.mxu0 0.0
    %2976 = vmatprep.subr.mxu0 0.0
    %2977 = vmatpush1.xpose.msra.mxu0 0.0
    %2978 = vmatprep.subr.mxu0 0.0
    %2979 = vmatpush1.xpose.msra.mxu0 0.0
    %2980 = vmatprep.subr.mxu0 0.0
    %2981 = vmatpush1.xpose.msra.mxu0 0.0
    %2982 = vmatprep.subr.mxu0 0.0
    %2983 = vmatpush1.xpose.msra.mxu0 0.0
    %2984 = vmatprep.subr.mxu0 0.0
    %2985 = vmatpush1.xpose.msra.mxu0 0.0
    %2986 = vmatprep.subr.mxu0 0.0
    %2987 = vmatpush1.xpose.msra.mxu0 0.0
    %2988 = vmatprep.subr.mxu0 0.0
    %2989 = vmatpush1.xpose.msra.mxu0 0.0
    %2990 = vmatprep.subr.mxu0 0.0
    %2991 = vmatpush1.xpose.msra.mxu0 0.0
    %2992 = vmatprep.subr.mxu0 0.0
    %2993 = vmatpush1.xpose.msra.mxu0 0.0
    %2994 = vmatprep.subr.mxu0 0.0
    %2995 = vmatpush1.xpose.msra.mxu0 0.0
    %2996 = vmatprep.subr.mxu0 0.0
    %2997 = vmatpush1.xpose.msra.mxu0 0.0
    %2998 = vmatprep.subr.mxu0 0.0
    %2999 = vmatpush1.xpose.msra.mxu0 0.0
    %v3000 = vand.u32 %v1984, 4294901760
    %v3001 = vsub.f32 %v1984, %v3000
    %v3002 = vand.u32 %v3001, 4294901760
    %v3003 = vsub.f32 %v3001, %v3002
    %v3004 = vand.u32 %v3003, 4294901760
    %3005 = vmatprep.mubr.f32.mxu0 %v3004
    %v3006 = vand.u32 %v1976, 4294901760
    %v3007 = vsub.f32 %v1976, %v3006
    %v3008 = vand.u32 %v3007, 4294901760
    %v3009 = vsub.f32 %v3007, %v3008
    %v3010 = vand.u32 %v3009, 4294901760
    %3011 = vmatmul.mubr.f32.gmra.mrb[0].mxu0 %v3010
    %v3012 = vpop.f32.mrb[0].mxu0
    %v3013 = vadd.f32 %v2931, %v3012
    %v3014 = vpop.f32.mrb[0].mxu0
    %3015 = vdwg.mxu0
    %v3016 = vand.u32 %v1984, 4294901760
    %v3017 = vsub.f32 %v1984, %v3016
    %v3018 = vand.u32 %v3017, 4294901760
    %v3019 = vsub.f32 %v3017, %v3018
    %v3020 = vand.u32 %v3019, 4294901760
    %3021 = vmatprep.subr.mxu0 %v3020
    %v3022 = vand.u32 %v1976, 4294901760
    %v3023 = vsub.f32 %v1976, %v3022
    %v3024 = vand.u32 %v3023, 4294901760
    %v3025 = vsub.f32 %v3023, %v3024
    %v3026 = vand.u32 %v3025, 4294901760
    %3027 = vmatpush1.xpose.msra.mxu0 %v3026
    %3028 = vmatprep.subr.mxu0 0.0
    %3029 = vmatpush1.xpose.msra.mxu0 0.0
    %3030 = vmatprep.subr.mxu0 0.0
    %3031 = vmatpush1.xpose.msra.mxu0 0.0
    %3032 = vmatprep.subr.mxu0 0.0
    %3033 = vmatpush1.xpose.msra.mxu0 0.0
    %3034 = vmatprep.subr.mxu0 0.0
    %3035 = vmatpush1.xpose.msra.mxu0 0.0
    %3036 = vmatprep.subr.mxu0 0.0
    %3037 = vmatpush1.xpose.msra.mxu0 0.0
    %3038 = vmatprep.subr.mxu0 0.0
    %3039 = vmatpush1.xpose.msra.mxu0 0.0
    %3040 = vmatprep.subr.mxu0 0.0
    %3041 = vmatpush1.xpose.msra.mxu0 0.0
    %3042 = vmatprep.subr.mxu0 0.0
    %3043 = vmatpush1.xpose.msra.mxu0 0.0
    %3044 = vmatprep.subr.mxu0 0.0
    %3045 = vmatpush1.xpose.msra.mxu0 0.0
    %3046 = vmatprep.subr.mxu0 0.0
    %3047 = vmatpush1.xpose.msra.mxu0 0.0
    %3048 = vmatprep.subr.mxu0 0.0
    %3049 = vmatpush1.xpose.msra.mxu0 0.0
    %3050 = vmatprep.subr.mxu0 0.0
    %3051 = vmatpush1.xpose.msra.mxu0 0.0
    %3052 = vmatprep.subr.mxu0 0.0
    %3053 = vmatpush1.xpose.msra.mxu0 0.0
    %3054 = vmatprep.subr.mxu0 0.0
    %3055 = vmatpush1.xpose.msra.mxu0 0.0
    %3056 = vmatprep.subr.mxu0 0.0
    %3057 = vmatpush1.xpose.msra.mxu0 0.0
    %3058 = vmatprep.subr.mxu0 0.0
    %3059 = vmatpush1.xpose.msra.mxu0 0.0
    %3060 = vmatprep.subr.mxu0 0.0
    %3061 = vmatpush1.xpose.msra.mxu0 0.0
    %3062 = vmatprep.subr.mxu0 0.0
    %3063 = vmatpush1.xpose.msra.mxu0 0.0
    %3064 = vmatprep.subr.mxu0 0.0
    %3065 = vmatpush1.xpose.msra.mxu0 0.0
    %3066 = vmatprep.subr.mxu0 0.0
    %3067 = vmatpush1.xpose.msra.mxu0 0.0
    %3068 = vmatprep.subr.mxu0 0.0
    %3069 = vmatpush1.xpose.msra.mxu0 0.0
    %3070 = vmatprep.subr.mxu0 0.0
    %3071 = vmatpush1.xpose.msra.mxu0 0.0
    %3072 = vmatprep.subr.mxu0 0.0
    %3073 = vmatpush1.xpose.msra.mxu0 0.0
    %3074 = vmatprep.subr.mxu0 0.0
    %3075 = vmatpush1.xpose.msra.mxu0 0.0
    %3076 = vmatprep.subr.mxu0 0.0
    %3077 = vmatpush1.xpose.msra.mxu0 0.0
    %3078 = vmatprep.subr.mxu0 0.0
    %3079 = vmatpush1.xpose.msra.mxu0 0.0
    %3080 = vmatprep.subr.mxu0 0.0
    %3081 = vmatpush1.xpose.msra.mxu0 0.0
    %3082 = vmatprep.subr.mxu0 0.0
    %3083 = vmatpush1.xpose.msra.mxu0 0.0
    %3084 = vmatprep.subr.mxu0 0.0
    %3085 = vmatpush1.xpose.msra.mxu0 0.0
    %3086 = vmatprep.subr.mxu0 0.0
    %3087 = vmatpush1.xpose.msra.mxu0 0.0
    %3088 = vmatprep.subr.mxu0 0.0
    %3089 = vmatpush1.xpose.msra.mxu0 0.0
    %v3090 = vand.u32 %v1984, 4294901760
    %3091 = vmatprep.mubr.f32.mxu0 %v3090
    %v3092 = vand.u32 %v1976, 4294901760
    %3093 = vmatmul.mubr.f32.gmra.mrb[0].mxu0 %v3092
    %v3094 = vpop.f32.mrb[0].mxu0
    %v3095 = vadd.f32 %v3013, %v3094
    %v3096 = vpop.f32.mrb[0].mxu0
    %3097 = vdwg.mxu0
    %v3098 = vand.u32 %v1984, 4294901760
    %v3099 = vsub.f32 %v1984, %v3098
    %3100 = vmatprep.subr.mxu0 %v3099
    %v3101 = vand.u32 %v1976, 4294901760
    %v3102 = vsub.f32 %v1976, %v3101
    %3103 = vmatpush1.xpose.msra.mxu0 %v3102
    %3104 = vmatprep.subr.mxu0 0.0
    %3105 = vmatpush1.xpose.msra.mxu0 0.0
    %3106 = vmatprep.subr.mxu0 0.0
    %3107 = vmatpush1.xpose.msra.mxu0 0.0
    %3108 = vmatprep.subr.mxu0 0.0
    %3109 = vmatpush1.xpose.msra.mxu0 0.0
    %3110 = vmatprep.subr.mxu0 0.0
    %3111 = vmatpush1.xpose.msra.mxu0 0.0
    %3112 = vmatprep.subr.mxu0 0.0
    %3113 = vmatpush1.xpose.msra.mxu0 0.0
    %3114 = vmatprep.subr.mxu0 0.0
    %3115 = vmatpush1.xpose.msra.mxu0 0.0
    %3116 = vmatprep.subr.mxu0 0.0
    %3117 = vmatpush1.xpose.msra.mxu0 0.0
    %3118 = vmatprep.subr.mxu0 0.0
    %3119 = vmatpush1.xpose.msra.mxu0 0.0
    %3120 = vmatprep.subr.mxu0 0.0
    %3121 = vmatpush1.xpose.msra.mxu0 0.0
    %3122 = vmatprep.subr.mxu0 0.0
    %3123 = vmatpush1.xpose.msra.mxu0 0.0
    %3124 = vmatprep.subr.mxu0 0.0
    %3125 = vmatpush1.xpose.msra.mxu0 0.0
    %3126 = vmatprep.subr.mxu0 0.0
    %3127 = vmatpush1.xpose.msra.mxu0 0.0
    %3128 = vmatprep.subr.mxu0 0.0
    %3129 = vmatpush1.xpose.msra.mxu0 0.0
    %3130 = vmatprep.subr.mxu0 0.0
    %3131 = vmatpush1.xpose.msra.mxu0 0.0
    %3132 = vmatprep.subr.mxu0 0.0
    %3133 = vmatpush1.xpose.msra.mxu0 0.0
    %3134 = vmatprep.subr.mxu0 0.0
    %3135 = vmatpush1.xpose.msra.mxu0 0.0
    %3136 = vmatprep.subr.mxu0 0.0
    %3137 = vmatpush1.xpose.msra.mxu0 0.0
    %3138 = vmatprep.subr.mxu0 0.0
    %3139 = vmatpush1.xpose.msra.mxu0 0.0
    %3140 = vmatprep.subr.mxu0 0.0
    %3141 = vmatpush1.xpose.msra.mxu0 0.0
    %3142 = vmatprep.subr.mxu0 0.0
    %3143 = vmatpush1.xpose.msra.mxu0 0.0
    %3144 = vmatprep.subr.mxu0 0.0
    %3145 = vmatpush1.xpose.msra.mxu0 0.0
    %3146 = vmatprep.subr.mxu0 0.0
    %3147 = vmatpush1.xpose.msra.mxu0 0.0
    %3148 = vmatprep.subr.mxu0 0.0
    %3149 = vmatpush1.xpose.msra.mxu0 0.0
    %3150 = vmatprep.subr.mxu0 0.0
    %3151 = vmatpush1.xpose.msra.mxu0 0.0
    %3152 = vmatprep.subr.mxu0 0.0
    %3153 = vmatpush1.xpose.msra.mxu0 0.0
    %3154 = vmatprep.subr.mxu0 0.0
    %3155 = vmatpush1.xpose.msra.mxu0 0.0
    %3156 = vmatprep.subr.mxu0 0.0
    %3157 = vmatpush1.xpose.msra.mxu0 0.0
    %3158 = vmatprep.subr.mxu0 0.0
    %3159 = vmatpush1.xpose.msra.mxu0 0.0
    %3160 = vmatprep.subr.mxu0 0.0
    %3161 = vmatpush1.xpose.msra.mxu0 0.0
    %3162 = vmatprep.subr.mxu0 0.0
    %3163 = vmatpush1.xpose.msra.mxu0 0.0
    %3164 = vmatprep.subr.mxu0 0.0
    %3165 = vmatpush1.xpose.msra.mxu0 0.0
    %v3166 = vand.u32 %v1984, 4294901760
    %v3167 = vsub.f32 %v1984, %v3166
    %3168 = vmatprep.mubr.f32.mxu0 %v3167
    %v3169 = vand.u32 %v1976, 4294901760
    %v3170 = vsub.f32 %v1976, %v3169
    %3171 = vmatmul.mubr.f32.gmra.mrb[0].mxu0 %v3170
    %v3172 = vpop.f32.mrb[0].mxu0
    %v3173 = vadd.f32 %v3095, %v3172
    %v3174 = vpop.f32.mrb[0].mxu0
    %3175 = vdwg.mxu0
    %v3176 = vand.u32 %v1984, 4294901760
    %3177 = vmatprep.subr.mxu0 %v3176
    %v3178 = vand.u32 %v1976, 4294901760
    %3179 = vmatpush1.xpose.msra.mxu0 %v3178
    %3180 = vmatprep.subr.mxu0 0.0
    %3181 = vmatpush1.xpose.msra.mxu0 0.0
    %3182 = vmatprep.subr.mxu0 0.0
    %3183 = vmatpush1.xpose.msra.mxu0 0.0
    %3184 = vmatprep.subr.mxu0 0.0
    %3185 = vmatpush1.xpose.msra.mxu0 0.0
    %3186 = vmatprep.subr.mxu0 0.0
    %3187 = vmatpush1.xpose.msra.mxu0 0.0
    %3188 = vmatprep.subr.mxu0 0.0
    %3189 = vmatpush1.xpose.msra.mxu0 0.0
    %3190 = vmatprep.subr.mxu0 0.0
    %3191 = vmatpush1.xpose.msra.mxu0 0.0
    %3192 = vmatprep.subr.mxu0 0.0
    %3193 = vmatpush1.xpose.msra.mxu0 0.0
    %3194 = vmatprep.subr.mxu0 0.0
    %3195 = vmatpush1.xpose.msra.mxu0 0.0
    %3196 = vmatprep.subr.mxu0 0.0
    %3197 = vmatpush1.xpose.msra.mxu0 0.0
    %3198 = vmatprep.subr.mxu0 0.0
    %3199 = vmatpush1.xpose.msra.mxu0 0.0
    %3200 = vmatprep.subr.mxu0 0.0
    %3201 = vmatpush1.xpose.msra.mxu0 0.0
    %3202 = vmatprep.subr.mxu0 0.0
    %3203 = vmatpush1.xpose.msra.mxu0 0.0
    %3204 = vmatprep.subr.mxu0 0.0
    %3205 = vmatpush1.xpose.msra.mxu0 0.0
    %3206 = vmatprep.subr.mxu0 0.0
    %3207 = vmatpush1.xpose.msra.mxu0 0.0
    %3208 = vmatprep.subr.mxu0 0.0
    %3209 = vmatpush1.xpose.msra.mxu0 0.0
    %3210 = vmatprep.subr.mxu0 0.0
    %3211 = vmatpush1.xpose.msra.mxu0 0.0
    %3212 = vmatprep.subr.mxu0 0.0
    %3213 = vmatpush1.xpose.msra.mxu0 0.0
    %3214 = vmatprep.subr.mxu0 0.0
    %3215 = vmatpush1.xpose.msra.mxu0 0.0
    %3216 = vmatprep.subr.mxu0 0.0
    %3217 = vmatpush1.xpose.msra.mxu0 0.0
    %3218 = vmatprep.subr.mxu0 0.0
    %3219 = vmatpush1.xpose.msra.mxu0 0.0
    %3220 = vmatprep.subr.mxu0 0.0
    %3221 = vmatpush1.xpose.msra.mxu0 0.0
    %3222 = vmatprep.subr.mxu0 0.0
    %3223 = vmatpush1.xpose.msra.mxu0 0.0
    %3224 = vmatprep.subr.mxu0 0.0
    %3225 = vmatpush1.xpose.msra.mxu0 0.0
    %3226 = vmatprep.subr.mxu0 0.0
    %3227 = vmatpush1.xpose.msra.mxu0 0.0
    %3228 = vmatprep.subr.mxu0 0.0
    %3229 = vmatpush1.xpose.msra.mxu0 0.0
    %3230 = vmatprep.subr.mxu0 0.0
    %3231 = vmatpush1.xpose.msra.mxu0 0.0
    %3232 = vmatprep.subr.mxu0 0.0
    %3233 = vmatpush1.xpose.msra.mxu0 0.0
    %3234 = vmatprep.subr.mxu0 0.0
    %3235 = vmatpush1.xpose.msra.mxu0 0.0
    %3236 = vmatprep.subr.mxu0 0.0
    %3237 = vmatpush1.xpose.msra.mxu0 0.0
    %3238 = vmatprep.subr.mxu0 0.0
    %3239 = vmatpush1.xpose.msra.mxu0 0.0
    %3240 = vmatprep.subr.mxu0 0.0
    %3241 = vmatpush1.xpose.msra.mxu0 0.0
    %v3242 = vand.u32 %v1984, 4294901760
    %v3243 = vsub.f32 %v1984, %v3242
    %v3244 = vand.u32 %v3243, 4294901760
    %3245 = vmatprep.mubr.f32.mxu0 %v3244
    %v3246 = vand.u32 %v1976, 4294901760
    %v3247 = vsub.f32 %v1976, %v3246
    %v3248 = vand.u32 %v3247, 4294901760
    %3249 = vmatmul.mubr.f32.gmra.mrb[0].mxu0 %v3248
    %v3250 = vpop.f32.mrb[0].mxu0
    %v3251 = vadd.f32 %v3173, %v3250
    %v3252 = vpop.f32.mrb[0].mxu0
    %3253 = vdwg.mxu0
    %v3254 = vand.u32 %v1984, 4294901760
    %v3255 = vsub.f32 %v1984, %v3254
    %v3256 = vand.u32 %v3255, 4294901760
    %3257 = vmatprep.subr.mxu0 %v3256
    %v3258 = vand.u32 %v1976, 4294901760
    %v3259 = vsub.f32 %v1976, %v3258
    %v3260 = vand.u32 %v3259, 4294901760
    %3261 = vmatpush1.xpose.msra.mxu0 %v3260
    %3262 = vmatprep.subr.mxu0 0.0
    %3263 = vmatpush1.xpose.msra.mxu0 0.0
    %3264 = vmatprep.subr.mxu0 0.0
    %3265 = vmatpush1.xpose.msra.mxu0 0.0
    %3266 = vmatprep.subr.mxu0 0.0
    %3267 = vmatpush1.xpose.msra.mxu0 0.0
    %3268 = vmatprep.subr.mxu0 0.0
    %3269 = vmatpush1.xpose.msra.mxu0 0.0
    %3270 = vmatprep.subr.mxu0 0.0
    %3271 = vmatpush1.xpose.msra.mxu0 0.0
    %3272 = vmatprep.subr.mxu0 0.0
    %3273 = vmatpush1.xpose.msra.mxu0 0.0
    %3274 = vmatprep.subr.mxu0 0.0
    %3275 = vmatpush1.xpose.msra.mxu0 0.0
    %3276 = vmatprep.subr.mxu0 0.0
    %3277 = vmatpush1.xpose.msra.mxu0 0.0
    %3278 = vmatprep.subr.mxu0 0.0
    %3279 = vmatpush1.xpose.msra.mxu0 0.0
    %3280 = vmatprep.subr.mxu0 0.0
    %3281 = vmatpush1.xpose.msra.mxu0 0.0
    %3282 = vmatprep.subr.mxu0 0.0
    %3283 = vmatpush1.xpose.msra.mxu0 0.0
    %3284 = vmatprep.subr.mxu0 0.0
    %3285 = vmatpush1.xpose.msra.mxu0 0.0
    %3286 = vmatprep.subr.mxu0 0.0
    %3287 = vmatpush1.xpose.msra.mxu0 0.0
    %3288 = vmatprep.subr.mxu0 0.0
    %3289 = vmatpush1.xpose.msra.mxu0 0.0
    %3290 = vmatprep.subr.mxu0 0.0
    %3291 = vmatpush1.xpose.msra.mxu0 0.0
    %3292 = vmatprep.subr.mxu0 0.0
    %3293 = vmatpush1.xpose.msra.mxu0 0.0
    %3294 = vmatprep.subr.mxu0 0.0
    %3295 = vmatpush1.xpose.msra.mxu0 0.0
    %3296 = vmatprep.subr.mxu0 0.0
    %3297 = vmatpush1.xpose.msra.mxu0 0.0
    %3298 = vmatprep.subr.mxu0 0.0
    %3299 = vmatpush1.xpose.msra.mxu0 0.0
    %3300 = vmatprep.subr.mxu0 0.0
    %3301 = vmatpush1.xpose.msra.mxu0 0.0
    %3302 = vmatprep.subr.mxu0 0.0
    %3303 = vmatpush1.xpose.msra.mxu0 0.0
    %3304 = vmatprep.subr.mxu0 0.0
    %3305 = vmatpush1.xpose.msra.mxu0 0.0
    %3306 = vmatprep.subr.mxu0 0.0
    %3307 = vmatpush1.xpose.msra.mxu0 0.0
    %3308 = vmatprep.subr.mxu0 0.0
    %3309 = vmatpush1.xpose.msra.mxu0 0.0
    %3310 = vmatprep.subr.mxu0 0.0
    %3311 = vmatpush1.xpose.msra.mxu0 0.0
    %3312 = vmatprep.subr.mxu0 0.0
    %3313 = vmatpush1.xpose.msra.mxu0 0.0
    %3314 = vmatprep.subr.mxu0 0.0
    %3315 = vmatpush1.xpose.msra.mxu0 0.0
    %3316 = vmatprep.subr.mxu0 0.0
    %3317 = vmatpush1.xpose.msra.mxu0 0.0
    %3318 = vmatprep.subr.mxu0 0.0
    %3319 = vmatpush1.xpose.msra.mxu0 0.0
    %3320 = vmatprep.subr.mxu0 0.0
    %3321 = vmatpush1.xpose.msra.mxu0 0.0
    %3322 = vmatprep.subr.mxu0 0.0
    %3323 = vmatpush1.xpose.msra.mxu0 0.0
    %v3324 = vand.u32 %v1984, 4294901760
    %3325 = vmatprep.mubr.f32.mxu0 %v3324
    %v3326 = vand.u32 %v1976, 4294901760
    %3327 = vmatmul.mubr.f32.gmra.mrb[0].mxu0 %v3326
    %v3328 = vpop.f32.mrb[0].mxu0
    %v3329 = vadd.f32 %v3251, %v3328
    %v3330 = vpop.f32.mrb[0].mxu0
    %3331 = vdwg.mxu0
    %v3332 = vand.u32 %v1984, 4294901760
    %3333 = vmatprep.subr.mxu0 %v3332
    %v3334 = vand.u32 %v1976, 4294901760
    %3335 = vmatpush1.xpose.msra.mxu0 %v3334
    %3336 = vmatprep.subr.mxu0 0.0
    %3337 = vmatpush1.xpose.msra.mxu0 0.0
    %3338 = vmatprep.subr.mxu0 0.0
    %3339 = vmatpush1.xpose.msra.mxu0 0.0
    %3340 = vmatprep.subr.mxu0 0.0
    %3341 = vmatpush1.xpose.msra.mxu0 0.0
    %3342 = vmatprep.subr.mxu0 0.0
    %3343 = vmatpush1.xpose.msra.mxu0 0.0
    %3344 = vmatprep.subr.mxu0 0.0
    %3345 = vmatpush1.xpose.msra.mxu0 0.0
    %3346 = vmatprep.subr.mxu0 0.0
    %3347 = vmatpush1.xpose.msra.mxu0 0.0
    %3348 = vmatprep.subr.mxu0 0.0
    %3349 = vmatpush1.xpose.msra.mxu0 0.0
    %3350 = vmatprep.subr.mxu0 0.0
    %3351 = vmatpush1.xpose.msra.mxu0 0.0
    %3352 = vmatprep.subr.mxu0 0.0
    %3353 = vmatpush1.xpose.msra.mxu0 0.0
    %3354 = vmatprep.subr.mxu0 0.0
    %3355 = vmatpush1.xpose.msra.mxu0 0.0
    %3356 = vmatprep.subr.mxu0 0.0
    %3357 = vmatpush1.xpose.msra.mxu0 0.0
    %3358 = vmatprep.subr.mxu0 0.0
    %3359 = vmatpush1.xpose.msra.mxu0 0.0
    %3360 = vmatprep.subr.mxu0 0.0
    %3361 = vmatpush1.xpose.msra.mxu0 0.0
    %3362 = vmatprep.subr.mxu0 0.0
    %3363 = vmatpush1.xpose.msra.mxu0 0.0
    %3364 = vmatprep.subr.mxu0 0.0
    %3365 = vmatpush1.xpose.msra.mxu0 0.0
    %3366 = vmatprep.subr.mxu0 0.0
    %3367 = vmatpush1.xpose.msra.mxu0 0.0
    %3368 = vmatprep.subr.mxu0 0.0
    %3369 = vmatpush1.xpose.msra.mxu0 0.0
    %3370 = vmatprep.subr.mxu0 0.0
    %3371 = vmatpush1.xpose.msra.mxu0 0.0
    %3372 = vmatprep.subr.mxu0 0.0
    %3373 = vmatpush1.xpose.msra.mxu0 0.0
    %3374 = vmatprep.subr.mxu0 0.0
    %3375 = vmatpush1.xpose.msra.mxu0 0.0
    %3376 = vmatprep.subr.mxu0 0.0
    %3377 = vmatpush1.xpose.msra.mxu0 0.0
    %3378 = vmatprep.subr.mxu0 0.0
    %3379 = vmatpush1.xpose.msra.mxu0 0.0
    %3380 = vmatprep.subr.mxu0 0.0
    %3381 = vmatpush1.xpose.msra.mxu0 0.0
    %3382 = vmatprep.subr.mxu0 0.0
    %3383 = vmatpush1.xpose.msra.mxu0 0.0
    %3384 = vmatprep.subr.mxu0 0.0
    %3385 = vmatpush1.xpose.msra.mxu0 0.0
    %3386 = vmatprep.subr.mxu0 0.0
    %3387 = vmatpush1.xpose.msra.mxu0 0.0
    %3388 = vmatprep.subr.mxu0 0.0
    %3389 = vmatpush1.xpose.msra.mxu0 0.0
    %3390 = vmatprep.subr.mxu0 0.0
    %3391 = vmatpush1.xpose.msra.mxu0 0.0
    %3392 = vmatprep.subr.mxu0 0.0
    %3393 = vmatpush1.xpose.msra.mxu0 0.0
    %3394 = vmatprep.subr.mxu0 0.0
    %3395 = vmatpush1.xpose.msra.mxu0 0.0
    %3396 = vmatprep.subr.mxu0 0.0
    %3397 = vmatpush1.xpose.msra.mxu0 0.0
    %v3398 = vand.u32 %v1984, 4294901760
    %3399 = vmatprep.mubr.f32.mxu0 %v3398
    %v3400 = vand.u32 %v1976, 4294901760
    %3401 = vmatmul.mubr.f32.gmra.mrb[0].mxu0 %v3400
    %v3402 = vpop.f32.mrb[0].mxu0
    %v3403 = vadd.f32 %v3329, %v3402
    %v3404 = vpop.f32.mrb[0].mxu0
    %3405 = vdwg.mxu0
    %v3406 = vand.u32 %v1985, 4294901760
    %3407 = vmatprep.subr.mxu0 %v3406
    %v3408 = vand.u32 %v1977, 4294901760
    %3409 = vmatpush1.xpose.msra.mxu0 %v3408
    %3410 = vmatprep.subr.mxu0 0.0
    %3411 = vmatpush1.xpose.msra.mxu0 0.0
    %3412 = vmatprep.subr.mxu0 0.0
    %3413 = vmatpush1.xpose.msra.mxu0 0.0
    %3414 = vmatprep.subr.mxu0 0.0
    %3415 = vmatpush1.xpose.msra.mxu0 0.0
    %3416 = vmatprep.subr.mxu0 0.0
    %3417 = vmatpush1.xpose.msra.mxu0 0.0
    %3418 = vmatprep.subr.mxu0 0.0
    %3419 = vmatpush1.xpose.msra.mxu0 0.0
    %3420 = vmatprep.subr.mxu0 0.0
    %3421 = vmatpush1.xpose.msra.mxu0 0.0
    %3422 = vmatprep.subr.mxu0 0.0
    %3423 = vmatpush1.xpose.msra.mxu0 0.0
    %3424 = vmatprep.subr.mxu0 0.0
    %3425 = vmatpush1.xpose.msra.mxu0 0.0
    %3426 = vmatprep.subr.mxu0 0.0
    %3427 = vmatpush1.xpose.msra.mxu0 0.0
    %3428 = vmatprep.subr.mxu0 0.0
    %3429 = vmatpush1.xpose.msra.mxu0 0.0
    %3430 = vmatprep.subr.mxu0 0.0
    %3431 = vmatpush1.xpose.msra.mxu0 0.0
    %3432 = vmatprep.subr.mxu0 0.0
    %3433 = vmatpush1.xpose.msra.mxu0 0.0
    %3434 = vmatprep.subr.mxu0 0.0
    %3435 = vmatpush1.xpose.msra.mxu0 0.0
    %3436 = vmatprep.subr.mxu0 0.0
    %3437 = vmatpush1.xpose.msra.mxu0 0.0
    %3438 = vmatprep.subr.mxu0 0.0
    %3439 = vmatpush1.xpose.msra.mxu0 0.0
    %3440 = vmatprep.subr.mxu0 0.0
    %3441 = vmatpush1.xpose.msra.mxu0 0.0
    %3442 = vmatprep.subr.mxu0 0.0
    %3443 = vmatpush1.xpose.msra.mxu0 0.0
    %3444 = vmatprep.subr.mxu0 0.0
    %3445 = vmatpush1.xpose.msra.mxu0 0.0
    %3446 = vmatprep.subr.mxu0 0.0
    %3447 = vmatpush1.xpose.msra.mxu0 0.0
    %3448 = vmatprep.subr.mxu0 0.0
    %3449 = vmatpush1.xpose.msra.mxu0 0.0
    %3450 = vmatprep.subr.mxu0 0.0
    %3451 = vmatpush1.xpose.msra.mxu0 0.0
    %3452 = vmatprep.subr.mxu0 0.0
    %3453 = vmatpush1.xpose.msra.mxu0 0.0
    %3454 = vmatprep.subr.mxu0 0.0
    %3455 = vmatpush1.xpose.msra.mxu0 0.0
    %3456 = vmatprep.subr.mxu0 0.0
    %3457 = vmatpush1.xpose.msra.mxu0 0.0
    %3458 = vmatprep.subr.mxu0 0.0
    %3459 = vmatpush1.xpose.msra.mxu0 0.0
    %3460 = vmatprep.subr.mxu0 0.0
    %3461 = vmatpush1.xpose.msra.mxu0 0.0
    %3462 = vmatprep.subr.mxu0 0.0
    %3463 = vmatpush1.xpose.msra.mxu0 0.0
    %3464 = vmatprep.subr.mxu0 0.0
    %3465 = vmatpush1.xpose.msra.mxu0 0.0
    %3466 = vmatprep.subr.mxu0 0.0
    %3467 = vmatpush1.xpose.msra.mxu0 0.0
    %3468 = vmatprep.subr.mxu0 0.0
    %3469 = vmatpush1.xpose.msra.mxu0 0.0
    %3470 = vmatprep.subr.mxu0 0.0
    %3471 = vmatpush1.xpose.msra.mxu0 0.0
    %v3472 = vand.u32 %v1985, 4294901760
    %v3473 = vsub.f32 %v1985, %v3472
    %v3474 = vand.u32 %v3473, 4294901760
    %v3475 = vsub.f32 %v3473, %v3474
    %v3476 = vand.u32 %v3475, 4294901760
    %3477 = vmatprep.mubr.f32.mxu0 %v3476
    %v3478 = vand.u32 %v1977, 4294901760
    %v3479 = vsub.f32 %v1977, %v3478
    %v3480 = vand.u32 %v3479, 4294901760
    %v3481 = vsub.f32 %v3479, %v3480
    %v3482 = vand.u32 %v3481, 4294901760
    %3483 = vmatmul.mubr.f32.gmra.mrb[0].mxu0 %v3482
    %v3484 = vpop.f32.mrb[0].mxu0
    %v3485 = vadd.f32 %v3403, %v3484
    %v3486 = vpop.f32.mrb[0].mxu0
    %3487 = vdwg.mxu0
    %v3488 = vand.u32 %v1985, 4294901760
    %v3489 = vsub.f32 %v1985, %v3488
    %v3490 = vand.u32 %v3489, 4294901760
    %v3491 = vsub.f32 %v3489, %v3490
    %v3492 = vand.u32 %v3491, 4294901760
    %3493 = vmatprep.subr.mxu0 %v3492
    %v3494 = vand.u32 %v1977, 4294901760
    %v3495 = vsub.f32 %v1977, %v3494
    %v3496 = vand.u32 %v3495, 4294901760
    %v3497 = vsub.f32 %v3495, %v3496
    %v3498 = vand.u32 %v3497, 4294901760
    %3499 = vmatpush1.xpose.msra.mxu0 %v3498
    %3500 = vmatprep.subr.mxu0 0.0
    %3501 = vmatpush1.xpose.msra.mxu0 0.0
    %3502 = vmatprep.subr.mxu0 0.0
    %3503 = vmatpush1.xpose.msra.mxu0 0.0
    %3504 = vmatprep.subr.mxu0 0.0
    %3505 = vmatpush1.xpose.msra.mxu0 0.0
    %3506 = vmatprep.subr.mxu0 0.0
    %3507 = vmatpush1.xpose.msra.mxu0 0.0
    %3508 = vmatprep.subr.mxu0 0.0
    %3509 = vmatpush1.xpose.msra.mxu0 0.0
    %3510 = vmatprep.subr.mxu0 0.0
    %3511 = vmatpush1.xpose.msra.mxu0 0.0
    %3512 = vmatprep.subr.mxu0 0.0
    %3513 = vmatpush1.xpose.msra.mxu0 0.0
    %3514 = vmatprep.subr.mxu0 0.0
    %3515 = vmatpush1.xpose.msra.mxu0 0.0
    %3516 = vmatprep.subr.mxu0 0.0
    %3517 = vmatpush1.xpose.msra.mxu0 0.0
    %3518 = vmatprep.subr.mxu0 0.0
    %3519 = vmatpush1.xpose.msra.mxu0 0.0
    %3520 = vmatprep.subr.mxu0 0.0
    %3521 = vmatpush1.xpose.msra.mxu0 0.0
    %3522 = vmatprep.subr.mxu0 0.0
    %3523 = vmatpush1.xpose.msra.mxu0 0.0
    %3524 = vmatprep.subr.mxu0 0.0
    %3525 = vmatpush1.xpose.msra.mxu0 0.0
    %3526 = vmatprep.subr.mxu0 0.0
    %3527 = vmatpush1.xpose.msra.mxu0 0.0
    %3528 = vmatprep.subr.mxu0 0.0
    %3529 = vmatpush1.xpose.msra.mxu0 0.0
    %3530 = vmatprep.subr.mxu0 0.0
    %3531 = vmatpush1.xpose.msra.mxu0 0.0
    %3532 = vmatprep.subr.mxu0 0.0
    %3533 = vmatpush1.xpose.msra.mxu0 0.0
    %3534 = vmatprep.subr.mxu0 0.0
    %3535 = vmatpush1.xpose.msra.mxu0 0.0
    %3536 = vmatprep.subr.mxu0 0.0
    %3537 = vmatpush1.xpose.msra.mxu0 0.0
    %3538 = vmatprep.subr.mxu0 0.0
    %3539 = vmatpush1.xpose.msra.mxu0 0.0
    %3540 = vmatprep.subr.mxu0 0.0
    %3541 = vmatpush1.xpose.msra.mxu0 0.0
    %3542 = vmatprep.subr.mxu0 0.0
    %3543 = vmatpush1.xpose.msra.mxu0 0.0
    %3544 = vmatprep.subr.mxu0 0.0
    %3545 = vmatpush1.xpose.msra.mxu0 0.0
    %3546 = vmatprep.subr.mxu0 0.0
    %3547 = vmatpush1.xpose.msra.mxu0 0.0
    %3548 = vmatprep.subr.mxu0 0.0
    %3549 = vmatpush1.xpose.msra.mxu0 0.0
    %3550 = vmatprep.subr.mxu0 0.0
    %3551 = vmatpush1.xpose.msra.mxu0 0.0
    %3552 = vmatprep.subr.mxu0 0.0
    %3553 = vmatpush1.xpose.msra.mxu0 0.0
    %3554 = vmatprep.subr.mxu0 0.0
    %3555 = vmatpush1.xpose.msra.mxu0 0.0
    %3556 = vmatprep.subr.mxu0 0.0
    %3557 = vmatpush1.xpose.msra.mxu0 0.0
    %3558 = vmatprep.subr.mxu0 0.0
    %3559 = vmatpush1.xpose.msra.mxu0 0.0
    %3560 = vmatprep.subr.mxu0 0.0
    %3561 = vmatpush1.xpose.msra.mxu0 0.0
    %v3562 = vand.u32 %v1985, 4294901760
    %3563 = vmatprep.mubr.f32.mxu0 %v3562
    %v3564 = vand.u32 %v1977, 4294901760
    %3565 = vmatmul.mubr.f32.gmra.mrb[0].mxu0 %v3564
    %v3566 = vpop.f32.mrb[0].mxu0
    %v3567 = vadd.f32 %v3485, %v3566
    %v3568 = vpop.f32.mrb[0].mxu0
    %3569 = vdwg.mxu0
    %v3570 = vand.u32 %v1985, 4294901760
    %v3571 = vsub.f32 %v1985, %v3570
    %3572 = vmatprep.subr.mxu0 %v3571
    %v3573 = vand.u32 %v1977, 4294901760
    %v3574 = vsub.f32 %v1977, %v3573
    %3575 = vmatpush1.xpose.msra.mxu0 %v3574
    %3576 = vmatprep.subr.mxu0 0.0
    %3577 = vmatpush1.xpose.msra.mxu0 0.0
    %3578 = vmatprep.subr.mxu0 0.0
    %3579 = vmatpush1.xpose.msra.mxu0 0.0
    %3580 = vmatprep.subr.mxu0 0.0
    %3581 = vmatpush1.xpose.msra.mxu0 0.0
    %3582 = vmatprep.subr.mxu0 0.0
    %3583 = vmatpush1.xpose.msra.mxu0 0.0
    %3584 = vmatprep.subr.mxu0 0.0
    %3585 = vmatpush1.xpose.msra.mxu0 0.0
    %3586 = vmatprep.subr.mxu0 0.0
    %3587 = vmatpush1.xpose.msra.mxu0 0.0
    %3588 = vmatprep.subr.mxu0 0.0
    %3589 = vmatpush1.xpose.msra.mxu0 0.0
    %3590 = vmatprep.subr.mxu0 0.0
    %3591 = vmatpush1.xpose.msra.mxu0 0.0
    %3592 = vmatprep.subr.mxu0 0.0
    %3593 = vmatpush1.xpose.msra.mxu0 0.0
    %3594 = vmatprep.subr.mxu0 0.0
    %3595 = vmatpush1.xpose.msra.mxu0 0.0
    %3596 = vmatprep.subr.mxu0 0.0
    %3597 = vmatpush1.xpose.msra.mxu0 0.0
    %3598 = vmatprep.subr.mxu0 0.0
    %3599 = vmatpush1.xpose.msra.mxu0 0.0
    %3600 = vmatprep.subr.mxu0 0.0
    %3601 = vmatpush1.xpose.msra.mxu0 0.0
    %3602 = vmatprep.subr.mxu0 0.0
    %3603 = vmatpush1.xpose.msra.mxu0 0.0
    %3604 = vmatprep.subr.mxu0 0.0
    %3605 = vmatpush1.xpose.msra.mxu0 0.0
    %3606 = vmatprep.subr.mxu0 0.0
    %3607 = vmatpush1.xpose.msra.mxu0 0.0
    %3608 = vmatprep.subr.mxu0 0.0
    %3609 = vmatpush1.xpose.msra.mxu0 0.0
    %3610 = vmatprep.subr.mxu0 0.0
    %3611 = vmatpush1.xpose.msra.mxu0 0.0
    %3612 = vmatprep.subr.mxu0 0.0
    %3613 = vmatpush1.xpose.msra.mxu0 0.0
    %3614 = vmatprep.subr.mxu0 0.0
    %3615 = vmatpush1.xpose.msra.mxu0 0.0
    %3616 = vmatprep.subr.mxu0 0.0
    %3617 = vmatpush1.xpose.msra.mxu0 0.0
    %3618 = vmatprep.subr.mxu0 0.0
    %3619 = vmatpush1.xpose.msra.mxu0 0.0
    %3620 = vmatprep.subr.mxu0 0.0
    %3621 = vmatpush1.xpose.msra.mxu0 0.0
    %3622 = vmatprep.subr.mxu0 0.0
    %3623 = vmatpush1.xpose.msra.mxu0 0.0
    %3624 = vmatprep.subr.mxu0 0.0
    %3625 = vmatpush1.xpose.msra.mxu0 0.0
    %3626 = vmatprep.subr.mxu0 0.0
    %3627 = vmatpush1.xpose.msra.mxu0 0.0
    %3628 = vmatprep.subr.mxu0 0.0
    %3629 = vmatpush1.xpose.msra.mxu0 0.0
    %3630 = vmatprep.subr.mxu0 0.0
    %3631 = vmatpush1.xpose.msra.mxu0 0.0
    %3632 = vmatprep.subr.mxu0 0.0
    %3633 = vmatpush1.xpose.msra.mxu0 0.0
    %3634 = vmatprep.subr.mxu0 0.0
    %3635 = vmatpush1.xpose.msra.mxu0 0.0
    %3636 = vmatprep.subr.mxu0 0.0
    %3637 = vmatpush1.xpose.msra.mxu0 0.0
    %v3638 = vand.u32 %v1985, 4294901760
    %v3639 = vsub.f32 %v1985, %v3638
    %3640 = vmatprep.mubr.f32.mxu0 %v3639
    %v3641 = vand.u32 %v1977, 4294901760
    %v3642 = vsub.f32 %v1977, %v3641
    %3643 = vmatmul.mubr.f32.gmra.mrb[0].mxu0 %v3642
    %v3644 = vpop.f32.mrb[0].mxu0
    %v3645 = vadd.f32 %v3567, %v3644
    %v3646 = vpop.f32.mrb[0].mxu0
    %3647 = vdwg.mxu0
    %v3648 = vand.u32 %v1985, 4294901760
    %3649 = vmatprep.subr.mxu0 %v3648
    %v3650 = vand.u32 %v1977, 4294901760
    %3651 = vmatpush1.xpose.msra.mxu0 %v3650
    %3652 = vmatprep.subr.mxu0 0.0
    %3653 = vmatpush1.xpose.msra.mxu0 0.0
    %3654 = vmatprep.subr.mxu0 0.0
    %3655 = vmatpush1.xpose.msra.mxu0 0.0
    %3656 = vmatprep.subr.mxu0 0.0
    %3657 = vmatpush1.xpose.msra.mxu0 0.0
    %3658 = vmatprep.subr.mxu0 0.0
    %3659 = vmatpush1.xpose.msra.mxu0 0.0
    %3660 = vmatprep.subr.mxu0 0.0
    %3661 = vmatpush1.xpose.msra.mxu0 0.0
    %3662 = vmatprep.subr.mxu0 0.0
    %3663 = vmatpush1.xpose.msra.mxu0 0.0
    %3664 = vmatprep.subr.mxu0 0.0
    %3665 = vmatpush1.xpose.msra.mxu0 0.0
    %3666 = vmatprep.subr.mxu0 0.0
    %3667 = vmatpush1.xpose.msra.mxu0 0.0
    %3668 = vmatprep.subr.mxu0 0.0
    %3669 = vmatpush1.xpose.msra.mxu0 0.0
    %3670 = vmatprep.subr.mxu0 0.0
    %3671 = vmatpush1.xpose.msra.mxu0 0.0
    %3672 = vmatprep.subr.mxu0 0.0
    %3673 = vmatpush1.xpose.msra.mxu0 0.0
    %3674 = vmatprep.subr.mxu0 0.0
    %3675 = vmatpush1.xpose.msra.mxu0 0.0
    %3676 = vmatprep.subr.mxu0 0.0
    %3677 = vmatpush1.xpose.msra.mxu0 0.0
    %3678 = vmatprep.subr.mxu0 0.0
    %3679 = vmatpush1.xpose.msra.mxu0 0.0
    %3680 = vmatprep.subr.mxu0 0.0
    %3681 = vmatpush1.xpose.msra.mxu0 0.0
    %3682 = vmatprep.subr.mxu0 0.0
    %3683 = vmatpush1.xpose.msra.mxu0 0.0
    %3684 = vmatprep.subr.mxu0 0.0
    %3685 = vmatpush1.xpose.msra.mxu0 0.0
    %3686 = vmatprep.subr.mxu0 0.0
    %3687 = vmatpush1.xpose.msra.mxu0 0.0
    %3688 = vmatprep.subr.mxu0 0.0
    %3689 = vmatpush1.xpose.msra.mxu0 0.0
    %3690 = vmatprep.subr.mxu0 0.0
    %3691 = vmatpush1.xpose.msra.mxu0 0.0
    %3692 = vmatprep.subr.mxu0 0.0
    %3693 = vmatpush1.xpose.msra.mxu0 0.0
    %3694 = vmatprep.subr.mxu0 0.0
    %3695 = vmatpush1.xpose.msra.mxu0 0.0
    %3696 = vmatprep.subr.mxu0 0.0
    %3697 = vmatpush1.xpose.msra.mxu0 0.0
    %3698 = vmatprep.subr.mxu0 0.0
    %3699 = vmatpush1.xpose.msra.mxu0 0.0
    %3700 = vmatprep.subr.mxu0 0.0
    %3701 = vmatpush1.xpose.msra.mxu0 0.0
    %3702 = vmatprep.subr.mxu0 0.0
    %3703 = vmatpush1.xpose.msra.mxu0 0.0
    %3704 = vmatprep.subr.mxu0 0.0
    %3705 = vmatpush1.xpose.msra.mxu0 0.0
    %3706 = vmatprep.subr.mxu0 0.0
    %3707 = vmatpush1.xpose.msra.mxu0 0.0
    %3708 = vmatprep.subr.mxu0 0.0
    %3709 = vmatpush1.xpose.msra.mxu0 0.0
    %3710 = vmatprep.subr.mxu0 0.0
    %3711 = vmatpush1.xpose.msra.mxu0 0.0
    %3712 = vmatprep.subr.mxu0 0.0
    %3713 = vmatpush1.xpose.msra.mxu0 0.0
    %v3714 = vand.u32 %v1985, 4294901760
    %v3715 = vsub.f32 %v1985, %v3714
    %v3716 = vand.u32 %v3715, 4294901760
    %3717 = vmatprep.mubr.f32.mxu0 %v3716
    %v3718 = vand.u32 %v1977, 4294901760
    %v3719 = vsub.f32 %v1977, %v3718
    %v3720 = vand.u32 %v3719, 4294901760
    %3721 = vmatmul.mubr.f32.gmra.mrb[0].mxu0 %v3720
    %v3722 = vpop.f32.mrb[0].mxu0
    %v3723 = vadd.f32 %v3645, %v3722
    %v3724 = vpop.f32.mrb[0].mxu0
    %3725 = vdwg.mxu0
    %v3726 = vand.u32 %v1985, 4294901760
    %v3727 = vsub.f32 %v1985, %v3726
    %v3728 = vand.u32 %v3727, 4294901760
    %3729 = vmatprep.subr.mxu0 %v3728
    %v3730 = vand.u32 %v1977, 4294901760
    %v3731 = vsub.f32 %v1977, %v3730
    %v3732 = vand.u32 %v3731, 4294901760
    %3733 = vmatpush1.xpose.msra.mxu0 %v3732
    %3734 = vmatprep.subr.mxu0 0.0
    %3735 = vmatpush1.xpose.msra.mxu0 0.0
    %3736 = vmatprep.subr.mxu0 0.0
    %3737 = vmatpush1.xpose.msra.mxu0 0.0
    %3738 = vmatprep.subr.mxu0 0.0
    %3739 = vmatpush1.xpose.msra.mxu0 0.0
    %3740 = vmatprep.subr.mxu0 0.0
    %3741 = vmatpush1.xpose.msra.mxu0 0.0
    %3742 = vmatprep.subr.mxu0 0.0
    %3743 = vmatpush1.xpose.msra.mxu0 0.0
    %3744 = vmatprep.subr.mxu0 0.0
    %3745 = vmatpush1.xpose.msra.mxu0 0.0
    %3746 = vmatprep.subr.mxu0 0.0
    %3747 = vmatpush1.xpose.msra.mxu0 0.0
    %3748 = vmatprep.subr.mxu0 0.0
    %3749 = vmatpush1.xpose.msra.mxu0 0.0
    %3750 = vmatprep.subr.mxu0 0.0
    %3751 = vmatpush1.xpose.msra.mxu0 0.0
    %3752 = vmatprep.subr.mxu0 0.0
    %3753 = vmatpush1.xpose.msra.mxu0 0.0
    %3754 = vmatprep.subr.mxu0 0.0
    %3755 = vmatpush1.xpose.msra.mxu0 0.0
    %3756 = vmatprep.subr.mxu0 0.0
    %3757 = vmatpush1.xpose.msra.mxu0 0.0
    %3758 = vmatprep.subr.mxu0 0.0
    %3759 = vmatpush1.xpose.msra.mxu0 0.0
    %3760 = vmatprep.subr.mxu0 0.0
    %3761 = vmatpush1.xpose.msra.mxu0 0.0
    %3762 = vmatprep.subr.mxu0 0.0
    %3763 = vmatpush1.xpose.msra.mxu0 0.0
    %3764 = vmatprep.subr.mxu0 0.0
    %3765 = vmatpush1.xpose.msra.mxu0 0.0
    %3766 = vmatprep.subr.mxu0 0.0
    %3767 = vmatpush1.xpose.msra.mxu0 0.0
    %3768 = vmatprep.subr.mxu0 0.0
    %3769 = vmatpush1.xpose.msra.mxu0 0.0
    %3770 = vmatprep.subr.mxu0 0.0
    %3771 = vmatpush1.xpose.msra.mxu0 0.0
    %3772 = vmatprep.subr.mxu0 0.0
    %3773 = vmatpush1.xpose.msra.mxu0 0.0
    %3774 = vmatprep.subr.mxu0 0.0
    %3775 = vmatpush1.xpose.msra.mxu0 0.0
    %3776 = vmatprep.subr.mxu0 0.0
    %3777 = vmatpush1.xpose.msra.mxu0 0.0
    %3778 = vmatprep.subr.mxu0 0.0
    %3779 = vmatpush1.xpose.msra.mxu0 0.0
    %3780 = vmatprep.subr.mxu0 0.0
    %3781 = vmatpush1.xpose.msra.mxu0 0.0
    %3782 = vmatprep.subr.mxu0 0.0
    %3783 = vmatpush1.xpose.msra.mxu0 0.0
    %3784 = vmatprep.subr.mxu0 0.0
    %3785 = vmatpush1.xpose.msra.mxu0 0.0
    %3786 = vmatprep.subr.mxu0 0.0
    %3787 = vmatpush1.xpose.msra.mxu0 0.0
    %3788 = vmatprep.subr.mxu0 0.0
    %3789 = vmatpush1.xpose.msra.mxu0 0.0
    %3790 = vmatprep.subr.mxu0 0.0
    %3791 = vmatpush1.xpose.msra.mxu0 0.0
    %3792 = vmatprep.subr.mxu0 0.0
    %3793 = vmatpush1.xpose.msra.mxu0 0.0
    %3794 = vmatprep.subr.mxu0 0.0
    %3795 = vmatpush1.xpose.msra.mxu0 0.0
    %v3796 = vand.u32 %v1985, 4294901760
    %3797 = vmatprep.mubr.f32.mxu0 %v3796
    %v3798 = vand.u32 %v1977, 4294901760
    %3799 = vmatmul.mubr.f32.gmra.mrb[0].mxu0 %v3798
    %v3800 = vpop.f32.mrb[0].mxu0
    %v3801 = vadd.f32 %v3723, %v3800
    %v3802 = vpop.f32.mrb[0].mxu0
    %3803 = vdwg.mxu0
    %v3804 = vand.u32 %v1985, 4294901760
    %3805 = vmatprep.subr.mxu0 %v3804
    %v3806 = vand.u32 %v1977, 4294901760
    %3807 = vmatpush1.xpose.msra.mxu0 %v3806
    %3808 = vmatprep.subr.mxu0 0.0
    %3809 = vmatpush1.xpose.msra.mxu0 0.0
    %3810 = vmatprep.subr.mxu0 0.0
    %3811 = vmatpush1.xpose.msra.mxu0 0.0
    %3812 = vmatprep.subr.mxu0 0.0
    %3813 = vmatpush1.xpose.msra.mxu0 0.0
    %3814 = vmatprep.subr.mxu0 0.0
    %3815 = vmatpush1.xpose.msra.mxu0 0.0
    %3816 = vmatprep.subr.mxu0 0.0
    %3817 = vmatpush1.xpose.msra.mxu0 0.0
    %3818 = vmatprep.subr.mxu0 0.0
    %3819 = vmatpush1.xpose.msra.mxu0 0.0
    %3820 = vmatprep.subr.mxu0 0.0
    %3821 = vmatpush1.xpose.msra.mxu0 0.0
    %3822 = vmatprep.subr.mxu0 0.0
    %3823 = vmatpush1.xpose.msra.mxu0 0.0
    %3824 = vmatprep.subr.mxu0 0.0
    %3825 = vmatpush1.xpose.msra.mxu0 0.0
    %3826 = vmatprep.subr.mxu0 0.0
    %3827 = vmatpush1.xpose.msra.mxu0 0.0
    %3828 = vmatprep.subr.mxu0 0.0
    %3829 = vmatpush1.xpose.msra.mxu0 0.0
    %3830 = vmatprep.subr.mxu0 0.0
    %3831 = vmatpush1.xpose.msra.mxu0 0.0
    %3832 = vmatprep.subr.mxu0 0.0
    %3833 = vmatpush1.xpose.msra.mxu0 0.0
    %3834 = vmatprep.subr.mxu0 0.0
    %3835 = vmatpush1.xpose.msra.mxu0 0.0
    %3836 = vmatprep.subr.mxu0 0.0
    %3837 = vmatpush1.xpose.msra.mxu0 0.0
    %3838 = vmatprep.subr.mxu0 0.0
    %3839 = vmatpush1.xpose.msra.mxu0 0.0
    %3840 = vmatprep.subr.mxu0 0.0
    %3841 = vmatpush1.xpose.msra.mxu0 0.0
    %3842 = vmatprep.subr.mxu0 0.0
    %3843 = vmatpush1.xpose.msra.mxu0 0.0
    %3844 = vmatprep.subr.mxu0 0.0
    %3845 = vmatpush1.xpose.msra.mxu0 0.0
    %3846 = vmatprep.subr.mxu0 0.0
    %3847 = vmatpush1.xpose.msra.mxu0 0.0
    %3848 = vmatprep.subr.mxu0 0.0
    %3849 = vmatpush1.xpose.msra.mxu0 0.0
    %3850 = vmatprep.subr.mxu0 0.0
    %3851 = vmatpush1.xpose.msra.mxu0 0.0
    %3852 = vmatprep.subr.mxu0 0.0
    %3853 = vmatpush1.xpose.msra.mxu0 0.0
    %3854 = vmatprep.subr.mxu0 0.0
    %3855 = vmatpush1.xpose.msra.mxu0 0.0
    %3856 = vmatprep.subr.mxu0 0.0
    %3857 = vmatpush1.xpose.msra.mxu0 0.0
    %3858 = vmatprep.subr.mxu0 0.0
    %3859 = vmatpush1.xpose.msra.mxu0 0.0
    %3860 = vmatprep.subr.mxu0 0.0
    %3861 = vmatpush1.xpose.msra.mxu0 0.0
    %3862 = vmatprep.subr.mxu0 0.0
    %3863 = vmatpush1.xpose.msra.mxu0 0.0
    %3864 = vmatprep.subr.mxu0 0.0
    %3865 = vmatpush1.xpose.msra.mxu0 0.0
    %3866 = vmatprep.subr.mxu0 0.0
    %3867 = vmatpush1.xpose.msra.mxu0 0.0
    %3868 = vmatprep.subr.mxu0 0.0
    %3869 = vmatpush1.xpose.msra.mxu0 0.0
    %v3870 = vand.u32 %v1985, 4294901760
    %3871 = vmatprep.mubr.f32.mxu0 %v3870
    %v3872 = vand.u32 %v1977, 4294901760
    %3873 = vmatmul.mubr.f32.gmra.mrb[0].mxu0 %v3872
    %v3874 = vpop.f32.mrb[0].mxu0
    %v3875 = vadd.f32 %v3801, %v3874
    %v3876 = vpop.f32.mrb[0].mxu0
    %3877 = vdwg.mxu0
    %v3878 = vsel %vm1929, %v3875, 0.0
    %v3879 = vsel %vm1931, %v3878, 0.0
    %3880 = vadd.xlane.f32.xlu0 %v3879
    %v3881 = vpop.xlane.xlu0 %3880
    %v3882 = vrsqrt.pop %v3881
    %v3883 = vmul.f32 %v3881, %v3882
    %vm3884 = vcmp.eq.f32.partialorder %v3881, inf
    %v3885 = vsel %vm3884, %v3881, %v3883
    %vm3886 = vcmp.eq.f32.partialorder %v3881, 0.0
    %v3887 = vand.u32 %v3881, 2147483648
    %v3888 = vsel %vm3886, %v3887, %v3885
    %v3889 = vrot.slane %v3879, 4
    %v3890 = vadd.f32 %v3879, %v3889
    %v3891 = vrot.slane %v3890, 2
    %v3892 = vadd.f32 %v3890, %v3891
    %v3893 = vrot.slane %v3892, 1
    %v3894 = vadd.f32 %v3892, %v3893
    %v3895 = vrsqrt.pop %v3894
    %v3896 = vmul.f32 %v3894, %v3895
    %vm3897 = vcmp.eq.f32.partialorder %v3894, inf
    %v3898 = vsel %vm3897, %v3894, %v3896
    %vm3899 = vcmp.eq.f32.partialorder %v3894, 0.0
    %v3900 = vand.u32 %v3894, 2147483648
    %v3901 = vsel %vm3899, %v3900, %v3898
    %v3902 = vmul.f32 %v3888, %v3901
    %v3903 = vmax.f32 %v3902, 1e-08
    %v3904 = vand.u32 2147483647, %v3875
    %v3905 = vsel %vm1957, %v3904, 0.0
    %v3906 = vrcp.pop %v3903
    %v3907 = vmul.f32 %v3905, %v3906
    %v3908 = vsel %vm1931, %v3907, 0.0
    %3909 = vadd.xlane.f32.xlu0 %v3908
    %v3910 = vpop.xlane.xlu0 %3909
    %v3911 = vsel %vm1965, %v3910, 0.0
    %v3912 = vrot.slane %v3911, 4
    %v3913 = vadd.f32 %v3911, %v3912
    %v3914 = vrot.slane %v3913, 2
    %v3915 = vadd.f32 %v3913, %v3914
    %v3916 = vrot.slane %v3915, 1
    %v3917 = vadd.f32 %v3915, %v3916
    %v3918 = vadd.f32 %v1973, %v3917
    %vm3919 = vcmask 0
    %3920 = vst.msk [vmem:[#allocation5] sm:$0x1] %vm3919, %v3918
    // Predicated region
    $region10: #{tpu_custom_call.1} parent=1 // pred_check
      _
    $region11: #{tpu_custom_call.1} parent=1 // pred_check_branch
      %3922 = sbr.rel (0) target = $region13
    $region12: #{tpu_custom_call.1} parent=1 // pred_region
      %s3924 = ssub.s32 16, 16
      %3925 = vsyncadd [#allocation4], %s3924
      %s3927 = sshll.u32 [#allocation5], 4
      %s3928 = int_to_ptr.vmem [resolvable:$true] %s3927
      %3930 = dma.vmem_to_hbm [thread:$0]  %s3928, 16, %s1, [#allocation4]
    $region13: #{tpu_custom_call.1} parent=1 // pred_fallthru
      _
    // Predicated region
    $region14: #{tpu_custom_call.1} parent=1 // pred_check
      _
    $region15: #{tpu_custom_call.1} parent=1 // pred_check_branch
      %3932 = sbr.rel (0) target = $region17
    $region16: #{tpu_custom_call.1} parent=1 // pred_region
      %3933 = dma.done [#allocation4], 16
    $region17: #{tpu_custom_call.1} parent=1 // pred_fallthru
      _
    %3934 = vsyncpa [#allocation3], 1
    %3935 = vsyncpa [#allocation4], 1

</llo_original>
